<compile_context>
chip_gen: v5e
topology: v5e:2x2
jax: 0.10.0
libtpu: 0.0.40
codegen_flags: <defaults>
</compile_context>

<pallas_src>
import jax
import jax.numpy as jnp
from jax.experimental import pallas as pl
from jax.experimental.pallas import tpu as pltpu


# ----------------------------------------------------------------------------
# Fused kernel: conv3x3+PReLU -> conv3x3+PReLU for one image (grid over batch).
#   x_ref    : (1, H, W, Cin)     input image, NHWC                 VMEM
#   w1_ref   : (9*Cin,  Cout)     layer-1 im2col weight matrix      VMEM
#   b1_ref   : (1, Cout)          layer-1 bias                      VMEM
#   w2_ref   : (9*Cout, Cout)     layer-2 im2col weight matrix      VMEM
#   b2_ref   : (1, Cout)          layer-2 bias                      VMEM
#   alpha_ref: (2,)               PReLU alphas [a1, a2]             SMEM
#   o_ref    : (1, Cout, H*W)     output, lane-dense last dim       VMEM
#   xpad_ref : (H+2, W+2, Cin)    scratch: zero-padded input        VMEM
#   ypad_ref : (H+2, W+2, Cout)   scratch: zero-padded intermediate VMEM
# ----------------------------------------------------------------------------
def fused_block_kernel(x_ref, w1_ref, b1_ref, w2_ref, b2_ref, alpha_ref, o_ref,
                       xpad_ref, ypad_ref):
    _, H, W, Cin = x_ref.shape
    Cout = o_ref.shape[1]
    HW = H * W

    def conv3x3_prelu(pad_ref, w_ref, b_ref, alpha, cin):
        # im2col: 9 shifted (H, W, cin) windows -> one (H*W, 9*cin) matrix.
        # The reshape is layout-trivial because W is a multiple of 8.
        cols = []
        for kh in range(3):
            for kw in range(3):
                cols.append(pad_ref[kh:kh + H, kw:kw + W, :].reshape(HW, cin))
        col = jnp.concatenate(cols, axis=1)                     # (HW, 9*cin)
        # Single MXU matmul per layer, f32 accumulation.
        y = jnp.dot(col, w_ref[...], preferred_element_type=jnp.float32)
        y = y + b_ref[...]                                      # (1, Cout) broadcast
        return jnp.where(y >= 0.0, y, alpha * y)                # PReLU

    # ------------- layer 1: pad input in-kernel (no HBM pad copy) -------------
    xpad_ref[...] = jnp.zeros_like(xpad_ref)
    xpad_ref[1:H + 1, 1:W + 1, :] = x_ref[0]
    y1 = conv3x3_prelu(xpad_ref, w1_ref, b1_ref, alpha_ref[0], Cin)   # (HW, Cout)

    # ------------- layer 2: intermediate never leaves VMEM --------------------
    ypad_ref[...] = jnp.zeros_like(ypad_ref)
    ypad_ref[1:H + 1, 1:W + 1, :] = y1.reshape(H, W, Cout)
    y2 = conv3x3_prelu(ypad_ref, w2_ref, b2_ref, alpha_ref[1], Cout)  # (HW, Cout)

    # Lane-dense store: (Cout, H*W); last dim (H*W) is a multiple of 128.
    o_ref[0] = y2.T.astype(o_ref.dtype)


# ----------------------------------------------------------------------------
# One-time repack of PyTorch-layout params into the kernel layout.
# (Hoisted out of the per-forward path.)
# ----------------------------------------------------------------------------
def prepare_block_params(params):
    w1, w2 = params["w1"], params["w2"]              # OIHW (Cout, Cin, 3, 3)
    cout, cin = w1.shape[0], w1.shape[1]
    # OIHW -> HWIO -> (9*Cin, Cout); row index = (kh*3 + kw)*Cin + cin,
    # matching the im2col column ordering built in the kernel.
    w1m = jnp.transpose(w1, (2, 3, 1, 0)).reshape(9 * cin, cout)
    w2m = jnp.transpose(w2, (2, 3, 1, 0)).reshape(9 * cout, cout)
    return {
        "w1m": w1m,
        "w2m": w2m,
        "b1": params["b1"].reshape(1, cout),
        "b2": params["b2"].reshape(1, cout),
        "alphas": jnp.concatenate([params["a1"], params["a2"]]).astype(jnp.float32),
    }


# ----------------------------------------------------------------------------
# `Block` forward: NCHW in -> NCHW out (matches the PyTorch module).
# ----------------------------------------------------------------------------
@jax.jit
def block_forward(x_nchw, prep):
    N, Cin, H, W = x_nchw.shape
    Cout = prep["b1"].shape[1]
    HW = H * W

    # Pure layout plumbing (no pad, no weight transforms here).
    x_nhwc = jnp.transpose(x_nchw, (0, 2, 3, 1))

    flops = 2 * N * HW * 9 * (Cin * Cout + Cout * Cout)
    bytes_accessed = 4 * (x_nchw.size + prep["w1m"].size + prep["w2m"].size
                          + 2 * Cout + N * Cout * HW)

    out = pl.pallas_call(
        fused_block_kernel,
        out_shape=jax.ShapeDtypeStruct((N, Cout, HW), jnp.float32),
        grid=(N,),
        in_specs=[
            pl.BlockSpec((1, H, W, Cin), lambda n: (n, 0, 0, 0)),
            pl.BlockSpec((9 * Cin, Cout), lambda n: (0, 0)),
            pl.BlockSpec((1, Cout), lambda n: (0, 0)),
            pl.BlockSpec((9 * Cout, Cout), lambda n: (0, 0)),
            pl.BlockSpec((1, Cout), lambda n: (0, 0)),
            pl.BlockSpec(memory_space=pltpu.MemorySpace.SMEM),   # PReLU alphas
        ],
        out_specs=pl.BlockSpec((1, Cout, HW), lambda n: (n, 0, 0)),
        scratch_shapes=[
            pltpu.VMEM((H + 2, W + 2, Cin), jnp.float32),
            pltpu.VMEM((H + 2, W + 2, Cout), jnp.float32),
        ],
        compiler_params=pltpu.CompilerParams(
            dimension_semantics=("parallel",)),
        cost_estimate=pl.CostEstimate(flops=int(flops), transcendentals=0,
                                      bytes_accessed=int(bytes_accessed)),
    )(x_nhwc, prep["w1m"], prep["b1"], prep["w2m"], prep["b2"], prep["alphas"])

    # (N, Cout, H*W) is exactly NCHW flattened -> free reshape, no transpose.
    return out.reshape(N, Cout, H, W)


# ----------------------------------------------------------------------------
# Plain-JAX reference (correctness check only).
# ----------------------------------------------------------------------------
def block_reference(x_nchw, params):
    def conv(x, w, b):
        y = jax.lax.conv_general_dilated(
            x, w, window_strides=(1, 1), padding="SAME",
            dimension_numbers=("NCHW", "OIHW", "NCHW"))
        return y + b[None, :, None, None]

    def prelu(x, a):
        return jnp.where(x >= 0, x, a[0] * x)

    out = prelu(conv(x_nchw, params["w1"], params["b1"]), params["a1"])
    out = prelu(conv(out, params["w2"], params["b2"]), params["a2"])
    return out


def init_params(key, ch_in, ch_out):
    k1, k2, k3, k4 = jax.random.split(key, 4)
    return {
        "w1": 0.1 * jax.random.normal(k1, (ch_out, ch_in, 3, 3), jnp.float32),
        "b1": 0.1 * jax.random.normal(k2, (ch_out,), jnp.float32),
        "a1": jnp.full((1,), 0.25, jnp.float32),   # PyTorch PReLU default init
        "w2": 0.1 * jax.random.normal(k3, (ch_out, ch_out, 3, 3), jnp.float32),
        "b2": 0.1 * jax.random.normal(k4, (ch_out,), jnp.float32),
        "a2": jnp.full((1,), 0.25, jnp.float32),
    }


if __name__ == "__main__":
    key = jax.random.PRNGKey(0)
    kx, kp = jax.random.split(key)

    N, ch_in, ch_out, H, W = 2, 4, 8, 16, 16
    x = jax.random.normal(kx, (N, ch_in, H, W), jnp.float32)      # NCHW, like PyTorch
    params = init_params(kp, ch_in, ch_out)
    prep = prepare_block_params(params)                           # one-time repack

    out = block_forward(x, prep)
    out = jax.block_until_ready(out)

    ref = block_reference(x, params)
    assert out.shape == (N, ch_out, H, W), out.shape
    err = float(jnp.max(jnp.abs(out - ref)))
    assert jnp.allclose(out, ref, rtol=1e-4, atol=1e-4), err

    print("KERNEL_OK")
</pallas_src>

<mosaic_0001>
module attributes {stable_mosaic.version = 11 : i64} {
  func.func @fused_block_kernel(%arg0: i32, %arg1: memref<1x16x16x4xf32, #tpu.memory_space<vmem>>, %arg2: memref<36x8xf32, #tpu.memory_space<vmem>>, %arg3: memref<1x8xf32, #tpu.memory_space<vmem>>, %arg4: memref<72x8xf32, #tpu.memory_space<vmem>>, %arg5: memref<1x8xf32, #tpu.memory_space<vmem>>, %arg6: memref<2xf32, #tpu.memory_space<smem>>, %arg7: memref<1x8x256xf32, #tpu.memory_space<vmem>>, %arg8: memref<18x18x4xf32, #tpu.memory_space<vmem>>, %arg9: memref<18x18x8xf32, #tpu.memory_space<vmem>>) attributes {dimension_semantics = [#tpu.dimension_semantics<parallel>], iteration_bounds = array<i64: 2>, scalar_prefetch = 0 : i64, scratch_operands = 2 : i64, tpu.core_type = #tpu.core_type<tc>, window_params = [{transform_indices = @transform_0, window_bounds = array<i64: 1, 16, 16, 4>}, {pipeline_mode = #tpu.pipeline_mode<synchronous>, transform_indices = @transform_1, window_bounds = array<i64: 36, 8>}, {pipeline_mode = #tpu.pipeline_mode<synchronous>, transform_indices = @transform_2, window_bounds = array<i64: 1, 8>}, {pipeline_mode = #tpu.pipeline_mode<synchronous>, transform_indices = @transform_3, window_bounds = array<i64: 72, 8>}, {pipeline_mode = #tpu.pipeline_mode<synchronous>, transform_indices = @transform_4, window_bounds = array<i64: 1, 8>}, {transform_indices = @transform_5, window_bounds = array<i64: 2>}, {transform_indices = @transform_6, window_bounds = array<i64: 1, 8, 256>}]} {
    %cst = arith.constant 0.000000e+00 : f32
    %0 = vector.broadcast %cst : f32 to vector<18x18x4xf32>
    %c0 = arith.constant 0 : index
    %c0_0 = arith.constant 0 : index
    %c0_1 = arith.constant 0 : index
    %1 = vector.load %arg8[%c0, %c0_0, %c0_1] : memref<18x18x4xf32, #tpu.memory_space<vmem>>, vector<18x18x4xf32>
    tpu.vector_store %arg8[%c0, %c0_0, %c0_1], %0 {strides = array<i32>} : memref<18x18x4xf32, #tpu.memory_space<vmem>>, vector<18x18x4xf32>,
    %c0_2 = arith.constant 0 : index
    %c0_3 = arith.constant 0 : index
    %c0_4 = arith.constant 0 : index
    %c0_5 = arith.constant 0 : index
    %2 = vector.load %arg1[%c0_2, %c0_3, %c0_4, %c0_5] : memref<1x16x16x4xf32, #tpu.memory_space<vmem>>, vector<1x16x16x4xf32>
    %3 = vector.shape_cast %2 : vector<1x16x16x4xf32> to vector<16x16x4xf32>
    %c1 = arith.constant 1 : index
    %c1_6 = arith.constant 1 : index
    %c0_7 = arith.constant 0 : index
    %4 = vector.load %arg8[%c1, %c1_6, %c0_7] : memref<18x18x4xf32, #tpu.memory_space<vmem>>, vector<16x16x4xf32>
    tpu.vector_store %arg8[%c1, %c1_6, %c0_7], %3 {strides = array<i32>} : memref<18x18x4xf32, #tpu.memory_space<vmem>>, vector<16x16x4xf32>,
    %c0_8 = arith.constant 0 : index
    %5 = memref.load %arg6[%c0_8] : memref<2xf32, #tpu.memory_space<smem>>
    %c0_9 = arith.constant 0 : index
    %c0_10 = arith.constant 0 : index
    %c0_11 = arith.constant 0 : index
    %6 = vector.load %arg8[%c0_9, %c0_10, %c0_11] : memref<18x18x4xf32, #tpu.memory_space<vmem>>, vector<16x16x4xf32>
    %7 = vector.shape_cast %6 : vector<16x16x4xf32> to vector<256x4xf32>
    %c0_12 = arith.constant 0 : index
    %c1_13 = arith.constant 1 : index
    %c0_14 = arith.constant 0 : index
    %8 = vector.load %arg8[%c0_12, %c1_13, %c0_14] : memref<18x18x4xf32, #tpu.memory_space<vmem>>, vector<16x16x4xf32>
    %9 = vector.shape_cast %8 : vector<16x16x4xf32> to vector<256x4xf32>
    %c0_15 = arith.constant 0 : index
    %c2 = arith.constant 2 : index
    %c0_16 = arith.constant 0 : index
    %10 = vector.load %arg8[%c0_15, %c2, %c0_16] : memref<18x18x4xf32, #tpu.memory_space<vmem>>, vector<16x16x4xf32>
    %11 = vector.shape_cast %10 : vector<16x16x4xf32> to vector<256x4xf32>
    %c1_17 = arith.constant 1 : index
    %c0_18 = arith.constant 0 : index
    %c0_19 = arith.constant 0 : index
    %12 = vector.load %arg8[%c1_17, %c0_18, %c0_19] : memref<18x18x4xf32, #tpu.memory_space<vmem>>, vector<16x16x4xf32>
    %13 = vector.shape_cast %12 : vector<16x16x4xf32> to vector<256x4xf32>
    %c1_20 = arith.constant 1 : index
    %c1_21 = arith.constant 1 : index
    %c0_22 = arith.constant 0 : index
    %14 = vector.load %arg8[%c1_20, %c1_21, %c0_22] : memref<18x18x4xf32, #tpu.memory_space<vmem>>, vector<16x16x4xf32>
    %15 = vector.shape_cast %14 : vector<16x16x4xf32> to vector<256x4xf32>
    %c1_23 = arith.constant 1 : index
    %c2_24 = arith.constant 2 : index
    %c0_25 = arith.constant 0 : index
    %16 = vector.load %arg8[%c1_23, %c2_24, %c0_25] : memref<18x18x4xf32, #tpu.memory_space<vmem>>, vector<16x16x4xf32>
    %17 = vector.shape_cast %16 : vector<16x16x4xf32> to vector<256x4xf32>
    %c2_26 = arith.constant 2 : index
    %c0_27 = arith.constant 0 : index
    %c0_28 = arith.constant 0 : index
    %18 = vector.load %arg8[%c2_26, %c0_27, %c0_28] : memref<18x18x4xf32, #tpu.memory_space<vmem>>, vector<16x16x4xf32>
    %19 = vector.shape_cast %18 : vector<16x16x4xf32> to vector<256x4xf32>
    %c2_29 = arith.constant 2 : index
    %c1_30 = arith.constant 1 : index
    %c0_31 = arith.constant 0 : index
    %20 = vector.load %arg8[%c2_29, %c1_30, %c0_31] : memref<18x18x4xf32, #tpu.memory_space<vmem>>, vector<16x16x4xf32>
    %21 = vector.shape_cast %20 : vector<16x16x4xf32> to vector<256x4xf32>
    %c2_32 = arith.constant 2 : index
    %c2_33 = arith.constant 2 : index
    %c0_34 = arith.constant 0 : index
    %22 = vector.load %arg8[%c2_32, %c2_33, %c0_34] : memref<18x18x4xf32, #tpu.memory_space<vmem>>, vector<16x16x4xf32>
    %23 = vector.shape_cast %22 : vector<16x16x4xf32> to vector<256x4xf32>
    %24 = tpu.concatenate %7, %9, %11, %13, %15, %17, %19, %21, %23 in 1 : vector<256x4xf32>, vector<256x4xf32>, vector<256x4xf32>, vector<256x4xf32>, vector<256x4xf32>, vector<256x4xf32>, vector<256x4xf32>, vector<256x4xf32>, vector<256x4xf32> -> vector<256x36xf32>
    %c0_35 = arith.constant 0 : index
    %c0_36 = arith.constant 0 : index
    %25 = vector.load %arg2[%c0_35, %c0_36] : memref<36x8xf32, #tpu.memory_space<vmem>>, vector<36x8xf32>
    %cst_37 = arith.constant dense<0.000000e+00> : vector<256x8xf32>
    %26 = tpu.matmul %24, %25, %cst_37 {dimension_numbers = #tpu.dot_dimension_numbers<[1], [0], [0], [1], [0, 0, 1, 1], [], []>} : vector<256x36xf32>, vector<36x8xf32>, vector<256x8xf32> -> vector<256x8xf32>
    %c0_38 = arith.constant 0 : index
    %c0_39 = arith.constant 0 : index
    %27 = vector.load %arg3[%c0_38, %c0_39] : memref<1x8xf32, #tpu.memory_space<vmem>>, vector<1x8xf32>
    %28 = vector.broadcast %27 : vector<1x8xf32> to vector<256x8xf32>
    %29 = arith.addf %26, %28 : vector<256x8xf32>
    %cst_40 = arith.constant 0.000000e+00 : f32
    %30 = vector.broadcast %cst_40 : f32 to vector<256x8xf32>
    %31 = arith.cmpf oge, %29, %30 : vector<256x8xf32>
    %32 = vector.broadcast %5 : f32 to vector<256x8xf32>
    %33 = arith.mulf %32, %29 : vector<256x8xf32>
    %34 = arith.select %31, %29, %33 : vector<256x8xi1>, vector<256x8xf32>
    %cst_41 = arith.constant 0.000000e+00 : f32
    %35 = vector.broadcast %cst_41 : f32 to vector<18x18x8xf32>
    %c0_42 = arith.constant 0 : index
    %c0_43 = arith.constant 0 : index
    %c0_44 = arith.constant 0 : index
    %36 = vector.load %arg9[%c0_42, %c0_43, %c0_44] : memref<18x18x8xf32, #tpu.memory_space<vmem>>, vector<18x18x8xf32>
    tpu.vector_store %arg9[%c0_42, %c0_43, %c0_44], %35 {strides = array<i32>} : memref<18x18x8xf32, #tpu.memory_space<vmem>>, vector<18x18x8xf32>,
    %37 = vector.shape_cast %34 : vector<256x8xf32> to vector<16x16x8xf32>
    %c1_45 = arith.constant 1 : index
    %c1_46 = arith.constant 1 : index
    %c0_47 = arith.constant 0 : index
    %38 = vector.load %arg9[%c1_45, %c1_46, %c0_47] : memref<18x18x8xf32, #tpu.memory_space<vmem>>, vector<16x16x8xf32>
    tpu.vector_store %arg9[%c1_45, %c1_46, %c0_47], %37 {strides = array<i32>} : memref<18x18x8xf32, #tpu.memory_space<vmem>>, vector<16x16x8xf32>,
    %c1_48 = arith.constant 1 : index
    %39 = memref.load %arg6[%c1_48] : memref<2xf32, #tpu.memory_space<smem>>
    %c0_49 = arith.constant 0 : index
    %c0_50 = arith.constant 0 : index
    %c0_51 = arith.constant 0 : index
    %40 = vector.load %arg9[%c0_49, %c0_50, %c0_51] : memref<18x18x8xf32, #tpu.memory_space<vmem>>, vector<16x16x8xf32>
    %41 = vector.shape_cast %40 : vector<16x16x8xf32> to vector<256x8xf32>
    %c0_52 = arith.constant 0 : index
    %c1_53 = arith.constant 1 : index
    %c0_54 = arith.constant 0 : index
    %42 = vector.load %arg9[%c0_52, %c1_53, %c0_54] : memref<18x18x8xf32, #tpu.memory_space<vmem>>, vector<16x16x8xf32>
    %43 = vector.shape_cast %42 : vector<16x16x8xf32> to vector<256x8xf32>
    %c0_55 = arith.constant 0 : index
    %c2_56 = arith.constant 2 : index
    %c0_57 = arith.constant 0 : index
    %44 = vector.load %arg9[%c0_55, %c2_56, %c0_57] : memref<18x18x8xf32, #tpu.memory_space<vmem>>, vector<16x16x8xf32>
    %45 = vector.shape_cast %44 : vector<16x16x8xf32> to vector<256x8xf32>
    %c1_58 = arith.constant 1 : index
    %c0_59 = arith.constant 0 : index
    %c0_60 = arith.constant 0 : index
    %46 = vector.load %arg9[%c1_58, %c0_59, %c0_60] : memref<18x18x8xf32, #tpu.memory_space<vmem>>, vector<16x16x8xf32>
    %47 = vector.shape_cast %46 : vector<16x16x8xf32> to vector<256x8xf32>
    %c1_61 = arith.constant 1 : index
    %c1_62 = arith.constant 1 : index
    %c0_63 = arith.constant 0 : index
    %48 = vector.load %arg9[%c1_61, %c1_62, %c0_63] : memref<18x18x8xf32, #tpu.memory_space<vmem>>, vector<16x16x8xf32>
    %49 = vector.shape_cast %48 : vector<16x16x8xf32> to vector<256x8xf32>
    %c1_64 = arith.constant 1 : index
    %c2_65 = arith.constant 2 : index
    %c0_66 = arith.constant 0 : index
    %50 = vector.load %arg9[%c1_64, %c2_65, %c0_66] : memref<18x18x8xf32, #tpu.memory_space<vmem>>, vector<16x16x8xf32>
    %51 = vector.shape_cast %50 : vector<16x16x8xf32> to vector<256x8xf32>
    %c2_67 = arith.constant 2 : index
    %c0_68 = arith.constant 0 : index
    %c0_69 = arith.constant 0 : index
    %52 = vector.load %arg9[%c2_67, %c0_68, %c0_69] : memref<18x18x8xf32, #tpu.memory_space<vmem>>, vector<16x16x8xf32>
    %53 = vector.shape_cast %52 : vector<16x16x8xf32> to vector<256x8xf32>
    %c2_70 = arith.constant 2 : index
    %c1_71 = arith.constant 1 : index
    %c0_72 = arith.constant 0 : index
    %54 = vector.load %arg9[%c2_70, %c1_71, %c0_72] : memref<18x18x8xf32, #tpu.memory_space<vmem>>, vector<16x16x8xf32>
    %55 = vector.shape_cast %54 : vector<16x16x8xf32> to vector<256x8xf32>
    %c2_73 = arith.constant 2 : index
    %c2_74 = arith.constant 2 : index
    %c0_75 = arith.constant 0 : index
    %56 = vector.load %arg9[%c2_73, %c2_74, %c0_75] : memref<18x18x8xf32, #tpu.memory_space<vmem>>, vector<16x16x8xf32>
    %57 = vector.shape_cast %56 : vector<16x16x8xf32> to vector<256x8xf32>
    %58 = tpu.concatenate %41, %43, %45, %47, %49, %51, %53, %55, %57 in 1 : vector<256x8xf32>, vector<256x8xf32>, vector<256x8xf32>, vector<256x8xf32>, vector<256x8xf32>, vector<256x8xf32>, vector<256x8xf32>, vector<256x8xf32>, vector<256x8xf32> -> vector<256x72xf32>
    %c0_76 = arith.constant 0 : index
    %c0_77 = arith.constant 0 : index
    %59 = vector.load %arg4[%c0_76, %c0_77] : memref<72x8xf32, #tpu.memory_space<vmem>>, vector<72x8xf32>
    %cst_78 = arith.constant dense<0.000000e+00> : vector<256x8xf32>
    %60 = tpu.matmul %58, %59, %cst_78 {dimension_numbers = #tpu.dot_dimension_numbers<[1], [0], [0], [1], [0, 0, 1, 1], [], []>} : vector<256x72xf32>, vector<72x8xf32>, vector<256x8xf32> -> vector<256x8xf32>
    %c0_79 = arith.constant 0 : index
    %c0_80 = arith.constant 0 : index
    %61 = vector.load %arg5[%c0_79, %c0_80] : memref<1x8xf32, #tpu.memory_space<vmem>>, vector<1x8xf32>
    %62 = vector.broadcast %61 : vector<1x8xf32> to vector<256x8xf32>
    %63 = arith.addf %60, %62 : vector<256x8xf32>
    %cst_81 = arith.constant 0.000000e+00 : f32
    %64 = vector.broadcast %cst_81 : f32 to vector<256x8xf32>
    %65 = arith.cmpf oge, %63, %64 : vector<256x8xf32>
    %66 = vector.broadcast %39 : f32 to vector<256x8xf32>
    %67 = arith.mulf %66, %63 : vector<256x8xf32>
    %68 = arith.select %65, %63, %67 : vector<256x8xi1>, vector<256x8xf32>
    %69 = tpu.transpose %68, [1, 0] : vector<256x8xf32> -> vector<8x256xf32>
    %c0_82 = arith.constant 0 : index
    %c0_83 = arith.constant 0 : index
    %c0_84 = arith.constant 0 : index
    %70 = vector.load %arg7[%c0_82, %c0_83, %c0_84] : memref<1x8x256xf32, #tpu.memory_space<vmem>>, vector<1x8x256xf32>
    %71 = vector.shape_cast %70 : vector<1x8x256xf32> to vector<8x256xf32>
    %72 = vector.shape_cast %69 : vector<8x256xf32> to vector<1x8x256xf32>
    tpu.vector_store %arg7[%c0_82, %c0_83, %c0_84], %72 {strides = array<i32>} : memref<1x8x256xf32, #tpu.memory_space<vmem>>, vector<1x8x256xf32>,
    return
  }
  func.func @transform_0(%arg0: i32) -> (i32, i32, i32, i32) {
    %c0_i32 = arith.constant 0 : i32
    %c0_i32_0 = arith.constant 0 : i32
    %c0_i32_1 = arith.constant 0 : i32
    %c0_i32_2 = arith.constant 0 : i32
    return %arg0, %c0_i32, %c0_i32_0, %c0_i32_1 : i32, i32, i32, i32
  }
  func.func @transform_1(%arg0: i32) -> (i32, i32) {
    %c0_i32 = arith.constant 0 : i32
    %c0_i32_0 = arith.constant 0 : i32
    %c0_i32_1 = arith.constant 0 : i32
    return %c0_i32, %c0_i32_0 : i32, i32
  }
  func.func @transform_2(%arg0: i32) -> (i32, i32) {
    %c0_i32 = arith.constant 0 : i32
    %c0_i32_0 = arith.constant 0 : i32
    %c0_i32_1 = arith.constant 0 : i32
    return %c0_i32, %c0_i32_0 : i32, i32
  }
  func.func @transform_3(%arg0: i32) -> (i32, i32) {
    %c0_i32 = arith.constant 0 : i32
    %c0_i32_0 = arith.constant 0 : i32
    %c0_i32_1 = arith.constant 0 : i32
    return %c0_i32, %c0_i32_0 : i32, i32
  }
  func.func @transform_4(%arg0: i32) -> (i32, i32) {
    %c0_i32 = arith.constant 0 : i32
    %c0_i32_0 = arith.constant 0 : i32
    %c0_i32_1 = arith.constant 0 : i32
    return %c0_i32, %c0_i32_0 : i32, i32
  }
  func.func @transform_5(%arg0: i32) -> i32 {
    %c0_i32 = arith.constant 0 : i32
    %c0_i32_0 = arith.constant 0 : i32
    return %c0_i32 : i32
  }
  func.func @transform_6(%arg0: i32) -> (i32, i32, i32) {
    %c0_i32 = arith.constant 0 : i32
    %c0_i32_0 = arith.constant 0 : i32
    %c0_i32_1 = arith.constant 0 : i32
    return %arg0, %c0_i32, %c0_i32_0 : i32, i32, i32
  }
}

</mosaic_0001>

<llo_original>
// kernel: block_forward.1
$region0: #{block_forward.1}
  #allocation0 [shape = 'u32[]', space=smem, size = 0x4, offset = 0x4, fixed_abs, tag = 'smem constant byte address 0x4 - core index']
  #allocation1 [shape = 'u32[72,128]{1,0:T(1,128)}', space=vmem, size = 0x9000, scoped, tag = 'internal scratch']
  #allocation2 [shape = 'f32[18,18,4]{2,1,0:T(8,128)}', space=vmem, size = 0x36000, scoped, tag = 'scratch operand']
  #allocation3 [shape = 'f32[18,18,8]{2,1,0:T(8,128)}', space=vmem, size = 0x36000, scoped, tag = 'scratch operand']
  %s0 = inlined_call_operand.vmem [shape: f32[2,16,16,4], index: 0, kind: input, shape index: {}]
  %s1 = inlined_call_operand.vmem [shape: f32[36,8], index: 1, kind: input, shape index: {}]
  %s2 = inlined_call_operand.vmem [shape: f32[1,8], index: 2, kind: input, shape index: {}]
  %s3 = inlined_call_operand.vmem [shape: f32[72,8], index: 3, kind: input, shape index: {}]
  %s4 = inlined_call_operand.vmem [shape: f32[1,8], index: 4, kind: input, shape index: {}]
  %s5 = inlined_call_operand.vmem [shape: f32[2], index: 5, kind: input, shape index: {}]
  %s6 = inlined_call_operand.vmem [shape: f32[2,8,256], index: 6, kind: output, shape index: {}]
  %s7 = sld [smem:[#allocation0]]
  $region61: #{block_forward.1} parent=0
    _
  %s9 = ssub.s32 1, %s7
  %s10 = scalar_select 0, %s9, %s7
  $region1: #{block_forward.1} parent=0
    #allocation4 [shape = 'u8[512]{0}', space=smem, size = 0x200, scoped, tag = 'input window, operand 5, single buffered']
    #allocation5 [shape = 's32[2]{0}', space=sflag, size = 0x8, scoped, tag = 'scoped memory for block_forward.1']
    %11 = vsyncpa [#allocation5], 0
    loop: start=0, step=1, limit=4
    $region2: #{block_forward.1} parent=1 // loop_pre_header
      _
    $region3: #{block_forward.1} parent=1 // loop_header
      %s13 = sphi 0, %s17
      %p14 = scmp.ge.s32.totalorder %s13, 4
      %s23 = sphi 0, %s25
      %s26 = sphi 0, %s23
      %s27 = sphi 0, %s26
      %s43 = sphi 0, %s27
      %s47 = sphi 0, %s47
      %s49 = sphi 0, %s47
      %s50 = sphi 0, %s49
      %s64 = sphi 0, %s50
      %s68 = sphi 0, %s68
      %s70 = sphi 0, %s68
      %s71 = sphi 0, %s70
      %s85 = sphi 0, %s71
      %s89 = sphi 0, %s89
      %s91 = sphi 0, %s89
      %s92 = sphi 0, %s91
      %s106 = sphi 0, %s92
      %s110 = sphi 0, %s110
      %s112 = sphi 0, %s110
      %s113 = sphi 0, %s112
      %s127 = sphi 0, %s113
      %s131 = sphi 0, %s131
      %s133 = sphi 0, %s131
      %s134 = sphi 0, %s133
      %s148 = sphi 0, %s134
      %s154 = sphi 0, %s156
      %s157 = sphi 0, %s154
      %s158 = sphi 0, %s157
      %s174 = sphi 0, %s158
    $region4: #{block_forward.1} parent=1 // loop_header_branch
      %16 = sbr.rel (%p14) target = $region8
    $region5: #{block_forward.1} parent=1 // loop_body
      %s18 = ssub.s32 %s13, 1
      %s19 = ssub.s32 %s13, 2
      %s20 = sadd.s32 %s13, 1
      %s21 = ssub.s32 %s13, %s20
      %p22 = scmp.eq.s32.totalorder %s21, 0
      %s24 = sadd.s32 %s23, 1
      %s25 = scalar_select %p22, %s23, %s24
      %p28 = pneg %p22
      %p29 = scmp.eq.s32.totalorder %s13, 1
      %p30 = por %p28, %p29
      %p31 = scmp.ne.s32.totalorder %s23, %s26
      %p32 = scmp.eq.s32.totalorder %s13, 0
      %p33 = por %p31, %p32
      %p34 = scmp.ne.s32.totalorder %s23, %s26
      %p35 = scmp.eq.s32.totalorder %s18, 1
      %p36 = por %p34, %p35
      %p37 = scmp.ne.s32.totalorder %s26, %s27
      %p38 = scmp.eq.s32.totalorder %s18, 0
      %p39 = por %p37, %p38
      %p40 = scmp.ne.s32.totalorder %s26, %s27
      %p41 = scmp.eq.s32.totalorder %s19, 1
      %p42 = por %p40, %p41
      %p44 = scmp.ne.s32.totalorder %s27, %s43
      %p45 = scmp.eq.s32.totalorder %s19, 0
      %p46 = por %p44, %p45
      %s48 = sadd.s32 %s47, 1
      %p51 = scmp.eq.s32.totalorder %s13, 1
      %p52 = scmp.ne.s32.totalorder %s47, %s49
      %p53 = scmp.eq.s32.totalorder %s13, 0
      %p54 = por %p52, %p53
      %p55 = scmp.ne.s32.totalorder %s47, %s49
      %p56 = scmp.eq.s32.totalorder %s18, 1
      %p57 = por %p55, %p56
      %p58 = scmp.ne.s32.totalorder %s49, %s50
      %p59 = scmp.eq.s32.totalorder %s18, 0
      %p60 = por %p58, %p59
      %p61 = scmp.ne.s32.totalorder %s49, %s50
      %p62 = scmp.eq.s32.totalorder %s19, 1
      %p63 = por %p61, %p62
      %p65 = scmp.ne.s32.totalorder %s50, %s64
      %p66 = scmp.eq.s32.totalorder %s19, 0
      %p67 = por %p65, %p66
      %s69 = sadd.s32 %s68, 1
      %p72 = scmp.eq.s32.totalorder %s13, 1
      %p73 = scmp.ne.s32.totalorder %s68, %s70
      %p74 = scmp.eq.s32.totalorder %s13, 0
      %p75 = por %p73, %p74
      %p76 = scmp.ne.s32.totalorder %s68, %s70
      %p77 = scmp.eq.s32.totalorder %s18, 1
      %p78 = por %p76, %p77
      %p79 = scmp.ne.s32.totalorder %s70, %s71
      %p80 = scmp.eq.s32.totalorder %s18, 0
      %p81 = por %p79, %p80
      %p82 = scmp.ne.s32.totalorder %s70, %s71
      %p83 = scmp.eq.s32.totalorder %s19, 1
      %p84 = por %p82, %p83
      %p86 = scmp.ne.s32.totalorder %s71, %s85
      %p87 = scmp.eq.s32.totalorder %s19, 0
      %p88 = por %p86, %p87
      %s90 = sadd.s32 %s89, 1
      %p93 = scmp.eq.s32.totalorder %s13, 1
      %p94 = scmp.ne.s32.totalorder %s89, %s91
      %p95 = scmp.eq.s32.totalorder %s13, 0
      %p96 = por %p94, %p95
      %p97 = scmp.ne.s32.totalorder %s89, %s91
      %p98 = scmp.eq.s32.totalorder %s18, 1
      %p99 = por %p97, %p98
      %p100 = scmp.ne.s32.totalorder %s91, %s92
      %p101 = scmp.eq.s32.totalorder %s18, 0
      %p102 = por %p100, %p101
      %p103 = scmp.ne.s32.totalorder %s91, %s92
      %p104 = scmp.eq.s32.totalorder %s19, 1
      %p105 = por %p103, %p104
      %p107 = scmp.ne.s32.totalorder %s92, %s106
      %p108 = scmp.eq.s32.totalorder %s19, 0
      %p109 = por %p107, %p108
      %s111 = sadd.s32 %s110, 1
      %p114 = scmp.eq.s32.totalorder %s13, 1
      %p115 = scmp.ne.s32.totalorder %s110, %s112
      %p116 = scmp.eq.s32.totalorder %s13, 0
      %p117 = por %p115, %p116
      %p118 = scmp.ne.s32.totalorder %s110, %s112
      %p119 = scmp.eq.s32.totalorder %s18, 1
      %p120 = por %p118, %p119
      %p121 = scmp.ne.s32.totalorder %s112, %s113
      %p122 = scmp.eq.s32.totalorder %s18, 0
      %p123 = por %p121, %p122
      %p124 = scmp.ne.s32.totalorder %s112, %s113
      %p125 = scmp.eq.s32.totalorder %s19, 1
      %p126 = por %p124, %p125
      %p128 = scmp.ne.s32.totalorder %s113, %s127
      %p129 = scmp.eq.s32.totalorder %s19, 0
      %p130 = por %p128, %p129
      %s132 = sadd.s32 %s131, 1
      %p135 = scmp.eq.s32.totalorder %s13, 1
      %p136 = scmp.ne.s32.totalorder %s131, %s133
      %p137 = scmp.eq.s32.totalorder %s13, 0
      %p138 = por %p136, %p137
      %p139 = scmp.ne.s32.totalorder %s131, %s133
      %p140 = scmp.eq.s32.totalorder %s18, 1
      %p141 = por %p139, %p140
      %p142 = scmp.ne.s32.totalorder %s133, %s134
      %p143 = scmp.eq.s32.totalorder %s18, 0
      %p144 = por %p142, %p143
      %p145 = scmp.ne.s32.totalorder %s133, %s134
      %p146 = scmp.eq.s32.totalorder %s19, 1
      %p147 = por %p145, %p146
      %p149 = scmp.ne.s32.totalorder %s134, %s148
      %p150 = scmp.eq.s32.totalorder %s19, 0
      %p151 = por %p149, %p150
      %s152 = ssub.s32 %s13, %s20
      %p153 = scmp.eq.s32.totalorder %s152, 0
      %s155 = sadd.s32 %s154, 1
      %s156 = scalar_select %p153, %s154, %s155
      %p159 = pneg %p153
      %p160 = scmp.eq.s32.totalorder %s13, 1
      %p161 = por %p159, %p160
      %p162 = scmp.ne.s32.totalorder %s154, %s157
      %p163 = scmp.eq.s32.totalorder %s13, 0
      %p164 = por %p162, %p163
      %p165 = scmp.ne.s32.totalorder %s154, %s157
      %p166 = scmp.eq.s32.totalorder %s18, 1
      %p167 = por %p165, %p166
      %p168 = scmp.ne.s32.totalorder %s157, %s158
      %p169 = scmp.eq.s32.totalorder %s18, 0
      %p170 = por %p168, %p169
      %p171 = scmp.ne.s32.totalorder %s157, %s158
      %p172 = scmp.eq.s32.totalorder %s19, 1
      %p173 = por %p171, %p172
      %p175 = scmp.ne.s32.totalorder %s158, %s174
      %p176 = scmp.eq.s32.totalorder %s19, 0
      %p177 = por %p175, %p176
      %p178 = scmp.le.s32.totalorder 1, %s13
      %p179 = scmp.lt.s32.totalorder %s13, 3
      %p180 = pnand %p178, %p179
      %p181 = pneg %p180
      // Predicated region
      $region9: #{block_forward.1} parent=5 // pred_check
        _
      $region10: #{block_forward.1} parent=5 // pred_check_branch
        %183 = sbr.rel (%p180) target = $region12
      $region11: #{block_forward.1} parent=5 // pred_region
        %s184 = ssub.s32 %s13, 1
        // Predicated region
        $region13: #{block_forward.1} parent=11 // pred_check
          %p185 = pneg %p60
        $region14: #{block_forward.1} parent=11 // pred_check_branch
          %187 = sbr.rel (%p185) target = $region16
        $region15: #{block_forward.1} parent=11 // pred_region
          _
        $region16: #{block_forward.1} parent=11 // pred_fallthru
          _
        // Predicated region
        $region17: #{block_forward.1} parent=11 // pred_check
          %p188 = pneg %p81
        $region18: #{block_forward.1} parent=11 // pred_check_branch
          %190 = sbr.rel (%p188) target = $region20
        $region19: #{block_forward.1} parent=11 // pred_region
          _
        $region20: #{block_forward.1} parent=11 // pred_fallthru
          _
        // Predicated region
        $region21: #{block_forward.1} parent=11 // pred_check
          %p191 = pneg %p102
        $region22: #{block_forward.1} parent=11 // pred_check_branch
          %193 = sbr.rel (%p191) target = $region24
        $region23: #{block_forward.1} parent=11 // pred_region
          _
        $region24: #{block_forward.1} parent=11 // pred_fallthru
          _
        // Predicated region
        $region25: #{block_forward.1} parent=11 // pred_check
          %p194 = pneg %p123
        $region26: #{block_forward.1} parent=11 // pred_check_branch
          %196 = sbr.rel (%p194) target = $region28
        $region27: #{block_forward.1} parent=11 // pred_region
          _
        $region28: #{block_forward.1} parent=11 // pred_fallthru
          _
        // Predicated region
        $region29: #{block_forward.1} parent=11 // pred_check
          %p197 = pneg %p144
        $region30: #{block_forward.1} parent=11 // pred_check_branch
          %199 = sbr.rel (%p197) target = $region32
        $region31: #{block_forward.1} parent=11 // pred_region
          %201 = vsyncadd [#allocation5], 0
          %s203 = sshll.u32 %s5, 4
          %s204 = int_to_ptr.vmem [resolvable:$true] %s203
          %206 = dma.vmem_to_smem %s204, 16, [#allocation4], [#allocation5]
        $region32: #{block_forward.1} parent=11 // pred_fallthru
          _
      $region12: #{block_forward.1} parent=5 // pred_fallthru
        _
      %p207 = scmp.lt.s32.totalorder %s13, 2
      // Predicated region
      $region33: #{block_forward.1} parent=5 // pred_check
        %p208 = pneg %p207
      $region34: #{block_forward.1} parent=5 // pred_check_branch
        %210 = sbr.rel (%p208) target = $region36
      $region35: #{block_forward.1} parent=5 // pred_region
        // Predicated region
        $region37: #{block_forward.1} parent=35 // pred_check
          %p211 = pneg %p33
        $region38: #{block_forward.1} parent=35 // pred_check_branch
          %213 = sbr.rel (%p211) target = $region40
        $region39: #{block_forward.1} parent=35 // pred_region
          %p214 = scmp.lt.s32.totalorder %s13, 1
          %s215 = scalar_select %p214, %s13, 1
          %s216 = smul.addr %s215, 32
          %s217 = smul.addr %s216, 8
          %s218 = scalar_lea.vmem %s0, %s217
        $region40: #{block_forward.1} parent=35 // pred_fallthru
          _
      $region36: #{block_forward.1} parent=5 // pred_fallthru
        _
      %p219 = scmp.le.s32.totalorder 1, %s13
      %p220 = scmp.lt.s32.totalorder %s13, 3
      %p221 = pnand %p219, %p220
      %p222 = pneg %p221
      // Predicated region
      $region41: #{block_forward.1} parent=5 // pred_check
        _
      $region42: #{block_forward.1} parent=5 // pred_check_branch
        %224 = sbr.rel (%p221) target = $region44
      $region43: #{block_forward.1} parent=5 // pred_region
        %s225 = ssub.s32 %s13, 1
        // Predicated region
        $region45: #{block_forward.1} parent=43 // pred_check
          %p226 = pneg %p144
        $region46: #{block_forward.1} parent=43 // pred_check_branch
          %228 = sbr.rel (%p226) target = $region48
        $region47: #{block_forward.1} parent=43 // pred_region
          %230 = dma.done [#allocation5], 16
        $region48: #{block_forward.1} parent=43 // pred_fallthru
          _
        %231 = sfence
        %p232 = scmp.lt.s32.totalorder %s18, 1
        %s233 = scalar_select %p232, %s18, 1
        %s234 = smul.addr %s233, 32
        %s235 = smul.addr %s234, 8
        %s236 = scalar_lea.vmem %s0, %s235
        %p237 = pneg %p39
        %p238 = pneg %p36
        %p239 = pneg %p60
        %p240 = pneg %p57
        %p241 = pneg %p81
        %p242 = pneg %p78
        %p243 = pneg %p102
        %p244 = pneg %p99
        %p245 = pneg %p123
        %p246 = pneg %p120
        %p247 = pneg %p144
        %p248 = pneg %p141
        %p249 = pneg %p170
        %p250 = pneg %p167
        %p251 = scmp.lt.s32.totalorder %s18, 1
        %s252 = scalar_select %p251, %s18, 1
        %s253 = smul.addr %s252, 2
        %s254 = smul.addr %s253, 8
        %s255 = scalar_lea.vmem %s6, %s254
        %p256 = scmp.lt.s32.totalorder %s18, 1
        %s257 = scalar_select %p256, %s18, 1
        %s258 = smul.addr %s257, 32
        %s259 = smul.addr %s258, 8
        %s260 = scalar_lea.vmem %s0, %s259
        %p261 = scmp.lt.s32.totalorder %s18, 1
        %s262 = scalar_select %p261, %s18, 1
        %s263 = smul.addr %s262, 2
        %s264 = smul.addr %s263, 8
        %s265 = scalar_lea.vmem %s6, %s264
        %vm266 = vcmask 31744
        %267 = vst.msk [vmem:[#allocation2] sm:$0xff] %vm266, 0.0
        %268 = vst.msk [vmem:[#allocation2 + $0x8] sm:$0xff] %vm266, 0.0
        %vm269 = vcmask 25600
        %270 = vst.msk [vmem:[#allocation2 + $0x10] sm:$0x3] %vm269, 0.0
        %271 = vst.msk [vmem:[#allocation2 + $0x18] sm:$0xff] %vm266, 0.0
        %272 = vst.msk [vmem:[#allocation2 + $0x20] sm:$0xff] %vm266, 0.0
        %273 = vst.msk [vmem:[#allocation2 + $0x28] sm:$0x3] %vm269, 0.0
        %274 = vst.msk [vmem:[#allocation2 + $0x30] sm:$0xff] %vm266, 0.0
        %275 = vst.msk [vmem:[#allocation2 + $0x38] sm:$0xff] %vm266, 0.0
        %276 = vst.msk [vmem:[#allocation2 + $0x40] sm:$0x3] %vm269, 0.0
        %277 = vst.msk [vmem:[#allocation2 + $0x48] sm:$0xff] %vm266, 0.0
        %278 = vst.msk [vmem:[#allocation2 + $0x50] sm:$0xff] %vm266, 0.0
        %279 = vst.msk [vmem:[#allocation2 + $0x58] sm:$0x3] %vm269, 0.0
        %280 = vst.msk [vmem:[#allocation2 + $0x60] sm:$0xff] %vm266, 0.0
        %281 = vst.msk [vmem:[#allocation2 + $0x68] sm:$0xff] %vm266, 0.0
        %282 = vst.msk [vmem:[#allocation2 + $0x70] sm:$0x3] %vm269, 0.0
        %283 = vst.msk [vmem:[#allocation2 + $0x78] sm:$0xff] %vm266, 0.0
        %284 = vst.msk [vmem:[#allocation2 + $0x80] sm:$0xff] %vm266, 0.0
        %285 = vst.msk [vmem:[#allocation2 + $0x88] sm:$0x3] %vm269, 0.0
        %286 = vst.msk [vmem:[#allocation2 + $0x90] sm:$0xff] %vm266, 0.0
        %287 = vst.msk [vmem:[#allocation2 + $0x98] sm:$0xff] %vm266, 0.0
        %288 = vst.msk [vmem:[#allocation2 + $0xa0] sm:$0x3] %vm269, 0.0
        %289 = vst.msk [vmem:[#allocation2 + $0xa8] sm:$0xff] %vm266, 0.0
        %290 = vst.msk [vmem:[#allocation2 + $0xb0] sm:$0xff] %vm266, 0.0
        %291 = vst.msk [vmem:[#allocation2 + $0xb8] sm:$0x3] %vm269, 0.0
        %292 = vst.msk [vmem:[#allocation2 + $0xc0] sm:$0xff] %vm266, 0.0
        %293 = vst.msk [vmem:[#allocation2 + $0xc8] sm:$0xff] %vm266, 0.0
        %294 = vst.msk [vmem:[#allocation2 + $0xd0] sm:$0x3] %vm269, 0.0
        %295 = vst.msk [vmem:[#allocation2 + $0xd8] sm:$0xff] %vm266, 0.0
        %296 = vst.msk [vmem:[#allocation2 + $0xe0] sm:$0xff] %vm266, 0.0
        %297 = vst.msk [vmem:[#allocation2 + $0xe8] sm:$0x3] %vm269, 0.0
        %298 = vst.msk [vmem:[#allocation2 + $0xf0] sm:$0xff] %vm266, 0.0
        %299 = vst.msk [vmem:[#allocation2 + $0xf8] sm:$0xff] %vm266, 0.0
        %300 = vst.msk [vmem:[#allocation2 + $0x100] sm:$0x3] %vm269, 0.0
        %301 = vst.msk [vmem:[#allocation2 + $0x108] sm:$0xff] %vm266, 0.0
        %302 = vst.msk [vmem:[#allocation2 + $0x110] sm:$0xff] %vm266, 0.0
        %303 = vst.msk [vmem:[#allocation2 + $0x118] sm:$0x3] %vm269, 0.0
        %304 = vst.msk [vmem:[#allocation2 + $0x120] sm:$0xff] %vm266, 0.0
        %305 = vst.msk [vmem:[#allocation2 + $0x128] sm:$0xff] %vm266, 0.0
        %306 = vst.msk [vmem:[#allocation2 + $0x130] sm:$0x3] %vm269, 0.0
        %307 = vst.msk [vmem:[#allocation2 + $0x138] sm:$0xff] %vm266, 0.0
        %308 = vst.msk [vmem:[#allocation2 + $0x140] sm:$0xff] %vm266, 0.0
        %309 = vst.msk [vmem:[#allocation2 + $0x148] sm:$0x3] %vm269, 0.0
        %310 = vst.msk [vmem:[#allocation2 + $0x150] sm:$0xff] %vm266, 0.0
        %311 = vst.msk [vmem:[#allocation2 + $0x158] sm:$0xff] %vm266, 0.0
        %312 = vst.msk [vmem:[#allocation2 + $0x160] sm:$0x3] %vm269, 0.0
        %313 = vst.msk [vmem:[#allocation2 + $0x168] sm:$0xff] %vm266, 0.0
        %314 = vst.msk [vmem:[#allocation2 + $0x170] sm:$0xff] %vm266, 0.0
        %315 = vst.msk [vmem:[#allocation2 + $0x178] sm:$0x3] %vm269, 0.0
        %316 = vst.msk [vmem:[#allocation2 + $0x180] sm:$0xff] %vm266, 0.0
        %317 = vst.msk [vmem:[#allocation2 + $0x188] sm:$0xff] %vm266, 0.0
        %318 = vst.msk [vmem:[#allocation2 + $0x190] sm:$0x3] %vm269, 0.0
        %319 = vst.msk [vmem:[#allocation2 + $0x198] sm:$0xff] %vm266, 0.0
        %320 = vst.msk [vmem:[#allocation2 + $0x1a0] sm:$0xff] %vm266, 0.0
        %321 = vst.msk [vmem:[#allocation2 + $0x1a8] sm:$0x3] %vm269, 0.0
        %v322 = vld [vmem:[%s260] sm:$0xff]
        %v323 = vld [vmem:[%s260 + $0x8] sm:$0xff]
        %v324 = vld [vmem:[%s260 + $0x10] sm:$0xff]
        %v325 = vld [vmem:[%s260 + $0x18] sm:$0xff]
        %v326 = vld [vmem:[%s260 + $0x20] sm:$0xff]
        %v327 = vld [vmem:[%s260 + $0x28] sm:$0xff]
        %v328 = vld [vmem:[%s260 + $0x30] sm:$0xff]
        %v329 = vld [vmem:[%s260 + $0x38] sm:$0xff]
        %v330 = vld [vmem:[%s260 + $0x40] sm:$0xff]
        %v331 = vld [vmem:[%s260 + $0x48] sm:$0xff]
        %v332 = vld [vmem:[%s260 + $0x50] sm:$0xff]
        %v333 = vld [vmem:[%s260 + $0x58] sm:$0xff]
        %v334 = vld [vmem:[%s260 + $0x60] sm:$0xff]
        %v335 = vld [vmem:[%s260 + $0x68] sm:$0xff]
        %v336 = vld [vmem:[%s260 + $0x70] sm:$0xff]
        %v337 = vld [vmem:[%s260 + $0x78] sm:$0xff]
        %v338 = vld [vmem:[%s260 + $0x80] sm:$0xff]
        %v339 = vld [vmem:[%s260 + $0x88] sm:$0xff]
        %v340 = vld [vmem:[%s260 + $0x90] sm:$0xff]
        %v341 = vld [vmem:[%s260 + $0x98] sm:$0xff]
        %v342 = vld [vmem:[%s260 + $0xa0] sm:$0xff]
        %v343 = vld [vmem:[%s260 + $0xa8] sm:$0xff]
        %v344 = vld [vmem:[%s260 + $0xb0] sm:$0xff]
        %v345 = vld [vmem:[%s260 + $0xb8] sm:$0xff]
        %v346 = vld [vmem:[%s260 + $0xc0] sm:$0xff]
        %v347 = vld [vmem:[%s260 + $0xc8] sm:$0xff]
        %v348 = vld [vmem:[%s260 + $0xd0] sm:$0xff]
        %v349 = vld [vmem:[%s260 + $0xd8] sm:$0xff]
        %v350 = vld [vmem:[%s260 + $0xe0] sm:$0xff]
        %v351 = vld [vmem:[%s260 + $0xe8] sm:$0xff]
        %v352 = vld [vmem:[%s260 + $0xf0] sm:$0xff]
        %v353 = vld [vmem:[%s260 + $0xf8] sm:$0xff]
        %s354 = scalar_lea.vmem [#allocation2], 24
        %355 = vst.msk [vmem:[%s354 + $0x1] sm:$0xff] %vm266, %v322
        %356 = vst.msk [vmem:[%s354 + $0x9] sm:$0xff] %vm266, %v323
        %357 = vst.msk [vmem:[%s354 + $0x19] sm:$0xff] %vm266, %v324
        %358 = vst.msk [vmem:[%s354 + $0x21] sm:$0xff] %vm266, %v325
        %359 = vst.msk [vmem:[%s354 + $0x31] sm:$0xff] %vm266, %v326
        %360 = vst.msk [vmem:[%s354 + $0x39] sm:$0xff] %vm266, %v327
        %361 = vst.msk [vmem:[%s354 + $0x49] sm:$0xff] %vm266, %v328
        %362 = vst.msk [vmem:[%s354 + $0x51] sm:$0xff] %vm266, %v329
        %363 = vst.msk [vmem:[%s354 + $0x61] sm:$0xff] %vm266, %v330
        %364 = vst.msk [vmem:[%s354 + $0x69] sm:$0xff] %vm266, %v331
        %365 = vst.msk [vmem:[%s354 + $0x79] sm:$0xff] %vm266, %v332
        %366 = vst.msk [vmem:[%s354 + $0x81] sm:$0xff] %vm266, %v333
        %367 = vst.msk [vmem:[%s354 + $0x91] sm:$0xff] %vm266, %v334
        %368 = vst.msk [vmem:[%s354 + $0x99] sm:$0xff] %vm266, %v335
        %369 = vst.msk [vmem:[%s354 + $0xa9] sm:$0xff] %vm266, %v336
        %370 = vst.msk [vmem:[%s354 + $0xb1] sm:$0xff] %vm266, %v337
        %371 = vst.msk [vmem:[%s354 + $0xc1] sm:$0xff] %vm266, %v338
        %372 = vst.msk [vmem:[%s354 + $0xc9] sm:$0xff] %vm266, %v339
        %373 = vst.msk [vmem:[%s354 + $0xd9] sm:$0xff] %vm266, %v340
        %374 = vst.msk [vmem:[%s354 + $0xe1] sm:$0xff] %vm266, %v341
        %375 = vst.msk [vmem:[%s354 + $0xf1] sm:$0xff] %vm266, %v342
        %376 = vst.msk [vmem:[%s354 + $0xf9] sm:$0xff] %vm266, %v343
        %377 = vst.msk [vmem:[%s354 + $0x109] sm:$0xff] %vm266, %v344
        %378 = vst.msk [vmem:[%s354 + $0x111] sm:$0xff] %vm266, %v345
        %379 = vst.msk [vmem:[%s354 + $0x121] sm:$0xff] %vm266, %v346
        %380 = vst.msk [vmem:[%s354 + $0x129] sm:$0xff] %vm266, %v347
        %381 = vst.msk [vmem:[%s354 + $0x139] sm:$0xff] %vm266, %v348
        %382 = vst.msk [vmem:[%s354 + $0x141] sm:$0xff] %vm266, %v349
        %383 = vst.msk [vmem:[%s354 + $0x151] sm:$0xff] %vm266, %v350
        %384 = vst.msk [vmem:[%s354 + $0x159] sm:$0xff] %vm266, %v351
        %385 = vst.msk [vmem:[%s354 + $0x169] sm:$0xff] %vm266, %v352
        %386 = vst.msk [vmem:[%s354 + $0x171] sm:$0xff] %vm266, %v353
        %s387 = sld [smem:[#allocation4]]
        %v388 = vld [vmem:[#allocation2] sm:$0xff]
        %v389 = vld [vmem:[#allocation2 + $0x8] sm:$0xff]
        %v390 = vld [vmem:[#allocation2 + $0x18] sm:$0xff]
        %v391 = vld [vmem:[#allocation2 + $0x20] sm:$0xff]
        %v392 = vld [vmem:[#allocation2 + $0x30] sm:$0xff]
        %v393 = vld [vmem:[#allocation2 + $0x38] sm:$0xff]
        %v394 = vld [vmem:[#allocation2 + $0x48] sm:$0xff]
        %v395 = vld [vmem:[#allocation2 + $0x50] sm:$0xff]
        %v396 = vld [vmem:[#allocation2 + $0x60] sm:$0xff]
        %v397 = vld [vmem:[#allocation2 + $0x68] sm:$0xff]
        %v398 = vld [vmem:[#allocation2 + $0x78] sm:$0xff]
        %v399 = vld [vmem:[#allocation2 + $0x80] sm:$0xff]
        %v400 = vld [vmem:[#allocation2 + $0x90] sm:$0xff]
        %v401 = vld [vmem:[#allocation2 + $0x98] sm:$0xff]
        %v402 = vld [vmem:[#allocation2 + $0xa8] sm:$0xff]
        %v403 = vld [vmem:[#allocation2 + $0xb0] sm:$0xff]
        %v404 = vld [vmem:[#allocation2 + $0xc0] sm:$0xff]
        %v405 = vld [vmem:[#allocation2 + $0xc8] sm:$0xff]
        %v406 = vld [vmem:[#allocation2 + $0xd8] sm:$0xff]
        %v407 = vld [vmem:[#allocation2 + $0xe0] sm:$0xff]
        %v408 = vld [vmem:[#allocation2 + $0xf0] sm:$0xff]
        %v409 = vld [vmem:[#allocation2 + $0xf8] sm:$0xff]
        %v410 = vld [vmem:[#allocation2 + $0x108] sm:$0xff]
        %v411 = vld [vmem:[#allocation2 + $0x110] sm:$0xff]
        %v412 = vld [vmem:[#allocation2 + $0x120] sm:$0xff]
        %v413 = vld [vmem:[#allocation2 + $0x128] sm:$0xff]
        %v414 = vld [vmem:[#allocation2 + $0x138] sm:$0xff]
        %v415 = vld [vmem:[#allocation2 + $0x140] sm:$0xff]
        %v416 = vld [vmem:[#allocation2 + $0x150] sm:$0xff]
        %v417 = vld [vmem:[#allocation2 + $0x158] sm:$0xff]
        %v418 = vld [vmem:[#allocation2 + $0x168] sm:$0xff]
        %v419 = vld [vmem:[#allocation2 + $0x170] sm:$0xff]
        %v420 = vld [vmem:[#allocation2 + $0x1] sm:$0xff]
        %v421 = vld [vmem:[#allocation2 + $0x9] sm:$0xff]
        %v422 = vld [vmem:[#allocation2 + $0x19] sm:$0xff]
        %v423 = vld [vmem:[#allocation2 + $0x21] sm:$0xff]
        %v424 = vld [vmem:[#allocation2 + $0x31] sm:$0xff]
        %v425 = vld [vmem:[#allocation2 + $0x39] sm:$0xff]
        %v426 = vld [vmem:[#allocation2 + $0x49] sm:$0xff]
        %v427 = vld [vmem:[#allocation2 + $0x51] sm:$0xff]
        %v428 = vld [vmem:[#allocation2 + $0x61] sm:$0xff]
        %v429 = vld [vmem:[#allocation2 + $0x69] sm:$0xff]
        %v430 = vld [vmem:[#allocation2 + $0x79] sm:$0xff]
        %v431 = vld [vmem:[#allocation2 + $0x81] sm:$0xff]
        %v432 = vld [vmem:[#allocation2 + $0x91] sm:$0xff]
        %v433 = vld [vmem:[#allocation2 + $0x99] sm:$0xff]
        %v434 = vld [vmem:[#allocation2 + $0xa9] sm:$0xff]
        %v435 = vld [vmem:[#allocation2 + $0xb1] sm:$0xff]
        %v436 = vld [vmem:[#allocation2 + $0xc1] sm:$0xff]
        %v437 = vld [vmem:[#allocation2 + $0xc9] sm:$0xff]
        %v438 = vld [vmem:[#allocation2 + $0xd9] sm:$0xff]
        %v439 = vld [vmem:[#allocation2 + $0xe1] sm:$0xff]
        %v440 = vld [vmem:[#allocation2 + $0xf1] sm:$0xff]
        %v441 = vld [vmem:[#allocation2 + $0xf9] sm:$0xff]
        %v442 = vld [vmem:[#allocation2 + $0x109] sm:$0xff]
        %v443 = vld [vmem:[#allocation2 + $0x111] sm:$0xff]
        %v444 = vld [vmem:[#allocation2 + $0x121] sm:$0xff]
        %v445 = vld [vmem:[#allocation2 + $0x129] sm:$0xff]
        %v446 = vld [vmem:[#allocation2 + $0x139] sm:$0xff]
        %v447 = vld [vmem:[#allocation2 + $0x141] sm:$0xff]
        %v448 = vld [vmem:[#allocation2 + $0x151] sm:$0xff]
        %v449 = vld [vmem:[#allocation2 + $0x159] sm:$0xff]
        %v450 = vld [vmem:[#allocation2 + $0x169] sm:$0xff]
        %v451 = vld [vmem:[#allocation2 + $0x171] sm:$0xff]
        %v452 = vld [vmem:[#allocation2 + $0x2] sm:$0xff]
        %v453 = vld [vmem:[#allocation2 + $0xa] sm:$0xff]
        %v454 = vld [vmem:[#allocation2 + $0x1a] sm:$0xff]
        %v455 = vld [vmem:[#allocation2 + $0x22] sm:$0xff]
        %v456 = vld [vmem:[#allocation2 + $0x32] sm:$0xff]
        %v457 = vld [vmem:[#allocation2 + $0x3a] sm:$0xff]
        %v458 = vld [vmem:[#allocation2 + $0x4a] sm:$0xff]
        %v459 = vld [vmem:[#allocation2 + $0x52] sm:$0xff]
        %v460 = vld [vmem:[#allocation2 + $0x62] sm:$0xff]
        %v461 = vld [vmem:[#allocation2 + $0x6a] sm:$0xff]
        %v462 = vld [vmem:[#allocation2 + $0x7a] sm:$0xff]
        %v463 = vld [vmem:[#allocation2 + $0x82] sm:$0xff]
        %v464 = vld [vmem:[#allocation2 + $0x92] sm:$0xff]
        %v465 = vld [vmem:[#allocation2 + $0x9a] sm:$0xff]
        %v466 = vld [vmem:[#allocation2 + $0xaa] sm:$0xff]
        %v467 = vld [vmem:[#allocation2 + $0xb2] sm:$0xff]
        %v468 = vld [vmem:[#allocation2 + $0xc2] sm:$0xff]
        %v469 = vld [vmem:[#allocation2 + $0xca] sm:$0xff]
        %v470 = vld [vmem:[#allocation2 + $0xda] sm:$0xff]
        %v471 = vld [vmem:[#allocation2 + $0xe2] sm:$0xff]
        %v472 = vld [vmem:[#allocation2 + $0xf2] sm:$0xff]
        %v473 = vld [vmem:[#allocation2 + $0xfa] sm:$0xff]
        %v474 = vld [vmem:[#allocation2 + $0x10a] sm:$0xff]
        %v475 = vld [vmem:[#allocation2 + $0x112] sm:$0xff]
        %v476 = vld [vmem:[#allocation2 + $0x122] sm:$0xff]
        %v477 = vld [vmem:[#allocation2 + $0x12a] sm:$0xff]
        %v478 = vld [vmem:[#allocation2 + $0x13a] sm:$0xff]
        %v479 = vld [vmem:[#allocation2 + $0x142] sm:$0xff]
        %v480 = vld [vmem:[#allocation2 + $0x152] sm:$0xff]
        %v481 = vld [vmem:[#allocation2 + $0x15a] sm:$0xff]
        %v482 = vld [vmem:[#allocation2 + $0x16a] sm:$0xff]
        %v483 = vld [vmem:[#allocation2 + $0x172] sm:$0xff]
        %v484 = vld [vmem:[%s354] sm:$0xff]
        %v485 = vld [vmem:[%s354 + $0x8] sm:$0xff]
        %v486 = vld [vmem:[%s354 + $0x18] sm:$0xff]
        %v487 = vld [vmem:[%s354 + $0x20] sm:$0xff]
        %v488 = vld [vmem:[%s354 + $0x30] sm:$0xff]
        %v489 = vld [vmem:[%s354 + $0x38] sm:$0xff]
        %v490 = vld [vmem:[%s354 + $0x48] sm:$0xff]
        %v491 = vld [vmem:[%s354 + $0x50] sm:$0xff]
        %v492 = vld [vmem:[%s354 + $0x60] sm:$0xff]
        %v493 = vld [vmem:[%s354 + $0x68] sm:$0xff]
        %v494 = vld [vmem:[%s354 + $0x78] sm:$0xff]
        %v495 = vld [vmem:[%s354 + $0x80] sm:$0xff]
        %v496 = vld [vmem:[%s354 + $0x90] sm:$0xff]
        %v497 = vld [vmem:[%s354 + $0x98] sm:$0xff]
        %v498 = vld [vmem:[%s354 + $0xa8] sm:$0xff]
        %v499 = vld [vmem:[%s354 + $0xb0] sm:$0xff]
        %v500 = vld [vmem:[%s354 + $0xc0] sm:$0xff]
        %v501 = vld [vmem:[%s354 + $0xc8] sm:$0xff]
        %v502 = vld [vmem:[%s354 + $0xd8] sm:$0xff]
        %v503 = vld [vmem:[%s354 + $0xe0] sm:$0xff]
        %v504 = vld [vmem:[%s354 + $0xf0] sm:$0xff]
        %v505 = vld [vmem:[%s354 + $0xf8] sm:$0xff]
        %v506 = vld [vmem:[%s354 + $0x108] sm:$0xff]
        %v507 = vld [vmem:[%s354 + $0x110] sm:$0xff]
        %v508 = vld [vmem:[%s354 + $0x120] sm:$0xff]
        %v509 = vld [vmem:[%s354 + $0x128] sm:$0xff]
        %v510 = vld [vmem:[%s354 + $0x138] sm:$0xff]
        %v511 = vld [vmem:[%s354 + $0x140] sm:$0xff]
        %v512 = vld [vmem:[%s354 + $0x150] sm:$0xff]
        %v513 = vld [vmem:[%s354 + $0x158] sm:$0xff]
        %v514 = vld [vmem:[%s354 + $0x168] sm:$0xff]
        %v515 = vld [vmem:[%s354 + $0x170] sm:$0xff]
        %v516 = vld [vmem:[%s354 + $0x1] sm:$0xff]
        %v517 = vld [vmem:[%s354 + $0x9] sm:$0xff]
        %v518 = vld [vmem:[%s354 + $0x19] sm:$0xff]
        %v519 = vld [vmem:[%s354 + $0x21] sm:$0xff]
        %v520 = vld [vmem:[%s354 + $0x31] sm:$0xff]
        %v521 = vld [vmem:[%s354 + $0x39] sm:$0xff]
        %v522 = vld [vmem:[%s354 + $0x49] sm:$0xff]
        %v523 = vld [vmem:[%s354 + $0x51] sm:$0xff]
        %v524 = vld [vmem:[%s354 + $0x61] sm:$0xff]
        %v525 = vld [vmem:[%s354 + $0x69] sm:$0xff]
        %v526 = vld [vmem:[%s354 + $0x79] sm:$0xff]
        %v527 = vld [vmem:[%s354 + $0x81] sm:$0xff]
        %v528 = vld [vmem:[%s354 + $0x91] sm:$0xff]
        %v529 = vld [vmem:[%s354 + $0x99] sm:$0xff]
        %v530 = vld [vmem:[%s354 + $0xa9] sm:$0xff]
        %v531 = vld [vmem:[%s354 + $0xb1] sm:$0xff]
        %v532 = vld [vmem:[%s354 + $0xc1] sm:$0xff]
        %v533 = vld [vmem:[%s354 + $0xc9] sm:$0xff]
        %v534 = vld [vmem:[%s354 + $0xd9] sm:$0xff]
        %v535 = vld [vmem:[%s354 + $0xe1] sm:$0xff]
        %v536 = vld [vmem:[%s354 + $0xf1] sm:$0xff]
        %v537 = vld [vmem:[%s354 + $0xf9] sm:$0xff]
        %v538 = vld [vmem:[%s354 + $0x109] sm:$0xff]
        %v539 = vld [vmem:[%s354 + $0x111] sm:$0xff]
        %v540 = vld [vmem:[%s354 + $0x121] sm:$0xff]
        %v541 = vld [vmem:[%s354 + $0x129] sm:$0xff]
        %v542 = vld [vmem:[%s354 + $0x139] sm:$0xff]
        %v543 = vld [vmem:[%s354 + $0x141] sm:$0xff]
        %v544 = vld [vmem:[%s354 + $0x151] sm:$0xff]
        %v545 = vld [vmem:[%s354 + $0x159] sm:$0xff]
        %v546 = vld [vmem:[%s354 + $0x169] sm:$0xff]
        %v547 = vld [vmem:[%s354 + $0x171] sm:$0xff]
        %v548 = vld [vmem:[%s354 + $0x2] sm:$0xff]
        %v549 = vld [vmem:[%s354 + $0xa] sm:$0xff]
        %v550 = vld [vmem:[%s354 + $0x1a] sm:$0xff]
        %v551 = vld [vmem:[%s354 + $0x22] sm:$0xff]
        %v552 = vld [vmem:[%s354 + $0x32] sm:$0xff]
        %v553 = vld [vmem:[%s354 + $0x3a] sm:$0xff]
        %v554 = vld [vmem:[%s354 + $0x4a] sm:$0xff]
        %v555 = vld [vmem:[%s354 + $0x52] sm:$0xff]
        %v556 = vld [vmem:[%s354 + $0x62] sm:$0xff]
        %v557 = vld [vmem:[%s354 + $0x6a] sm:$0xff]
        %v558 = vld [vmem:[%s354 + $0x7a] sm:$0xff]
        %v559 = vld [vmem:[%s354 + $0x82] sm:$0xff]
        %v560 = vld [vmem:[%s354 + $0x92] sm:$0xff]
        %v561 = vld [vmem:[%s354 + $0x9a] sm:$0xff]
        %v562 = vld [vmem:[%s354 + $0xaa] sm:$0xff]
        %v563 = vld [vmem:[%s354 + $0xb2] sm:$0xff]
        %v564 = vld [vmem:[%s354 + $0xc2] sm:$0xff]
        %v565 = vld [vmem:[%s354 + $0xca] sm:$0xff]
        %v566 = vld [vmem:[%s354 + $0xda] sm:$0xff]
        %v567 = vld [vmem:[%s354 + $0xe2] sm:$0xff]
        %v568 = vld [vmem:[%s354 + $0xf2] sm:$0xff]
        %v569 = vld [vmem:[%s354 + $0xfa] sm:$0xff]
        %v570 = vld [vmem:[%s354 + $0x10a] sm:$0xff]
        %v571 = vld [vmem:[%s354 + $0x112] sm:$0xff]
        %v572 = vld [vmem:[%s354 + $0x122] sm:$0xff]
        %v573 = vld [vmem:[%s354 + $0x12a] sm:$0xff]
        %v574 = vld [vmem:[%s354 + $0x13a] sm:$0xff]
        %v575 = vld [vmem:[%s354 + $0x142] sm:$0xff]
        %v576 = vld [vmem:[%s354 + $0x152] sm:$0xff]
        %v577 = vld [vmem:[%s354 + $0x15a] sm:$0xff]
        %v578 = vld [vmem:[%s354 + $0x16a] sm:$0xff]
        %v579 = vld [vmem:[%s354 + $0x172] sm:$0xff]
        %s580 = scalar_lea.vmem [#allocation2], 48
        %v581 = vld [vmem:[%s580] sm:$0xff]
        %v582 = vld [vmem:[%s580 + $0x8] sm:$0xff]
        %v583 = vld [vmem:[%s580 + $0x18] sm:$0xff]
        %v584 = vld [vmem:[%s580 + $0x20] sm:$0xff]
        %v585 = vld [vmem:[%s580 + $0x30] sm:$0xff]
        %v586 = vld [vmem:[%s580 + $0x38] sm:$0xff]
        %v587 = vld [vmem:[%s580 + $0x48] sm:$0xff]
        %v588 = vld [vmem:[%s580 + $0x50] sm:$0xff]
        %v589 = vld [vmem:[%s580 + $0x60] sm:$0xff]
        %v590 = vld [vmem:[%s580 + $0x68] sm:$0xff]
        %v591 = vld [vmem:[%s580 + $0x78] sm:$0xff]
        %v592 = vld [vmem:[%s580 + $0x80] sm:$0xff]
        %v593 = vld [vmem:[%s580 + $0x90] sm:$0xff]
        %v594 = vld [vmem:[%s580 + $0x98] sm:$0xff]
        %v595 = vld [vmem:[%s580 + $0xa8] sm:$0xff]
        %v596 = vld [vmem:[%s580 + $0xb0] sm:$0xff]
        %v597 = vld [vmem:[%s580 + $0xc0] sm:$0xff]
        %v598 = vld [vmem:[%s580 + $0xc8] sm:$0xff]
        %v599 = vld [vmem:[%s580 + $0xd8] sm:$0xff]
        %v600 = vld [vmem:[%s580 + $0xe0] sm:$0xff]
        %v601 = vld [vmem:[%s580 + $0xf0] sm:$0xff]
        %v602 = vld [vmem:[%s580 + $0xf8] sm:$0xff]
        %v603 = vld [vmem:[%s580 + $0x108] sm:$0xff]
        %v604 = vld [vmem:[%s580 + $0x110] sm:$0xff]
        %v605 = vld [vmem:[%s580 + $0x120] sm:$0xff]
        %v606 = vld [vmem:[%s580 + $0x128] sm:$0xff]
        %v607 = vld [vmem:[%s580 + $0x138] sm:$0xff]
        %v608 = vld [vmem:[%s580 + $0x140] sm:$0xff]
        %v609 = vld [vmem:[%s580 + $0x150] sm:$0xff]
        %v610 = vld [vmem:[%s580 + $0x158] sm:$0xff]
        %v611 = vld [vmem:[%s580 + $0x168] sm:$0xff]
        %v612 = vld [vmem:[%s580 + $0x170] sm:$0xff]
        %v613 = vld [vmem:[%s580 + $0x1] sm:$0xff]
        %v614 = vld [vmem:[%s580 + $0x9] sm:$0xff]
        %v615 = vld [vmem:[%s580 + $0x19] sm:$0xff]
        %v616 = vld [vmem:[%s580 + $0x21] sm:$0xff]
        %v617 = vld [vmem:[%s580 + $0x31] sm:$0xff]
        %v618 = vld [vmem:[%s580 + $0x39] sm:$0xff]
        %v619 = vld [vmem:[%s580 + $0x49] sm:$0xff]
        %v620 = vld [vmem:[%s580 + $0x51] sm:$0xff]
        %v621 = vld [vmem:[%s580 + $0x61] sm:$0xff]
        %v622 = vld [vmem:[%s580 + $0x69] sm:$0xff]
        %v623 = vld [vmem:[%s580 + $0x79] sm:$0xff]
        %v624 = vld [vmem:[%s580 + $0x81] sm:$0xff]
        %v625 = vld [vmem:[%s580 + $0x91] sm:$0xff]
        %v626 = vld [vmem:[%s580 + $0x99] sm:$0xff]
        %v627 = vld [vmem:[%s580 + $0xa9] sm:$0xff]
        %v628 = vld [vmem:[%s580 + $0xb1] sm:$0xff]
        %v629 = vld [vmem:[%s580 + $0xc1] sm:$0xff]
        %v630 = vld [vmem:[%s580 + $0xc9] sm:$0xff]
        %v631 = vld [vmem:[%s580 + $0xd9] sm:$0xff]
        %v632 = vld [vmem:[%s580 + $0xe1] sm:$0xff]
        %v633 = vld [vmem:[%s580 + $0xf1] sm:$0xff]
        %v634 = vld [vmem:[%s580 + $0xf9] sm:$0xff]
        %v635 = vld [vmem:[%s580 + $0x109] sm:$0xff]
        %v636 = vld [vmem:[%s580 + $0x111] sm:$0xff]
        %v637 = vld [vmem:[%s580 + $0x121] sm:$0xff]
        %v638 = vld [vmem:[%s580 + $0x129] sm:$0xff]
        %v639 = vld [vmem:[%s580 + $0x139] sm:$0xff]
        %v640 = vld [vmem:[%s580 + $0x141] sm:$0xff]
        %v641 = vld [vmem:[%s580 + $0x151] sm:$0xff]
        %v642 = vld [vmem:[%s580 + $0x159] sm:$0xff]
        %v643 = vld [vmem:[%s580 + $0x169] sm:$0xff]
        %v644 = vld [vmem:[%s580 + $0x171] sm:$0xff]
        %v645 = vld [vmem:[%s580 + $0x2] sm:$0xff]
        %v646 = vld [vmem:[%s580 + $0xa] sm:$0xff]
        %v647 = vld [vmem:[%s580 + $0x1a] sm:$0xff]
        %v648 = vld [vmem:[%s580 + $0x22] sm:$0xff]
        %v649 = vld [vmem:[%s580 + $0x32] sm:$0xff]
        %v650 = vld [vmem:[%s580 + $0x3a] sm:$0xff]
        %v651 = vld [vmem:[%s580 + $0x4a] sm:$0xff]
        %v652 = vld [vmem:[%s580 + $0x52] sm:$0xff]
        %v653 = vld [vmem:[%s580 + $0x62] sm:$0xff]
        %v654 = vld [vmem:[%s580 + $0x6a] sm:$0xff]
        %v655 = vld [vmem:[%s580 + $0x7a] sm:$0xff]
        %v656 = vld [vmem:[%s580 + $0x82] sm:$0xff]
        %v657 = vld [vmem:[%s580 + $0x92] sm:$0xff]
        %v658 = vld [vmem:[%s580 + $0x9a] sm:$0xff]
        %v659 = vld [vmem:[%s580 + $0xaa] sm:$0xff]
        %v660 = vld [vmem:[%s580 + $0xb2] sm:$0xff]
        %v661 = vld [vmem:[%s580 + $0xc2] sm:$0xff]
        %v662 = vld [vmem:[%s580 + $0xca] sm:$0xff]
        %v663 = vld [vmem:[%s580 + $0xda] sm:$0xff]
        %v664 = vld [vmem:[%s580 + $0xe2] sm:$0xff]
        %v665 = vld [vmem:[%s580 + $0xf2] sm:$0xff]
        %v666 = vld [vmem:[%s580 + $0xfa] sm:$0xff]
        %v667 = vld [vmem:[%s580 + $0x10a] sm:$0xff]
        %v668 = vld [vmem:[%s580 + $0x112] sm:$0xff]
        %v669 = vld [vmem:[%s580 + $0x122] sm:$0xff]
        %v670 = vld [vmem:[%s580 + $0x12a] sm:$0xff]
        %v671 = vld [vmem:[%s580 + $0x13a] sm:$0xff]
        %v672 = vld [vmem:[%s580 + $0x142] sm:$0xff]
        %v673 = vld [vmem:[%s580 + $0x152] sm:$0xff]
        %v674 = vld [vmem:[%s580 + $0x15a] sm:$0xff]
        %v675 = vld [vmem:[%s580 + $0x16a] sm:$0xff]
        %v676 = vld [vmem:[%s580 + $0x172] sm:$0xff]
        %709 = vrot.lane.b32.xlu0 %v420, 4
        %v710 = vpop.permute.xlu0 %709
        %711 = vrot.lane.b32.xlu0 %v421, 4
        %v712 = vpop.permute.xlu0 %711
        %713 = vrot.lane.b32.xlu0 %v422, 4
        %v714 = vpop.permute.xlu0 %713
        %715 = vrot.lane.b32.xlu0 %v423, 4
        %v716 = vpop.permute.xlu0 %715
        %717 = vrot.lane.b32.xlu0 %v424, 4
        %v718 = vpop.permute.xlu0 %717
        %719 = vrot.lane.b32.xlu0 %v425, 4
        %v720 = vpop.permute.xlu0 %719
        %721 = vrot.lane.b32.xlu0 %v426, 4
        %v722 = vpop.permute.xlu0 %721
        %723 = vrot.lane.b32.xlu0 %v427, 4
        %v724 = vpop.permute.xlu0 %723
        %725 = vrot.lane.b32.xlu0 %v428, 4
        %v726 = vpop.permute.xlu0 %725
        %727 = vrot.lane.b32.xlu0 %v429, 4
        %v728 = vpop.permute.xlu0 %727
        %729 = vrot.lane.b32.xlu0 %v430, 4
        %v730 = vpop.permute.xlu0 %729
        %731 = vrot.lane.b32.xlu0 %v431, 4
        %v732 = vpop.permute.xlu0 %731
        %733 = vrot.lane.b32.xlu0 %v432, 4
        %v734 = vpop.permute.xlu0 %733
        %735 = vrot.lane.b32.xlu0 %v433, 4
        %v736 = vpop.permute.xlu0 %735
        %737 = vrot.lane.b32.xlu0 %v434, 4
        %v738 = vpop.permute.xlu0 %737
        %739 = vrot.lane.b32.xlu0 %v435, 4
        %v740 = vpop.permute.xlu0 %739
        %741 = vrot.lane.b32.xlu0 %v436, 4
        %v742 = vpop.permute.xlu0 %741
        %743 = vrot.lane.b32.xlu0 %v437, 4
        %v744 = vpop.permute.xlu0 %743
        %745 = vrot.lane.b32.xlu0 %v438, 4
        %v746 = vpop.permute.xlu0 %745
        %747 = vrot.lane.b32.xlu0 %v439, 4
        %v748 = vpop.permute.xlu0 %747
        %749 = vrot.lane.b32.xlu0 %v440, 4
        %v750 = vpop.permute.xlu0 %749
        %751 = vrot.lane.b32.xlu0 %v441, 4
        %v752 = vpop.permute.xlu0 %751
        %753 = vrot.lane.b32.xlu0 %v442, 4
        %v754 = vpop.permute.xlu0 %753
        %755 = vrot.lane.b32.xlu0 %v443, 4
        %v756 = vpop.permute.xlu0 %755
        %757 = vrot.lane.b32.xlu0 %v444, 4
        %v758 = vpop.permute.xlu0 %757
        %759 = vrot.lane.b32.xlu0 %v445, 4
        %v760 = vpop.permute.xlu0 %759
        %761 = vrot.lane.b32.xlu0 %v446, 4
        %v762 = vpop.permute.xlu0 %761
        %763 = vrot.lane.b32.xlu0 %v447, 4
        %v764 = vpop.permute.xlu0 %763
        %765 = vrot.lane.b32.xlu0 %v448, 4
        %v766 = vpop.permute.xlu0 %765
        %767 = vrot.lane.b32.xlu0 %v449, 4
        %v768 = vpop.permute.xlu0 %767
        %769 = vrot.lane.b32.xlu0 %v450, 4
        %v770 = vpop.permute.xlu0 %769
        %771 = vrot.lane.b32.xlu0 %v451, 4
        %v772 = vpop.permute.xlu0 %771
        %837 = vrot.lane.b32.xlu0 %v452, 8
        %v838 = vpop.permute.xlu0 %837
        %839 = vrot.lane.b32.xlu0 %v453, 8
        %v840 = vpop.permute.xlu0 %839
        %841 = vrot.lane.b32.xlu0 %v454, 8
        %v842 = vpop.permute.xlu0 %841
        %843 = vrot.lane.b32.xlu0 %v455, 8
        %v844 = vpop.permute.xlu0 %843
        %845 = vrot.lane.b32.xlu0 %v456, 8
        %v846 = vpop.permute.xlu0 %845
        %847 = vrot.lane.b32.xlu0 %v457, 8
        %v848 = vpop.permute.xlu0 %847
        %849 = vrot.lane.b32.xlu0 %v458, 8
        %v850 = vpop.permute.xlu0 %849
        %851 = vrot.lane.b32.xlu0 %v459, 8
        %v852 = vpop.permute.xlu0 %851
        %853 = vrot.lane.b32.xlu0 %v460, 8
        %v854 = vpop.permute.xlu0 %853
        %855 = vrot.lane.b32.xlu0 %v461, 8
        %v856 = vpop.permute.xlu0 %855
        %857 = vrot.lane.b32.xlu0 %v462, 8
        %v858 = vpop.permute.xlu0 %857
        %859 = vrot.lane.b32.xlu0 %v463, 8
        %v860 = vpop.permute.xlu0 %859
        %861 = vrot.lane.b32.xlu0 %v464, 8
        %v862 = vpop.permute.xlu0 %861
        %863 = vrot.lane.b32.xlu0 %v465, 8
        %v864 = vpop.permute.xlu0 %863
        %865 = vrot.lane.b32.xlu0 %v466, 8
        %v866 = vpop.permute.xlu0 %865
        %867 = vrot.lane.b32.xlu0 %v467, 8
        %v868 = vpop.permute.xlu0 %867
        %869 = vrot.lane.b32.xlu0 %v468, 8
        %v870 = vpop.permute.xlu0 %869
        %871 = vrot.lane.b32.xlu0 %v469, 8
        %v872 = vpop.permute.xlu0 %871
        %873 = vrot.lane.b32.xlu0 %v470, 8
        %v874 = vpop.permute.xlu0 %873
        %875 = vrot.lane.b32.xlu0 %v471, 8
        %v876 = vpop.permute.xlu0 %875
        %877 = vrot.lane.b32.xlu0 %v472, 8
        %v878 = vpop.permute.xlu0 %877
        %879 = vrot.lane.b32.xlu0 %v473, 8
        %v880 = vpop.permute.xlu0 %879
        %881 = vrot.lane.b32.xlu0 %v474, 8
        %v882 = vpop.permute.xlu0 %881
        %883 = vrot.lane.b32.xlu0 %v475, 8
        %v884 = vpop.permute.xlu0 %883
        %885 = vrot.lane.b32.xlu0 %v476, 8
        %v886 = vpop.permute.xlu0 %885
        %887 = vrot.lane.b32.xlu0 %v477, 8
        %v888 = vpop.permute.xlu0 %887
        %889 = vrot.lane.b32.xlu0 %v478, 8
        %v890 = vpop.permute.xlu0 %889
        %891 = vrot.lane.b32.xlu0 %v479, 8
        %v892 = vpop.permute.xlu0 %891
        %893 = vrot.lane.b32.xlu0 %v480, 8
        %v894 = vpop.permute.xlu0 %893
        %895 = vrot.lane.b32.xlu0 %v481, 8
        %v896 = vpop.permute.xlu0 %895
        %897 = vrot.lane.b32.xlu0 %v482, 8
        %v898 = vpop.permute.xlu0 %897
        %899 = vrot.lane.b32.xlu0 %v483, 8
        %v900 = vpop.permute.xlu0 %899
        %965 = vrot.lane.b32.xlu0 %v484, 12
        %v966 = vpop.permute.xlu0 %965
        %967 = vrot.lane.b32.xlu0 %v485, 12
        %v968 = vpop.permute.xlu0 %967
        %969 = vrot.lane.b32.xlu0 %v486, 12
        %v970 = vpop.permute.xlu0 %969
        %971 = vrot.lane.b32.xlu0 %v487, 12
        %v972 = vpop.permute.xlu0 %971
        %973 = vrot.lane.b32.xlu0 %v488, 12
        %v974 = vpop.permute.xlu0 %973
        %975 = vrot.lane.b32.xlu0 %v489, 12
        %v976 = vpop.permute.xlu0 %975
        %977 = vrot.lane.b32.xlu0 %v490, 12
        %v978 = vpop.permute.xlu0 %977
        %979 = vrot.lane.b32.xlu0 %v491, 12
        %v980 = vpop.permute.xlu0 %979
        %981 = vrot.lane.b32.xlu0 %v492, 12
        %v982 = vpop.permute.xlu0 %981
        %983 = vrot.lane.b32.xlu0 %v493, 12
        %v984 = vpop.permute.xlu0 %983
        %985 = vrot.lane.b32.xlu0 %v494, 12
        %v986 = vpop.permute.xlu0 %985
        %987 = vrot.lane.b32.xlu0 %v495, 12
        %v988 = vpop.permute.xlu0 %987
        %989 = vrot.lane.b32.xlu0 %v496, 12
        %v990 = vpop.permute.xlu0 %989
        %991 = vrot.lane.b32.xlu0 %v497, 12
        %v992 = vpop.permute.xlu0 %991
        %993 = vrot.lane.b32.xlu0 %v498, 12
        %v994 = vpop.permute.xlu0 %993
        %995 = vrot.lane.b32.xlu0 %v499, 12
        %v996 = vpop.permute.xlu0 %995
        %997 = vrot.lane.b32.xlu0 %v500, 12
        %v998 = vpop.permute.xlu0 %997
        %999 = vrot.lane.b32.xlu0 %v501, 12
        %v1000 = vpop.permute.xlu0 %999
        %1001 = vrot.lane.b32.xlu0 %v502, 12
        %v1002 = vpop.permute.xlu0 %1001
        %1003 = vrot.lane.b32.xlu0 %v503, 12
        %v1004 = vpop.permute.xlu0 %1003
        %1005 = vrot.lane.b32.xlu0 %v504, 12
        %v1006 = vpop.permute.xlu0 %1005
        %1007 = vrot.lane.b32.xlu0 %v505, 12
        %v1008 = vpop.permute.xlu0 %1007
        %1009 = vrot.lane.b32.xlu0 %v506, 12
        %v1010 = vpop.permute.xlu0 %1009
        %1011 = vrot.lane.b32.xlu0 %v507, 12
        %v1012 = vpop.permute.xlu0 %1011
        %1013 = vrot.lane.b32.xlu0 %v508, 12
        %v1014 = vpop.permute.xlu0 %1013
        %1015 = vrot.lane.b32.xlu0 %v509, 12
        %v1016 = vpop.permute.xlu0 %1015
        %1017 = vrot.lane.b32.xlu0 %v510, 12
        %v1018 = vpop.permute.xlu0 %1017
        %1019 = vrot.lane.b32.xlu0 %v511, 12
        %v1020 = vpop.permute.xlu0 %1019
        %1021 = vrot.lane.b32.xlu0 %v512, 12
        %v1022 = vpop.permute.xlu0 %1021
        %1023 = vrot.lane.b32.xlu0 %v513, 12
        %v1024 = vpop.permute.xlu0 %1023
        %1025 = vrot.lane.b32.xlu0 %v514, 12
        %v1026 = vpop.permute.xlu0 %1025
        %1027 = vrot.lane.b32.xlu0 %v515, 12
        %v1028 = vpop.permute.xlu0 %1027
        %1093 = vrot.lane.b32.xlu0 %v516, 16
        %v1094 = vpop.permute.xlu0 %1093
        %1095 = vrot.lane.b32.xlu0 %v517, 16
        %v1096 = vpop.permute.xlu0 %1095
        %1097 = vrot.lane.b32.xlu0 %v518, 16
        %v1098 = vpop.permute.xlu0 %1097
        %1099 = vrot.lane.b32.xlu0 %v519, 16
        %v1100 = vpop.permute.xlu0 %1099
        %1101 = vrot.lane.b32.xlu0 %v520, 16
        %v1102 = vpop.permute.xlu0 %1101
        %1103 = vrot.lane.b32.xlu0 %v521, 16
        %v1104 = vpop.permute.xlu0 %1103
        %1105 = vrot.lane.b32.xlu0 %v522, 16
        %v1106 = vpop.permute.xlu0 %1105
        %1107 = vrot.lane.b32.xlu0 %v523, 16
        %v1108 = vpop.permute.xlu0 %1107
        %1109 = vrot.lane.b32.xlu0 %v524, 16
        %v1110 = vpop.permute.xlu0 %1109
        %1111 = vrot.lane.b32.xlu0 %v525, 16
        %v1112 = vpop.permute.xlu0 %1111
        %1113 = vrot.lane.b32.xlu0 %v526, 16
        %v1114 = vpop.permute.xlu0 %1113
        %1115 = vrot.lane.b32.xlu0 %v527, 16
        %v1116 = vpop.permute.xlu0 %1115
        %1117 = vrot.lane.b32.xlu0 %v528, 16
        %v1118 = vpop.permute.xlu0 %1117
        %1119 = vrot.lane.b32.xlu0 %v529, 16
        %v1120 = vpop.permute.xlu0 %1119
        %1121 = vrot.lane.b32.xlu0 %v530, 16
        %v1122 = vpop.permute.xlu0 %1121
        %1123 = vrot.lane.b32.xlu0 %v531, 16
        %v1124 = vpop.permute.xlu0 %1123
        %1125 = vrot.lane.b32.xlu0 %v532, 16
        %v1126 = vpop.permute.xlu0 %1125
        %1127 = vrot.lane.b32.xlu0 %v533, 16
        %v1128 = vpop.permute.xlu0 %1127
        %1129 = vrot.lane.b32.xlu0 %v534, 16
        %v1130 = vpop.permute.xlu0 %1129
        %1131 = vrot.lane.b32.xlu0 %v535, 16
        %v1132 = vpop.permute.xlu0 %1131
        %1133 = vrot.lane.b32.xlu0 %v536, 16
        %v1134 = vpop.permute.xlu0 %1133
        %1135 = vrot.lane.b32.xlu0 %v537, 16
        %v1136 = vpop.permute.xlu0 %1135
        %1137 = vrot.lane.b32.xlu0 %v538, 16
        %v1138 = vpop.permute.xlu0 %1137
        %1139 = vrot.lane.b32.xlu0 %v539, 16
        %v1140 = vpop.permute.xlu0 %1139
        %1141 = vrot.lane.b32.xlu0 %v540, 16
        %v1142 = vpop.permute.xlu0 %1141
        %1143 = vrot.lane.b32.xlu0 %v541, 16
        %v1144 = vpop.permute.xlu0 %1143
        %1145 = vrot.lane.b32.xlu0 %v542, 16
        %v1146 = vpop.permute.xlu0 %1145
        %1147 = vrot.lane.b32.xlu0 %v543, 16
        %v1148 = vpop.permute.xlu0 %1147
        %1149 = vrot.lane.b32.xlu0 %v544, 16
        %v1150 = vpop.permute.xlu0 %1149
        %1151 = vrot.lane.b32.xlu0 %v545, 16
        %v1152 = vpop.permute.xlu0 %1151
        %1153 = vrot.lane.b32.xlu0 %v546, 16
        %v1154 = vpop.permute.xlu0 %1153
        %1155 = vrot.lane.b32.xlu0 %v547, 16
        %v1156 = vpop.permute.xlu0 %1155
        %1221 = vrot.lane.b32.xlu0 %v548, 20
        %v1222 = vpop.permute.xlu0 %1221
        %1223 = vrot.lane.b32.xlu0 %v549, 20
        %v1224 = vpop.permute.xlu0 %1223
        %1225 = vrot.lane.b32.xlu0 %v550, 20
        %v1226 = vpop.permute.xlu0 %1225
        %1227 = vrot.lane.b32.xlu0 %v551, 20
        %v1228 = vpop.permute.xlu0 %1227
        %1229 = vrot.lane.b32.xlu0 %v552, 20
        %v1230 = vpop.permute.xlu0 %1229
        %1231 = vrot.lane.b32.xlu0 %v553, 20
        %v1232 = vpop.permute.xlu0 %1231
        %1233 = vrot.lane.b32.xlu0 %v554, 20
        %v1234 = vpop.permute.xlu0 %1233
        %1235 = vrot.lane.b32.xlu0 %v555, 20
        %v1236 = vpop.permute.xlu0 %1235
        %1237 = vrot.lane.b32.xlu0 %v556, 20
        %v1238 = vpop.permute.xlu0 %1237
        %1239 = vrot.lane.b32.xlu0 %v557, 20
        %v1240 = vpop.permute.xlu0 %1239
        %1241 = vrot.lane.b32.xlu0 %v558, 20
        %v1242 = vpop.permute.xlu0 %1241
        %1243 = vrot.lane.b32.xlu0 %v559, 20
        %v1244 = vpop.permute.xlu0 %1243
        %1245 = vrot.lane.b32.xlu0 %v560, 20
        %v1246 = vpop.permute.xlu0 %1245
        %1247 = vrot.lane.b32.xlu0 %v561, 20
        %v1248 = vpop.permute.xlu0 %1247
        %1249 = vrot.lane.b32.xlu0 %v562, 20
        %v1250 = vpop.permute.xlu0 %1249
        %1251 = vrot.lane.b32.xlu0 %v563, 20
        %v1252 = vpop.permute.xlu0 %1251
        %1253 = vrot.lane.b32.xlu0 %v564, 20
        %v1254 = vpop.permute.xlu0 %1253
        %1255 = vrot.lane.b32.xlu0 %v565, 20
        %v1256 = vpop.permute.xlu0 %1255
        %1257 = vrot.lane.b32.xlu0 %v566, 20
        %v1258 = vpop.permute.xlu0 %1257
        %1259 = vrot.lane.b32.xlu0 %v567, 20
        %v1260 = vpop.permute.xlu0 %1259
        %1261 = vrot.lane.b32.xlu0 %v568, 20
        %v1262 = vpop.permute.xlu0 %1261
        %1263 = vrot.lane.b32.xlu0 %v569, 20
        %v1264 = vpop.permute.xlu0 %1263
        %1265 = vrot.lane.b32.xlu0 %v570, 20
        %v1266 = vpop.permute.xlu0 %1265
        %1267 = vrot.lane.b32.xlu0 %v571, 20
        %v1268 = vpop.permute.xlu0 %1267
        %1269 = vrot.lane.b32.xlu0 %v572, 20
        %v1270 = vpop.permute.xlu0 %1269
        %1271 = vrot.lane.b32.xlu0 %v573, 20
        %v1272 = vpop.permute.xlu0 %1271
        %1273 = vrot.lane.b32.xlu0 %v574, 20
        %v1274 = vpop.permute.xlu0 %1273
        %1275 = vrot.lane.b32.xlu0 %v575, 20
        %v1276 = vpop.permute.xlu0 %1275
        %1277 = vrot.lane.b32.xlu0 %v576, 20
        %v1278 = vpop.permute.xlu0 %1277
        %1279 = vrot.lane.b32.xlu0 %v577, 20
        %v1280 = vpop.permute.xlu0 %1279
        %1281 = vrot.lane.b32.xlu0 %v578, 20
        %v1282 = vpop.permute.xlu0 %1281
        %1283 = vrot.lane.b32.xlu0 %v579, 20
        %v1284 = vpop.permute.xlu0 %1283
        %1349 = vrot.lane.b32.xlu0 %v581, 24
        %v1350 = vpop.permute.xlu0 %1349
        %1351 = vrot.lane.b32.xlu0 %v582, 24
        %v1352 = vpop.permute.xlu0 %1351
        %1353 = vrot.lane.b32.xlu0 %v583, 24
        %v1354 = vpop.permute.xlu0 %1353
        %1355 = vrot.lane.b32.xlu0 %v584, 24
        %v1356 = vpop.permute.xlu0 %1355
        %1357 = vrot.lane.b32.xlu0 %v585, 24
        %v1358 = vpop.permute.xlu0 %1357
        %1359 = vrot.lane.b32.xlu0 %v586, 24
        %v1360 = vpop.permute.xlu0 %1359
        %1361 = vrot.lane.b32.xlu0 %v587, 24
        %v1362 = vpop.permute.xlu0 %1361
        %1363 = vrot.lane.b32.xlu0 %v588, 24
        %v1364 = vpop.permute.xlu0 %1363
        %1365 = vrot.lane.b32.xlu0 %v589, 24
        %v1366 = vpop.permute.xlu0 %1365
        %1367 = vrot.lane.b32.xlu0 %v590, 24
        %v1368 = vpop.permute.xlu0 %1367
        %1369 = vrot.lane.b32.xlu0 %v591, 24
        %v1370 = vpop.permute.xlu0 %1369
        %1371 = vrot.lane.b32.xlu0 %v592, 24
        %v1372 = vpop.permute.xlu0 %1371
        %1373 = vrot.lane.b32.xlu0 %v593, 24
        %v1374 = vpop.permute.xlu0 %1373
        %1375 = vrot.lane.b32.xlu0 %v594, 24
        %v1376 = vpop.permute.xlu0 %1375
        %1377 = vrot.lane.b32.xlu0 %v595, 24
        %v1378 = vpop.permute.xlu0 %1377
        %1379 = vrot.lane.b32.xlu0 %v596, 24
        %v1380 = vpop.permute.xlu0 %1379
        %1381 = vrot.lane.b32.xlu0 %v597, 24
        %v1382 = vpop.permute.xlu0 %1381
        %1383 = vrot.lane.b32.xlu0 %v598, 24
        %v1384 = vpop.permute.xlu0 %1383
        %1385 = vrot.lane.b32.xlu0 %v599, 24
        %v1386 = vpop.permute.xlu0 %1385
        %1387 = vrot.lane.b32.xlu0 %v600, 24
        %v1388 = vpop.permute.xlu0 %1387
        %1389 = vrot.lane.b32.xlu0 %v601, 24
        %v1390 = vpop.permute.xlu0 %1389
        %1391 = vrot.lane.b32.xlu0 %v602, 24
        %v1392 = vpop.permute.xlu0 %1391
        %1393 = vrot.lane.b32.xlu0 %v603, 24
        %v1394 = vpop.permute.xlu0 %1393
        %1395 = vrot.lane.b32.xlu0 %v604, 24
        %v1396 = vpop.permute.xlu0 %1395
        %1397 = vrot.lane.b32.xlu0 %v605, 24
        %v1398 = vpop.permute.xlu0 %1397
        %1399 = vrot.lane.b32.xlu0 %v606, 24
        %v1400 = vpop.permute.xlu0 %1399
        %1401 = vrot.lane.b32.xlu0 %v607, 24
        %v1402 = vpop.permute.xlu0 %1401
        %1403 = vrot.lane.b32.xlu0 %v608, 24
        %v1404 = vpop.permute.xlu0 %1403
        %1405 = vrot.lane.b32.xlu0 %v609, 24
        %v1406 = vpop.permute.xlu0 %1405
        %1407 = vrot.lane.b32.xlu0 %v610, 24
        %v1408 = vpop.permute.xlu0 %1407
        %1409 = vrot.lane.b32.xlu0 %v611, 24
        %v1410 = vpop.permute.xlu0 %1409
        %1411 = vrot.lane.b32.xlu0 %v612, 24
        %v1412 = vpop.permute.xlu0 %1411
        %1477 = vrot.lane.b32.xlu0 %v613, 28
        %v1478 = vpop.permute.xlu0 %1477
        %1479 = vrot.lane.b32.xlu0 %v614, 28
        %v1480 = vpop.permute.xlu0 %1479
        %1481 = vrot.lane.b32.xlu0 %v615, 28
        %v1482 = vpop.permute.xlu0 %1481
        %1483 = vrot.lane.b32.xlu0 %v616, 28
        %v1484 = vpop.permute.xlu0 %1483
        %1485 = vrot.lane.b32.xlu0 %v617, 28
        %v1486 = vpop.permute.xlu0 %1485
        %1487 = vrot.lane.b32.xlu0 %v618, 28
        %v1488 = vpop.permute.xlu0 %1487
        %1489 = vrot.lane.b32.xlu0 %v619, 28
        %v1490 = vpop.permute.xlu0 %1489
        %1491 = vrot.lane.b32.xlu0 %v620, 28
        %v1492 = vpop.permute.xlu0 %1491
        %1493 = vrot.lane.b32.xlu0 %v621, 28
        %v1494 = vpop.permute.xlu0 %1493
        %1495 = vrot.lane.b32.xlu0 %v622, 28
        %v1496 = vpop.permute.xlu0 %1495
        %1497 = vrot.lane.b32.xlu0 %v623, 28
        %v1498 = vpop.permute.xlu0 %1497
        %1499 = vrot.lane.b32.xlu0 %v624, 28
        %v1500 = vpop.permute.xlu0 %1499
        %1501 = vrot.lane.b32.xlu0 %v625, 28
        %v1502 = vpop.permute.xlu0 %1501
        %1503 = vrot.lane.b32.xlu0 %v626, 28
        %v1504 = vpop.permute.xlu0 %1503
        %1505 = vrot.lane.b32.xlu0 %v627, 28
        %v1506 = vpop.permute.xlu0 %1505
        %1507 = vrot.lane.b32.xlu0 %v628, 28
        %v1508 = vpop.permute.xlu0 %1507
        %1509 = vrot.lane.b32.xlu0 %v629, 28
        %v1510 = vpop.permute.xlu0 %1509
        %1511 = vrot.lane.b32.xlu0 %v630, 28
        %v1512 = vpop.permute.xlu0 %1511
        %1513 = vrot.lane.b32.xlu0 %v631, 28
        %v1514 = vpop.permute.xlu0 %1513
        %1515 = vrot.lane.b32.xlu0 %v632, 28
        %v1516 = vpop.permute.xlu0 %1515
        %1517 = vrot.lane.b32.xlu0 %v633, 28
        %v1518 = vpop.permute.xlu0 %1517
        %1519 = vrot.lane.b32.xlu0 %v634, 28
        %v1520 = vpop.permute.xlu0 %1519
        %1521 = vrot.lane.b32.xlu0 %v635, 28
        %v1522 = vpop.permute.xlu0 %1521
        %1523 = vrot.lane.b32.xlu0 %v636, 28
        %v1524 = vpop.permute.xlu0 %1523
        %1525 = vrot.lane.b32.xlu0 %v637, 28
        %v1526 = vpop.permute.xlu0 %1525
        %1527 = vrot.lane.b32.xlu0 %v638, 28
        %v1528 = vpop.permute.xlu0 %1527
        %1529 = vrot.lane.b32.xlu0 %v639, 28
        %v1530 = vpop.permute.xlu0 %1529
        %1531 = vrot.lane.b32.xlu0 %v640, 28
        %v1532 = vpop.permute.xlu0 %1531
        %1533 = vrot.lane.b32.xlu0 %v641, 28
        %v1534 = vpop.permute.xlu0 %1533
        %1535 = vrot.lane.b32.xlu0 %v642, 28
        %v1536 = vpop.permute.xlu0 %1535
        %1537 = vrot.lane.b32.xlu0 %v643, 28
        %v1538 = vpop.permute.xlu0 %1537
        %1539 = vrot.lane.b32.xlu0 %v644, 28
        %v1540 = vpop.permute.xlu0 %1539
        %1605 = vrot.lane.b32.xlu0 %v645, 32
        %v1606 = vpop.permute.xlu0 %1605
        %1607 = vrot.lane.b32.xlu0 %v646, 32
        %v1608 = vpop.permute.xlu0 %1607
        %1609 = vrot.lane.b32.xlu0 %v647, 32
        %v1610 = vpop.permute.xlu0 %1609
        %1611 = vrot.lane.b32.xlu0 %v648, 32
        %v1612 = vpop.permute.xlu0 %1611
        %1613 = vrot.lane.b32.xlu0 %v649, 32
        %v1614 = vpop.permute.xlu0 %1613
        %1615 = vrot.lane.b32.xlu0 %v650, 32
        %v1616 = vpop.permute.xlu0 %1615
        %1617 = vrot.lane.b32.xlu0 %v651, 32
        %v1618 = vpop.permute.xlu0 %1617
        %1619 = vrot.lane.b32.xlu0 %v652, 32
        %v1620 = vpop.permute.xlu0 %1619
        %1621 = vrot.lane.b32.xlu0 %v653, 32
        %v1622 = vpop.permute.xlu0 %1621
        %1623 = vrot.lane.b32.xlu0 %v654, 32
        %v1624 = vpop.permute.xlu0 %1623
        %1625 = vrot.lane.b32.xlu0 %v655, 32
        %v1626 = vpop.permute.xlu0 %1625
        %1627 = vrot.lane.b32.xlu0 %v656, 32
        %v1628 = vpop.permute.xlu0 %1627
        %1629 = vrot.lane.b32.xlu0 %v657, 32
        %v1630 = vpop.permute.xlu0 %1629
        %1631 = vrot.lane.b32.xlu0 %v658, 32
        %v1632 = vpop.permute.xlu0 %1631
        %1633 = vrot.lane.b32.xlu0 %v659, 32
        %v1634 = vpop.permute.xlu0 %1633
        %1635 = vrot.lane.b32.xlu0 %v660, 32
        %v1636 = vpop.permute.xlu0 %1635
        %1637 = vrot.lane.b32.xlu0 %v661, 32
        %v1638 = vpop.permute.xlu0 %1637
        %1639 = vrot.lane.b32.xlu0 %v662, 32
        %v1640 = vpop.permute.xlu0 %1639
        %1641 = vrot.lane.b32.xlu0 %v663, 32
        %v1642 = vpop.permute.xlu0 %1641
        %1643 = vrot.lane.b32.xlu0 %v664, 32
        %v1644 = vpop.permute.xlu0 %1643
        %1645 = vrot.lane.b32.xlu0 %v665, 32
        %v1646 = vpop.permute.xlu0 %1645
        %1647 = vrot.lane.b32.xlu0 %v666, 32
        %v1648 = vpop.permute.xlu0 %1647
        %1649 = vrot.lane.b32.xlu0 %v667, 32
        %v1650 = vpop.permute.xlu0 %1649
        %1651 = vrot.lane.b32.xlu0 %v668, 32
        %v1652 = vpop.permute.xlu0 %1651
        %1653 = vrot.lane.b32.xlu0 %v669, 32
        %v1654 = vpop.permute.xlu0 %1653
        %1655 = vrot.lane.b32.xlu0 %v670, 32
        %v1656 = vpop.permute.xlu0 %1655
        %1657 = vrot.lane.b32.xlu0 %v671, 32
        %v1658 = vpop.permute.xlu0 %1657
        %1659 = vrot.lane.b32.xlu0 %v672, 32
        %v1660 = vpop.permute.xlu0 %1659
        %1661 = vrot.lane.b32.xlu0 %v673, 32
        %v1662 = vpop.permute.xlu0 %1661
        %1663 = vrot.lane.b32.xlu0 %v674, 32
        %v1664 = vpop.permute.xlu0 %1663
        %1665 = vrot.lane.b32.xlu0 %v675, 32
        %v1666 = vpop.permute.xlu0 %1665
        %1667 = vrot.lane.b32.xlu0 %v676, 32
        %v1668 = vpop.permute.xlu0 %1667
        %v1701 = vsel %vm266, %v388, %v710
        %v1702 = vsel %vm266, %v389, %v712
        %v1703 = vsel %vm266, %v390, %v714
        %v1704 = vsel %vm266, %v391, %v716
        %v1705 = vsel %vm266, %v392, %v718
        %v1706 = vsel %vm266, %v393, %v720
        %v1707 = vsel %vm266, %v394, %v722
        %v1708 = vsel %vm266, %v395, %v724
        %v1709 = vsel %vm266, %v396, %v726
        %v1710 = vsel %vm266, %v397, %v728
        %v1711 = vsel %vm266, %v398, %v730
        %v1712 = vsel %vm266, %v399, %v732
        %v1713 = vsel %vm266, %v400, %v734
        %v1714 = vsel %vm266, %v401, %v736
        %v1715 = vsel %vm266, %v402, %v738
        %v1716 = vsel %vm266, %v403, %v740
        %v1717 = vsel %vm266, %v404, %v742
        %v1718 = vsel %vm266, %v405, %v744
        %v1719 = vsel %vm266, %v406, %v746
        %v1720 = vsel %vm266, %v407, %v748
        %v1721 = vsel %vm266, %v408, %v750
        %v1722 = vsel %vm266, %v409, %v752
        %v1723 = vsel %vm266, %v410, %v754
        %v1724 = vsel %vm266, %v411, %v756
        %v1725 = vsel %vm266, %v412, %v758
        %v1726 = vsel %vm266, %v413, %v760
        %v1727 = vsel %vm266, %v414, %v762
        %v1728 = vsel %vm266, %v415, %v764
        %v1729 = vsel %vm266, %v416, %v766
        %v1730 = vsel %vm266, %v417, %v768
        %v1731 = vsel %vm266, %v418, %v770
        %v1732 = vsel %vm266, %v419, %v772
        %vm1733 = vcmask 64512
        %v1734 = vsel %vm1733, %v1701, %v838
        %v1735 = vsel %vm1733, %v1702, %v840
        %v1736 = vsel %vm1733, %v1703, %v842
        %v1737 = vsel %vm1733, %v1704, %v844
        %v1738 = vsel %vm1733, %v1705, %v846
        %v1739 = vsel %vm1733, %v1706, %v848
        %v1740 = vsel %vm1733, %v1707, %v850
        %v1741 = vsel %vm1733, %v1708, %v852
        %v1742 = vsel %vm1733, %v1709, %v854
        %v1743 = vsel %vm1733, %v1710, %v856
        %v1744 = vsel %vm1733, %v1711, %v858
        %v1745 = vsel %vm1733, %v1712, %v860
        %v1746 = vsel %vm1733, %v1713, %v862
        %v1747 = vsel %vm1733, %v1714, %v864
        %v1748 = vsel %vm1733, %v1715, %v866
        %v1749 = vsel %vm1733, %v1716, %v868
        %v1750 = vsel %vm1733, %v1717, %v870
        %v1751 = vsel %vm1733, %v1718, %v872
        %v1752 = vsel %vm1733, %v1719, %v874
        %v1753 = vsel %vm1733, %v1720, %v876
        %v1754 = vsel %vm1733, %v1721, %v878
        %v1755 = vsel %vm1733, %v1722, %v880
        %v1756 = vsel %vm1733, %v1723, %v882
        %v1757 = vsel %vm1733, %v1724, %v884
        %v1758 = vsel %vm1733, %v1725, %v886
        %v1759 = vsel %vm1733, %v1726, %v888
        %v1760 = vsel %vm1733, %v1727, %v890
        %v1761 = vsel %vm1733, %v1728, %v892
        %v1762 = vsel %vm1733, %v1729, %v894
        %v1763 = vsel %vm1733, %v1730, %v896
        %v1764 = vsel %vm1733, %v1731, %v898
        %v1765 = vsel %vm1733, %v1732, %v900
        %vm1766 = vcmask 97280
        %v1767 = vsel %vm1766, %v1734, %v966
        %v1768 = vsel %vm1766, %v1735, %v968
        %v1769 = vsel %vm1766, %v1736, %v970
        %v1770 = vsel %vm1766, %v1737, %v972
        %v1771 = vsel %vm1766, %v1738, %v974
        %v1772 = vsel %vm1766, %v1739, %v976
        %v1773 = vsel %vm1766, %v1740, %v978
        %v1774 = vsel %vm1766, %v1741, %v980
        %v1775 = vsel %vm1766, %v1742, %v982
        %v1776 = vsel %vm1766, %v1743, %v984
        %v1777 = vsel %vm1766, %v1744, %v986
        %v1778 = vsel %vm1766, %v1745, %v988
        %v1779 = vsel %vm1766, %v1746, %v990
        %v1780 = vsel %vm1766, %v1747, %v992
        %v1781 = vsel %vm1766, %v1748, %v994
        %v1782 = vsel %vm1766, %v1749, %v996
        %v1783 = vsel %vm1766, %v1750, %v998
        %v1784 = vsel %vm1766, %v1751, %v1000
        %v1785 = vsel %vm1766, %v1752, %v1002
        %v1786 = vsel %vm1766, %v1753, %v1004
        %v1787 = vsel %vm1766, %v1754, %v1006
        %v1788 = vsel %vm1766, %v1755, %v1008
        %v1789 = vsel %vm1766, %v1756, %v1010
        %v1790 = vsel %vm1766, %v1757, %v1012
        %v1791 = vsel %vm1766, %v1758, %v1014
        %v1792 = vsel %vm1766, %v1759, %v1016
        %v1793 = vsel %vm1766, %v1760, %v1018
        %v1794 = vsel %vm1766, %v1761, %v1020
        %v1795 = vsel %vm1766, %v1762, %v1022
        %v1796 = vsel %vm1766, %v1763, %v1024
        %v1797 = vsel %vm1766, %v1764, %v1026
        %v1798 = vsel %vm1766, %v1765, %v1028
        %vm1799 = vcmask 130048
        %v1800 = vsel %vm1799, %v1767, %v1094
        %v1801 = vsel %vm1799, %v1768, %v1096
        %v1802 = vsel %vm1799, %v1769, %v1098
        %v1803 = vsel %vm1799, %v1770, %v1100
        %v1804 = vsel %vm1799, %v1771, %v1102
        %v1805 = vsel %vm1799, %v1772, %v1104
        %v1806 = vsel %vm1799, %v1773, %v1106
        %v1807 = vsel %vm1799, %v1774, %v1108
        %v1808 = vsel %vm1799, %v1775, %v1110
        %v1809 = vsel %vm1799, %v1776, %v1112
        %v1810 = vsel %vm1799, %v1777, %v1114
        %v1811 = vsel %vm1799, %v1778, %v1116
        %v1812 = vsel %vm1799, %v1779, %v1118
        %v1813 = vsel %vm1799, %v1780, %v1120
        %v1814 = vsel %vm1799, %v1781, %v1122
        %v1815 = vsel %vm1799, %v1782, %v1124
        %v1816 = vsel %vm1799, %v1783, %v1126
        %v1817 = vsel %vm1799, %v1784, %v1128
        %v1818 = vsel %vm1799, %v1785, %v1130
        %v1819 = vsel %vm1799, %v1786, %v1132
        %v1820 = vsel %vm1799, %v1787, %v1134
        %v1821 = vsel %vm1799, %v1788, %v1136
        %v1822 = vsel %vm1799, %v1789, %v1138
        %v1823 = vsel %vm1799, %v1790, %v1140
        %v1824 = vsel %vm1799, %v1791, %v1142
        %v1825 = vsel %vm1799, %v1792, %v1144
        %v1826 = vsel %vm1799, %v1793, %v1146
        %v1827 = vsel %vm1799, %v1794, %v1148
        %v1828 = vsel %vm1799, %v1795, %v1150
        %v1829 = vsel %vm1799, %v1796, %v1152
        %v1830 = vsel %vm1799, %v1797, %v1154
        %v1831 = vsel %vm1799, %v1798, %v1156
        %vm1832 = vcmask 162816
        %v1833 = vsel %vm1832, %v1800, %v1222
        %v1834 = vsel %vm1832, %v1801, %v1224
        %v1835 = vsel %vm1832, %v1802, %v1226
        %v1836 = vsel %vm1832, %v1803, %v1228
        %v1837 = vsel %vm1832, %v1804, %v1230
        %v1838 = vsel %vm1832, %v1805, %v1232
        %v1839 = vsel %vm1832, %v1806, %v1234
        %v1840 = vsel %vm1832, %v1807, %v1236
        %v1841 = vsel %vm1832, %v1808, %v1238
        %v1842 = vsel %vm1832, %v1809, %v1240
        %v1843 = vsel %vm1832, %v1810, %v1242
        %v1844 = vsel %vm1832, %v1811, %v1244
        %v1845 = vsel %vm1832, %v1812, %v1246
        %v1846 = vsel %vm1832, %v1813, %v1248
        %v1847 = vsel %vm1832, %v1814, %v1250
        %v1848 = vsel %vm1832, %v1815, %v1252
        %v1849 = vsel %vm1832, %v1816, %v1254
        %v1850 = vsel %vm1832, %v1817, %v1256
        %v1851 = vsel %vm1832, %v1818, %v1258
        %v1852 = vsel %vm1832, %v1819, %v1260
        %v1853 = vsel %vm1832, %v1820, %v1262
        %v1854 = vsel %vm1832, %v1821, %v1264
        %v1855 = vsel %vm1832, %v1822, %v1266
        %v1856 = vsel %vm1832, %v1823, %v1268
        %v1857 = vsel %vm1832, %v1824, %v1270
        %v1858 = vsel %vm1832, %v1825, %v1272
        %v1859 = vsel %vm1832, %v1826, %v1274
        %v1860 = vsel %vm1832, %v1827, %v1276
        %v1861 = vsel %vm1832, %v1828, %v1278
        %v1862 = vsel %vm1832, %v1829, %v1280
        %v1863 = vsel %vm1832, %v1830, %v1282
        %v1864 = vsel %vm1832, %v1831, %v1284
        %vm1865 = vcmask 195584
        %v1866 = vsel %vm1865, %v1833, %v1350
        %v1867 = vsel %vm1865, %v1834, %v1352
        %v1868 = vsel %vm1865, %v1835, %v1354
        %v1869 = vsel %vm1865, %v1836, %v1356
        %v1870 = vsel %vm1865, %v1837, %v1358
        %v1871 = vsel %vm1865, %v1838, %v1360
        %v1872 = vsel %vm1865, %v1839, %v1362
        %v1873 = vsel %vm1865, %v1840, %v1364
        %v1874 = vsel %vm1865, %v1841, %v1366
        %v1875 = vsel %vm1865, %v1842, %v1368
        %v1876 = vsel %vm1865, %v1843, %v1370
        %v1877 = vsel %vm1865, %v1844, %v1372
        %v1878 = vsel %vm1865, %v1845, %v1374
        %v1879 = vsel %vm1865, %v1846, %v1376
        %v1880 = vsel %vm1865, %v1847, %v1378
        %v1881 = vsel %vm1865, %v1848, %v1380
        %v1882 = vsel %vm1865, %v1849, %v1382
        %v1883 = vsel %vm1865, %v1850, %v1384
        %v1884 = vsel %vm1865, %v1851, %v1386
        %v1885 = vsel %vm1865, %v1852, %v1388
        %v1886 = vsel %vm1865, %v1853, %v1390
        %v1887 = vsel %vm1865, %v1854, %v1392
        %v1888 = vsel %vm1865, %v1855, %v1394
        %v1889 = vsel %vm1865, %v1856, %v1396
        %v1890 = vsel %vm1865, %v1857, %v1398
        %v1891 = vsel %vm1865, %v1858, %v1400
        %v1892 = vsel %vm1865, %v1859, %v1402
        %v1893 = vsel %vm1865, %v1860, %v1404
        %v1894 = vsel %vm1865, %v1861, %v1406
        %v1895 = vsel %vm1865, %v1862, %v1408
        %v1896 = vsel %vm1865, %v1863, %v1410
        %v1897 = vsel %vm1865, %v1864, %v1412
        %vm1898 = vcmask 228352
        %v1899 = vsel %vm1898, %v1866, %v1478
        %v1900 = vsel %vm1898, %v1867, %v1480
        %v1901 = vsel %vm1898, %v1868, %v1482
        %v1902 = vsel %vm1898, %v1869, %v1484
        %v1903 = vsel %vm1898, %v1870, %v1486
        %v1904 = vsel %vm1898, %v1871, %v1488
        %v1905 = vsel %vm1898, %v1872, %v1490
        %v1906 = vsel %vm1898, %v1873, %v1492
        %v1907 = vsel %vm1898, %v1874, %v1494
        %v1908 = vsel %vm1898, %v1875, %v1496
        %v1909 = vsel %vm1898, %v1876, %v1498
        %v1910 = vsel %vm1898, %v1877, %v1500
        %v1911 = vsel %vm1898, %v1878, %v1502
        %v1912 = vsel %vm1898, %v1879, %v1504
        %v1913 = vsel %vm1898, %v1880, %v1506
        %v1914 = vsel %vm1898, %v1881, %v1508
        %v1915 = vsel %vm1898, %v1882, %v1510
        %v1916 = vsel %vm1898, %v1883, %v1512
        %v1917 = vsel %vm1898, %v1884, %v1514
        %v1918 = vsel %vm1898, %v1885, %v1516
        %v1919 = vsel %vm1898, %v1886, %v1518
        %v1920 = vsel %vm1898, %v1887, %v1520
        %v1921 = vsel %vm1898, %v1888, %v1522
        %v1922 = vsel %vm1898, %v1889, %v1524
        %v1923 = vsel %vm1898, %v1890, %v1526
        %v1924 = vsel %vm1898, %v1891, %v1528
        %v1925 = vsel %vm1898, %v1892, %v1530
        %v1926 = vsel %vm1898, %v1893, %v1532
        %v1927 = vsel %vm1898, %v1894, %v1534
        %v1928 = vsel %vm1898, %v1895, %v1536
        %v1929 = vsel %vm1898, %v1896, %v1538
        %v1930 = vsel %vm1898, %v1897, %v1540
        %vm1931 = vcmask 261120
        %v1932 = vsel %vm1931, %v1899, %v1606
        %v1933 = vsel %vm1931, %v1900, %v1608
        %v1934 = vsel %vm1931, %v1901, %v1610
        %v1935 = vsel %vm1931, %v1902, %v1612
        %v1936 = vsel %vm1931, %v1903, %v1614
        %v1937 = vsel %vm1931, %v1904, %v1616
        %v1938 = vsel %vm1931, %v1905, %v1618
        %v1939 = vsel %vm1931, %v1906, %v1620
        %v1940 = vsel %vm1931, %v1907, %v1622
        %v1941 = vsel %vm1931, %v1908, %v1624
        %v1942 = vsel %vm1931, %v1909, %v1626
        %v1943 = vsel %vm1931, %v1910, %v1628
        %v1944 = vsel %vm1931, %v1911, %v1630
        %v1945 = vsel %vm1931, %v1912, %v1632
        %v1946 = vsel %vm1931, %v1913, %v1634
        %v1947 = vsel %vm1931, %v1914, %v1636
        %v1948 = vsel %vm1931, %v1915, %v1638
        %v1949 = vsel %vm1931, %v1916, %v1640
        %v1950 = vsel %vm1931, %v1917, %v1642
        %v1951 = vsel %vm1931, %v1918, %v1644
        %v1952 = vsel %vm1931, %v1919, %v1646
        %v1953 = vsel %vm1931, %v1920, %v1648
        %v1954 = vsel %vm1931, %v1921, %v1650
        %v1955 = vsel %vm1931, %v1922, %v1652
        %v1956 = vsel %vm1931, %v1923, %v1654
        %v1957 = vsel %vm1931, %v1924, %v1656
        %v1958 = vsel %vm1931, %v1925, %v1658
        %v1959 = vsel %vm1931, %v1926, %v1660
        %v1960 = vsel %vm1931, %v1927, %v1662
        %v1961 = vsel %vm1931, %v1928, %v1664
        %v1962 = vsel %vm1931, %v1929, %v1666
        %v1963 = vsel %vm1931, %v1930, %v1668
        %v1964 = vld [vmem:[%s1] sm:$0xff]
        %v1965 = vld [vmem:[%s1 + $0x8] sm:$0xff]
        %v1966 = vld [vmem:[%s1 + $0x10] sm:$0xff]
        %v1967 = vld [vmem:[%s1 + $0x18] sm:$0xff]
        %v1968 = vld [vmem:[%s1 + $0x20] sm:$0xf]
        %v1969 = vld [vmem:[%s2] sm:$0x1]
        %v1971 = vperm.slane %v1969, 0
        %vm1973 = vcmask 293888
        %v1975 = vsel %vm1973, %v1932, 0
        %v1978 = vsel %vm1973, %v1933, 0
        %v1981 = vsel %vm1973, %v1934, 0
        %v1984 = vsel %vm1973, %v1935, 0
        %v1987 = vsel %vm1973, %v1936, 0
        %v1990 = vsel %vm1973, %v1937, 0
        %v1993 = vsel %vm1973, %v1938, 0
        %v1996 = vsel %vm1973, %v1939, 0
        %v1999 = vsel %vm1973, %v1940, 0
        %v2002 = vsel %vm1973, %v1941, 0
        %v2005 = vsel %vm1973, %v1942, 0
        %v2008 = vsel %vm1973, %v1943, 0
        %v2011 = vsel %vm1973, %v1944, 0
        %v2014 = vsel %vm1973, %v1945, 0
        %v2017 = vsel %vm1973, %v1946, 0
        %v2020 = vsel %vm1973, %v1947, 0
        %v2023 = vsel %vm1973, %v1948, 0
        %v2026 = vsel %vm1973, %v1949, 0
        %v2029 = vsel %vm1973, %v1950, 0
        %v2032 = vsel %vm1973, %v1951, 0
        %v2035 = vsel %vm1973, %v1952, 0
        %v2038 = vsel %vm1973, %v1953, 0
        %v2041 = vsel %vm1973, %v1954, 0
        %v2044 = vsel %vm1973, %v1955, 0
        %v2047 = vsel %vm1973, %v1956, 0
        %v2050 = vsel %vm1973, %v1957, 0
        %v2053 = vsel %vm1973, %v1958, 0
        %v2056 = vsel %vm1973, %v1959, 0
        %v2059 = vsel %vm1973, %v1960, 0
        %v2062 = vsel %vm1973, %v1961, 0
        %v2065 = vsel %vm1973, %v1962, 0
        %v2068 = vsel %vm1973, %v1963, 0
        %vm2070 = vcmask 1043456
        %v2072 = vsel %vm2070, %v1968, 0
        %2074 = vmatpush.msra.mxu0 0.0
        %2075 = vmatpush.msra.mxu0 0.0
        %2076 = vmatpush.msra.mxu0 0.0
        %2077 = vmatpush.msra.mxu0 0.0
        %2078 = vmatpush.msra.mxu0 0.0
        %2079 = vmatpush.msra.mxu0 0.0
        %2080 = vmatpush.msra.mxu0 0.0
        %2081 = vmatpush.msra.mxu0 0.0
        %2082 = vmatpush.msra.mxu0 0.0
        %2083 = vmatpush.msra.mxu0 0.0
        %2084 = vmatpush.msra.mxu0 0.0
        %2085 = vmatpush.msra.mxu0 %v2072
        %2086 = vmatpush.msra.mxu0 %v1967
        %2087 = vmatpush.msra.mxu0 %v1966
        %2088 = vmatpush.msra.mxu0 %v1965
        %2089 = vmatpush.msra.mxu0 %v1964
        %2090 = vmatmul.f32.gmra.mxu0 %v1975
        %v2091 = vpop.f32.mrf.mxu0
        %v2092 = vadd.f32 %v1971, %v2091
        %2093 = vmatmul.f32.gmra.mxu0 %v1978
        %v2094 = vpop.f32.mrf.mxu0
        %v2095 = vadd.f32 %v1971, %v2094
        %2096 = vmatmul.f32.gmra.mxu0 %v1981
        %v2097 = vpop.f32.mrf.mxu0
        %v2098 = vadd.f32 %v1971, %v2097
        %2099 = vmatmul.f32.gmra.mxu0 %v1984
        %v2100 = vpop.f32.mrf.mxu0
        %v2101 = vadd.f32 %v1971, %v2100
        %2102 = vmatmul.f32.gmra.mxu0 %v1987
        %v2103 = vpop.f32.mrf.mxu0
        %v2104 = vadd.f32 %v1971, %v2103
        %2105 = vmatmul.f32.gmra.mxu0 %v1990
        %v2106 = vpop.f32.mrf.mxu0
        %v2107 = vadd.f32 %v1971, %v2106
        %2108 = vmatmul.f32.gmra.mxu0 %v1993
        %v2109 = vpop.f32.mrf.mxu0
        %v2110 = vadd.f32 %v1971, %v2109
        %2111 = vmatmul.f32.gmra.mxu0 %v1996
        %v2112 = vpop.f32.mrf.mxu0
        %v2113 = vadd.f32 %v1971, %v2112
        %2114 = vmatmul.f32.gmra.mxu0 %v1999
        %v2115 = vpop.f32.mrf.mxu0
        %v2116 = vadd.f32 %v1971, %v2115
        %2117 = vmatmul.f32.gmra.mxu0 %v2002
        %v2118 = vpop.f32.mrf.mxu0
        %v2119 = vadd.f32 %v1971, %v2118
        %2120 = vmatmul.f32.gmra.mxu0 %v2005
        %v2121 = vpop.f32.mrf.mxu0
        %v2122 = vadd.f32 %v1971, %v2121
        %2123 = vmatmul.f32.gmra.mxu0 %v2008
        %v2124 = vpop.f32.mrf.mxu0
        %v2125 = vadd.f32 %v1971, %v2124
        %2126 = vmatmul.f32.gmra.mxu0 %v2011
        %v2127 = vpop.f32.mrf.mxu0
        %v2128 = vadd.f32 %v1971, %v2127
        %2129 = vmatmul.f32.gmra.mxu0 %v2014
        %v2130 = vpop.f32.mrf.mxu0
        %v2131 = vadd.f32 %v1971, %v2130
        %2132 = vmatmul.f32.gmra.mxu0 %v2017
        %v2133 = vpop.f32.mrf.mxu0
        %v2134 = vadd.f32 %v1971, %v2133
        %2135 = vmatmul.f32.gmra.mxu0 %v2020
        %v2136 = vpop.f32.mrf.mxu0
        %v2137 = vadd.f32 %v1971, %v2136
        %2138 = vmatmul.f32.gmra.mxu0 %v2023
        %v2139 = vpop.f32.mrf.mxu0
        %v2140 = vadd.f32 %v1971, %v2139
        %2141 = vmatmul.f32.gmra.mxu0 %v2026
        %v2142 = vpop.f32.mrf.mxu0
        %v2143 = vadd.f32 %v1971, %v2142
        %2144 = vmatmul.f32.gmra.mxu0 %v2029
        %v2145 = vpop.f32.mrf.mxu0
        %v2146 = vadd.f32 %v1971, %v2145
        %2147 = vmatmul.f32.gmra.mxu0 %v2032
        %v2148 = vpop.f32.mrf.mxu0
        %v2149 = vadd.f32 %v1971, %v2148
        %2150 = vmatmul.f32.gmra.mxu0 %v2035
        %v2151 = vpop.f32.mrf.mxu0
        %v2152 = vadd.f32 %v1971, %v2151
        %2153 = vmatmul.f32.gmra.mxu0 %v2038
        %v2154 = vpop.f32.mrf.mxu0
        %v2155 = vadd.f32 %v1971, %v2154
        %2156 = vmatmul.f32.gmra.mxu0 %v2041
        %v2157 = vpop.f32.mrf.mxu0
        %v2158 = vadd.f32 %v1971, %v2157
        %2159 = vmatmul.f32.gmra.mxu0 %v2044
        %v2160 = vpop.f32.mrf.mxu0
        %v2161 = vadd.f32 %v1971, %v2160
        %2162 = vmatmul.f32.gmra.mxu0 %v2047
        %v2163 = vpop.f32.mrf.mxu0
        %v2164 = vadd.f32 %v1971, %v2163
        %2165 = vmatmul.f32.gmra.mxu0 %v2050
        %v2166 = vpop.f32.mrf.mxu0
        %v2167 = vadd.f32 %v1971, %v2166
        %2168 = vmatmul.f32.gmra.mxu0 %v2053
        %v2169 = vpop.f32.mrf.mxu0
        %v2170 = vadd.f32 %v1971, %v2169
        %2171 = vmatmul.f32.gmra.mxu0 %v2056
        %v2172 = vpop.f32.mrf.mxu0
        %v2173 = vadd.f32 %v1971, %v2172
        %2174 = vmatmul.f32.gmra.mxu0 %v2059
        %v2175 = vpop.f32.mrf.mxu0
        %v2176 = vadd.f32 %v1971, %v2175
        %2177 = vmatmul.f32.gmra.mxu0 %v2062
        %v2178 = vpop.f32.mrf.mxu0
        %v2179 = vadd.f32 %v1971, %v2178
        %2180 = vmatmul.f32.gmra.mxu0 %v2065
        %v2181 = vpop.f32.mrf.mxu0
        %v2182 = vadd.f32 %v1971, %v2181
        %2183 = vmatmul.f32.gmra.mxu0 %v2068
        %v2184 = vpop.f32.mrf.mxu0
        %v2185 = vadd.f32 %v1971, %v2184
        %2186 = vdwg.mxu0
        %vm2187 = vcmp.ge.f32.partialorder %v2092, 0.0
        %vm2188 = vcmp.ge.f32.partialorder %v2095, 0.0
        %vm2189 = vcmp.ge.f32.partialorder %v2098, 0.0
        %vm2190 = vcmp.ge.f32.partialorder %v2101, 0.0
        %vm2191 = vcmp.ge.f32.partialorder %v2104, 0.0
        %vm2192 = vcmp.ge.f32.partialorder %v2107, 0.0
        %vm2193 = vcmp.ge.f32.partialorder %v2110, 0.0
        %vm2194 = vcmp.ge.f32.partialorder %v2113, 0.0
        %vm2195 = vcmp.ge.f32.partialorder %v2116, 0.0
        %vm2196 = vcmp.ge.f32.partialorder %v2119, 0.0
        %vm2197 = vcmp.ge.f32.partialorder %v2122, 0.0
        %vm2198 = vcmp.ge.f32.partialorder %v2125, 0.0
        %vm2199 = vcmp.ge.f32.partialorder %v2128, 0.0
        %vm2200 = vcmp.ge.f32.partialorder %v2131, 0.0
        %vm2201 = vcmp.ge.f32.partialorder %v2134, 0.0
        %vm2202 = vcmp.ge.f32.partialorder %v2137, 0.0
        %vm2203 = vcmp.ge.f32.partialorder %v2140, 0.0
        %vm2204 = vcmp.ge.f32.partialorder %v2143, 0.0
        %vm2205 = vcmp.ge.f32.partialorder %v2146, 0.0
        %vm2206 = vcmp.ge.f32.partialorder %v2149, 0.0
        %vm2207 = vcmp.ge.f32.partialorder %v2152, 0.0
        %vm2208 = vcmp.ge.f32.partialorder %v2155, 0.0
        %vm2209 = vcmp.ge.f32.partialorder %v2158, 0.0
        %vm2210 = vcmp.ge.f32.partialorder %v2161, 0.0
        %vm2211 = vcmp.ge.f32.partialorder %v2164, 0.0
        %vm2212 = vcmp.ge.f32.partialorder %v2167, 0.0
        %vm2213 = vcmp.ge.f32.partialorder %v2170, 0.0
        %vm2214 = vcmp.ge.f32.partialorder %v2173, 0.0
        %vm2215 = vcmp.ge.f32.partialorder %v2176, 0.0
        %vm2216 = vcmp.ge.f32.partialorder %v2179, 0.0
        %vm2217 = vcmp.ge.f32.partialorder %v2182, 0.0
        %vm2218 = vcmp.ge.f32.partialorder %v2185, 0.0
        %v2219 = vstv %s387
        %v2220 = vmul.f32 %v2219, %v2092
        %v2221 = vmul.f32 %v2219, %v2095
        %v2222 = vmul.f32 %v2219, %v2098
        %v2223 = vmul.f32 %v2219, %v2101
        %v2224 = vmul.f32 %v2219, %v2104
        %v2225 = vmul.f32 %v2219, %v2107
        %v2226 = vmul.f32 %v2219, %v2110
        %v2227 = vmul.f32 %v2219, %v2113
        %v2228 = vmul.f32 %v2219, %v2116
        %v2229 = vmul.f32 %v2219, %v2119
        %v2230 = vmul.f32 %v2219, %v2122
        %v2231 = vmul.f32 %v2219, %v2125
        %v2232 = vmul.f32 %v2219, %v2128
        %v2233 = vmul.f32 %v2219, %v2131
        %v2234 = vmul.f32 %v2219, %v2134
        %v2235 = vmul.f32 %v2219, %v2137
        %v2236 = vmul.f32 %v2219, %v2140
        %v2237 = vmul.f32 %v2219, %v2143
        %v2238 = vmul.f32 %v2219, %v2146
        %v2239 = vmul.f32 %v2219, %v2149
        %v2240 = vmul.f32 %v2219, %v2152
        %v2241 = vmul.f32 %v2219, %v2155
        %v2242 = vmul.f32 %v2219, %v2158
        %v2243 = vmul.f32 %v2219, %v2161
        %v2244 = vmul.f32 %v2219, %v2164
        %v2245 = vmul.f32 %v2219, %v2167
        %v2246 = vmul.f32 %v2219, %v2170
        %v2247 = vmul.f32 %v2219, %v2173
        %v2248 = vmul.f32 %v2219, %v2176
        %v2249 = vmul.f32 %v2219, %v2179
        %v2250 = vmul.f32 %v2219, %v2182
        %v2251 = vmul.f32 %v2219, %v2185
        %v2252 = vsel %vm2187, %v2092, %v2220
        %v2253 = vsel %vm2188, %v2095, %v2221
        %v2254 = vsel %vm2189, %v2098, %v2222
        %v2255 = vsel %vm2190, %v2101, %v2223
        %v2256 = vsel %vm2191, %v2104, %v2224
        %v2257 = vsel %vm2192, %v2107, %v2225
        %v2258 = vsel %vm2193, %v2110, %v2226
        %v2259 = vsel %vm2194, %v2113, %v2227
        %v2260 = vsel %vm2195, %v2116, %v2228
        %v2261 = vsel %vm2196, %v2119, %v2229
        %v2262 = vsel %vm2197, %v2122, %v2230
        %v2263 = vsel %vm2198, %v2125, %v2231
        %v2264 = vsel %vm2199, %v2128, %v2232
        %v2265 = vsel %vm2200, %v2131, %v2233
        %v2266 = vsel %vm2201, %v2134, %v2234
        %v2267 = vsel %vm2202, %v2137, %v2235
        %v2268 = vsel %vm2203, %v2140, %v2236
        %v2269 = vsel %vm2204, %v2143, %v2237
        %v2270 = vsel %vm2205, %v2146, %v2238
        %v2271 = vsel %vm2206, %v2149, %v2239
        %v2272 = vsel %vm2207, %v2152, %v2240
        %v2273 = vsel %vm2208, %v2155, %v2241
        %v2274 = vsel %vm2209, %v2158, %v2242
        %v2275 = vsel %vm2210, %v2161, %v2243
        %v2276 = vsel %vm2211, %v2164, %v2244
        %v2277 = vsel %vm2212, %v2167, %v2245
        %v2278 = vsel %vm2213, %v2170, %v2246
        %v2279 = vsel %vm2214, %v2173, %v2247
        %v2280 = vsel %vm2215, %v2176, %v2248
        %v2281 = vsel %vm2216, %v2179, %v2249
        %v2282 = vsel %vm2217, %v2182, %v2250
        %v2283 = vsel %vm2218, %v2185, %v2251
        %2284 = vst.msk [vmem:[#allocation3] sm:$0xff] %vm1733, 0.0
        %2285 = vst.msk [vmem:[#allocation3 + $0x8] sm:$0xff] %vm1733, 0.0
        %vm2286 = vcmask 58368
        %2287 = vst.msk [vmem:[#allocation3 + $0x10] sm:$0x3] %vm2286, 0.0
        %2288 = vst.msk [vmem:[#allocation3 + $0x18] sm:$0xff] %vm1733, 0.0
        %2289 = vst.msk [vmem:[#allocation3 + $0x20] sm:$0xff] %vm1733, 0.0
        %2290 = vst.msk [vmem:[#allocation3 + $0x28] sm:$0x3] %vm2286, 0.0
        %2291 = vst.msk [vmem:[#allocation3 + $0x30] sm:$0xff] %vm1733, 0.0
        %2292 = vst.msk [vmem:[#allocation3 + $0x38] sm:$0xff] %vm1733, 0.0
        %2293 = vst.msk [vmem:[#allocation3 + $0x40] sm:$0x3] %vm2286, 0.0
        %2294 = vst.msk [vmem:[#allocation3 + $0x48] sm:$0xff] %vm1733, 0.0
        %2295 = vst.msk [vmem:[#allocation3 + $0x50] sm:$0xff] %vm1733, 0.0
        %2296 = vst.msk [vmem:[#allocation3 + $0x58] sm:$0x3] %vm2286, 0.0
        %2297 = vst.msk [vmem:[#allocation3 + $0x60] sm:$0xff] %vm1733, 0.0
        %2298 = vst.msk [vmem:[#allocation3 + $0x68] sm:$0xff] %vm1733, 0.0
        %2299 = vst.msk [vmem:[#allocation3 + $0x70] sm:$0x3] %vm2286, 0.0
        %2300 = vst.msk [vmem:[#allocation3 + $0x78] sm:$0xff] %vm1733, 0.0
        %2301 = vst.msk [vmem:[#allocation3 + $0x80] sm:$0xff] %vm1733, 0.0
        %2302 = vst.msk [vmem:[#allocation3 + $0x88] sm:$0x3] %vm2286, 0.0
        %2303 = vst.msk [vmem:[#allocation3 + $0x90] sm:$0xff] %vm1733, 0.0
        %2304 = vst.msk [vmem:[#allocation3 + $0x98] sm:$0xff] %vm1733, 0.0
        %2305 = vst.msk [vmem:[#allocation3 + $0xa0] sm:$0x3] %vm2286, 0.0
        %2306 = vst.msk [vmem:[#allocation3 + $0xa8] sm:$0xff] %vm1733, 0.0
        %2307 = vst.msk [vmem:[#allocation3 + $0xb0] sm:$0xff] %vm1733, 0.0
        %2308 = vst.msk [vmem:[#allocation3 + $0xb8] sm:$0x3] %vm2286, 0.0
        %2309 = vst.msk [vmem:[#allocation3 + $0xc0] sm:$0xff] %vm1733, 0.0
        %2310 = vst.msk [vmem:[#allocation3 + $0xc8] sm:$0xff] %vm1733, 0.0
        %2311 = vst.msk [vmem:[#allocation3 + $0xd0] sm:$0x3] %vm2286, 0.0
        %2312 = vst.msk [vmem:[#allocation3 + $0xd8] sm:$0xff] %vm1733, 0.0
        %2313 = vst.msk [vmem:[#allocation3 + $0xe0] sm:$0xff] %vm1733, 0.0
        %2314 = vst.msk [vmem:[#allocation3 + $0xe8] sm:$0x3] %vm2286, 0.0
        %2315 = vst.msk [vmem:[#allocation3 + $0xf0] sm:$0xff] %vm1733, 0.0
        %2316 = vst.msk [vmem:[#allocation3 + $0xf8] sm:$0xff] %vm1733, 0.0
        %2317 = vst.msk [vmem:[#allocation3 + $0x100] sm:$0x3] %vm2286, 0.0
        %2318 = vst.msk [vmem:[#allocation3 + $0x108] sm:$0xff] %vm1733, 0.0
        %2319 = vst.msk [vmem:[#allocation3 + $0x110] sm:$0xff] %vm1733, 0.0
        %2320 = vst.msk [vmem:[#allocation3 + $0x118] sm:$0x3] %vm2286, 0.0
        %2321 = vst.msk [vmem:[#allocation3 + $0x120] sm:$0xff] %vm1733, 0.0
        %2322 = vst.msk [vmem:[#allocation3 + $0x128] sm:$0xff] %vm1733, 0.0
        %2323 = vst.msk [vmem:[#allocation3 + $0x130] sm:$0x3] %vm2286, 0.0
        %2324 = vst.msk [vmem:[#allocation3 + $0x138] sm:$0xff] %vm1733, 0.0
        %2325 = vst.msk [vmem:[#allocation3 + $0x140] sm:$0xff] %vm1733, 0.0
        %2326 = vst.msk [vmem:[#allocation3 + $0x148] sm:$0x3] %vm2286, 0.0
        %2327 = vst.msk [vmem:[#allocation3 + $0x150] sm:$0xff] %vm1733, 0.0
        %2328 = vst.msk [vmem:[#allocation3 + $0x158] sm:$0xff] %vm1733, 0.0
        %2329 = vst.msk [vmem:[#allocation3 + $0x160] sm:$0x3] %vm2286, 0.0
        %2330 = vst.msk [vmem:[#allocation3 + $0x168] sm:$0xff] %vm1733, 0.0
        %2331 = vst.msk [vmem:[#allocation3 + $0x170] sm:$0xff] %vm1733, 0.0
        %2332 = vst.msk [vmem:[#allocation3 + $0x178] sm:$0x3] %vm2286, 0.0
        %2333 = vst.msk [vmem:[#allocation3 + $0x180] sm:$0xff] %vm1733, 0.0
        %2334 = vst.msk [vmem:[#allocation3 + $0x188] sm:$0xff] %vm1733, 0.0
        %2335 = vst.msk [vmem:[#allocation3 + $0x190] sm:$0x3] %vm2286, 0.0
        %2336 = vst.msk [vmem:[#allocation3 + $0x198] sm:$0xff] %vm1733, 0.0
        %2337 = vst.msk [vmem:[#allocation3 + $0x1a0] sm:$0xff] %vm1733, 0.0
        %2338 = vst.msk [vmem:[#allocation3 + $0x1a8] sm:$0x3] %vm2286, 0.0
        %s2339 = scalar_lea.vmem [#allocation3], 24
        %2340 = vst.msk [vmem:[%s2339 + $0x1] sm:$0xff] %vm1733, %v2252
        %2341 = vst.msk [vmem:[%s2339 + $0x9] sm:$0xff] %vm1733, %v2253
        %2342 = vst.msk [vmem:[%s2339 + $0x19] sm:$0xff] %vm1733, %v2254
        %2343 = vst.msk [vmem:[%s2339 + $0x21] sm:$0xff] %vm1733, %v2255
        %2344 = vst.msk [vmem:[%s2339 + $0x31] sm:$0xff] %vm1733, %v2256
        %2345 = vst.msk [vmem:[%s2339 + $0x39] sm:$0xff] %vm1733, %v2257
        %2346 = vst.msk [vmem:[%s2339 + $0x49] sm:$0xff] %vm1733, %v2258
        %2347 = vst.msk [vmem:[%s2339 + $0x51] sm:$0xff] %vm1733, %v2259
        %2348 = vst.msk [vmem:[%s2339 + $0x61] sm:$0xff] %vm1733, %v2260
        %2349 = vst.msk [vmem:[%s2339 + $0x69] sm:$0xff] %vm1733, %v2261
        %2350 = vst.msk [vmem:[%s2339 + $0x79] sm:$0xff] %vm1733, %v2262
        %2351 = vst.msk [vmem:[%s2339 + $0x81] sm:$0xff] %vm1733, %v2263
        %2352 = vst.msk [vmem:[%s2339 + $0x91] sm:$0xff] %vm1733, %v2264
        %2353 = vst.msk [vmem:[%s2339 + $0x99] sm:$0xff] %vm1733, %v2265
        %2354 = vst.msk [vmem:[%s2339 + $0xa9] sm:$0xff] %vm1733, %v2266
        %2355 = vst.msk [vmem:[%s2339 + $0xb1] sm:$0xff] %vm1733, %v2267
        %2356 = vst.msk [vmem:[%s2339 + $0xc1] sm:$0xff] %vm1733, %v2268
        %2357 = vst.msk [vmem:[%s2339 + $0xc9] sm:$0xff] %vm1733, %v2269
        %2358 = vst.msk [vmem:[%s2339 + $0xd9] sm:$0xff] %vm1733, %v2270
        %2359 = vst.msk [vmem:[%s2339 + $0xe1] sm:$0xff] %vm1733, %v2271
        %2360 = vst.msk [vmem:[%s2339 + $0xf1] sm:$0xff] %vm1733, %v2272
        %2361 = vst.msk [vmem:[%s2339 + $0xf9] sm:$0xff] %vm1733, %v2273
        %2362 = vst.msk [vmem:[%s2339 + $0x109] sm:$0xff] %vm1733, %v2274
        %2363 = vst.msk [vmem:[%s2339 + $0x111] sm:$0xff] %vm1733, %v2275
        %2364 = vst.msk [vmem:[%s2339 + $0x121] sm:$0xff] %vm1733, %v2276
        %2365 = vst.msk [vmem:[%s2339 + $0x129] sm:$0xff] %vm1733, %v2277
        %2366 = vst.msk [vmem:[%s2339 + $0x139] sm:$0xff] %vm1733, %v2278
        %2367 = vst.msk [vmem:[%s2339 + $0x141] sm:$0xff] %vm1733, %v2279
        %2368 = vst.msk [vmem:[%s2339 + $0x151] sm:$0xff] %vm1733, %v2280
        %2369 = vst.msk [vmem:[%s2339 + $0x159] sm:$0xff] %vm1733, %v2281
        %2370 = vst.msk [vmem:[%s2339 + $0x169] sm:$0xff] %vm1733, %v2282
        %2371 = vst.msk [vmem:[%s2339 + $0x171] sm:$0xff] %vm1733, %v2283
        %s2372 = sld [smem:[#allocation4 + $0x1]]
        %v2373 = vld [vmem:[#allocation3] sm:$0xff]
        %v2374 = vld [vmem:[#allocation3 + $0x8] sm:$0xff]
        %v2375 = vld [vmem:[#allocation3 + $0x18] sm:$0xff]
        %v2376 = vld [vmem:[#allocation3 + $0x20] sm:$0xff]
        %v2377 = vld [vmem:[#allocation3 + $0x30] sm:$0xff]
        %v2378 = vld [vmem:[#allocation3 + $0x38] sm:$0xff]
        %v2379 = vld [vmem:[#allocation3 + $0x48] sm:$0xff]
        %v2380 = vld [vmem:[#allocation3 + $0x50] sm:$0xff]
        %v2381 = vld [vmem:[#allocation3 + $0x60] sm:$0xff]
        %v2382 = vld [vmem:[#allocation3 + $0x68] sm:$0xff]
        %v2383 = vld [vmem:[#allocation3 + $0x78] sm:$0xff]
        %v2384 = vld [vmem:[#allocation3 + $0x80] sm:$0xff]
        %v2385 = vld [vmem:[#allocation3 + $0x90] sm:$0xff]
        %v2386 = vld [vmem:[#allocation3 + $0x98] sm:$0xff]
        %v2387 = vld [vmem:[#allocation3 + $0xa8] sm:$0xff]
        %v2388 = vld [vmem:[#allocation3 + $0xb0] sm:$0xff]
        %v2389 = vld [vmem:[#allocation3 + $0xc0] sm:$0xff]
        %v2390 = vld [vmem:[#allocation3 + $0xc8] sm:$0xff]
        %v2391 = vld [vmem:[#allocation3 + $0xd8] sm:$0xff]
        %v2392 = vld [vmem:[#allocation3 + $0xe0] sm:$0xff]
        %v2393 = vld [vmem:[#allocation3 + $0xf0] sm:$0xff]
        %v2394 = vld [vmem:[#allocation3 + $0xf8] sm:$0xff]
        %v2395 = vld [vmem:[#allocation3 + $0x108] sm:$0xff]
        %v2396 = vld [vmem:[#allocation3 + $0x110] sm:$0xff]
        %v2397 = vld [vmem:[#allocation3 + $0x120] sm:$0xff]
        %v2398 = vld [vmem:[#allocation3 + $0x128] sm:$0xff]
        %v2399 = vld [vmem:[#allocation3 + $0x138] sm:$0xff]
        %v2400 = vld [vmem:[#allocation3 + $0x140] sm:$0xff]
        %v2401 = vld [vmem:[#allocation3 + $0x150] sm:$0xff]
        %v2402 = vld [vmem:[#allocation3 + $0x158] sm:$0xff]
        %v2403 = vld [vmem:[#allocation3 + $0x168] sm:$0xff]
        %v2404 = vld [vmem:[#allocation3 + $0x170] sm:$0xff]
        %v2405 = vld [vmem:[#allocation3 + $0x1] sm:$0xff]
        %v2406 = vld [vmem:[#allocation3 + $0x9] sm:$0xff]
        %v2407 = vld [vmem:[#allocation3 + $0x19] sm:$0xff]
        %v2408 = vld [vmem:[#allocation3 + $0x21] sm:$0xff]
        %v2409 = vld [vmem:[#allocation3 + $0x31] sm:$0xff]
        %v2410 = vld [vmem:[#allocation3 + $0x39] sm:$0xff]
        %v2411 = vld [vmem:[#allocation3 + $0x49] sm:$0xff]
        %v2412 = vld [vmem:[#allocation3 + $0x51] sm:$0xff]
        %v2413 = vld [vmem:[#allocation3 + $0x61] sm:$0xff]
        %v2414 = vld [vmem:[#allocation3 + $0x69] sm:$0xff]
        %v2415 = vld [vmem:[#allocation3 + $0x79] sm:$0xff]
        %v2416 = vld [vmem:[#allocation3 + $0x81] sm:$0xff]
        %v2417 = vld [vmem:[#allocation3 + $0x91] sm:$0xff]
        %v2418 = vld [vmem:[#allocation3 + $0x99] sm:$0xff]
        %v2419 = vld [vmem:[#allocation3 + $0xa9] sm:$0xff]
        %v2420 = vld [vmem:[#allocation3 + $0xb1] sm:$0xff]
        %v2421 = vld [vmem:[#allocation3 + $0xc1] sm:$0xff]
        %v2422 = vld [vmem:[#allocation3 + $0xc9] sm:$0xff]
        %v2423 = vld [vmem:[#allocation3 + $0xd9] sm:$0xff]
        %v2424 = vld [vmem:[#allocation3 + $0xe1] sm:$0xff]
        %v2425 = vld [vmem:[#allocation3 + $0xf1] sm:$0xff]
        %v2426 = vld [vmem:[#allocation3 + $0xf9] sm:$0xff]
        %v2427 = vld [vmem:[#allocation3 + $0x109] sm:$0xff]
        %v2428 = vld [vmem:[#allocation3 + $0x111] sm:$0xff]
        %v2429 = vld [vmem:[#allocation3 + $0x121] sm:$0xff]
        %v2430 = vld [vmem:[#allocation3 + $0x129] sm:$0xff]
        %v2431 = vld [vmem:[#allocation3 + $0x139] sm:$0xff]
        %v2432 = vld [vmem:[#allocation3 + $0x141] sm:$0xff]
        %v2433 = vld [vmem:[#allocation3 + $0x151] sm:$0xff]
        %v2434 = vld [vmem:[#allocation3 + $0x159] sm:$0xff]
        %v2435 = vld [vmem:[#allocation3 + $0x169] sm:$0xff]
        %v2436 = vld [vmem:[#allocation3 + $0x171] sm:$0xff]
        %v2437 = vld [vmem:[#allocation3 + $0x2] sm:$0xff]
        %v2438 = vld [vmem:[#allocation3 + $0xa] sm:$0xff]
        %v2439 = vld [vmem:[#allocation3 + $0x1a] sm:$0xff]
        %v2440 = vld [vmem:[#allocation3 + $0x22] sm:$0xff]
        %v2441 = vld [vmem:[#allocation3 + $0x32] sm:$0xff]
        %v2442 = vld [vmem:[#allocation3 + $0x3a] sm:$0xff]
        %v2443 = vld [vmem:[#allocation3 + $0x4a] sm:$0xff]
        %v2444 = vld [vmem:[#allocation3 + $0x52] sm:$0xff]
        %v2445 = vld [vmem:[#allocation3 + $0x62] sm:$0xff]
        %v2446 = vld [vmem:[#allocation3 + $0x6a] sm:$0xff]
        %v2447 = vld [vmem:[#allocation3 + $0x7a] sm:$0xff]
        %v2448 = vld [vmem:[#allocation3 + $0x82] sm:$0xff]
        %v2449 = vld [vmem:[#allocation3 + $0x92] sm:$0xff]
        %v2450 = vld [vmem:[#allocation3 + $0x9a] sm:$0xff]
        %v2451 = vld [vmem:[#allocation3 + $0xaa] sm:$0xff]
        %v2452 = vld [vmem:[#allocation3 + $0xb2] sm:$0xff]
        %v2453 = vld [vmem:[#allocation3 + $0xc2] sm:$0xff]
        %v2454 = vld [vmem:[#allocation3 + $0xca] sm:$0xff]
        %v2455 = vld [vmem:[#allocation3 + $0xda] sm:$0xff]
        %v2456 = vld [vmem:[#allocation3 + $0xe2] sm:$0xff]
        %v2457 = vld [vmem:[#allocation3 + $0xf2] sm:$0xff]
        %v2458 = vld [vmem:[#allocation3 + $0xfa] sm:$0xff]
        %v2459 = vld [vmem:[#allocation3 + $0x10a] sm:$0xff]
        %v2460 = vld [vmem:[#allocation3 + $0x112] sm:$0xff]
        %v2461 = vld [vmem:[#allocation3 + $0x122] sm:$0xff]
        %v2462 = vld [vmem:[#allocation3 + $0x12a] sm:$0xff]
        %v2463 = vld [vmem:[#allocation3 + $0x13a] sm:$0xff]
        %v2464 = vld [vmem:[#allocation3 + $0x142] sm:$0xff]
        %v2465 = vld [vmem:[#allocation3 + $0x152] sm:$0xff]
        %v2466 = vld [vmem:[#allocation3 + $0x15a] sm:$0xff]
        %v2467 = vld [vmem:[#allocation3 + $0x16a] sm:$0xff]
        %v2468 = vld [vmem:[#allocation3 + $0x172] sm:$0xff]
        %v2469 = vld [vmem:[%s2339] sm:$0xff]
        %v2470 = vld [vmem:[%s2339 + $0x8] sm:$0xff]
        %v2471 = vld [vmem:[%s2339 + $0x18] sm:$0xff]
        %v2472 = vld [vmem:[%s2339 + $0x20] sm:$0xff]
        %v2473 = vld [vmem:[%s2339 + $0x30] sm:$0xff]
        %v2474 = vld [vmem:[%s2339 + $0x38] sm:$0xff]
        %v2475 = vld [vmem:[%s2339 + $0x48] sm:$0xff]
        %v2476 = vld [vmem:[%s2339 + $0x50] sm:$0xff]
        %v2477 = vld [vmem:[%s2339 + $0x60] sm:$0xff]
        %v2478 = vld [vmem:[%s2339 + $0x68] sm:$0xff]
        %v2479 = vld [vmem:[%s2339 + $0x78] sm:$0xff]
        %v2480 = vld [vmem:[%s2339 + $0x80] sm:$0xff]
        %v2481 = vld [vmem:[%s2339 + $0x90] sm:$0xff]
        %v2482 = vld [vmem:[%s2339 + $0x98] sm:$0xff]
        %v2483 = vld [vmem:[%s2339 + $0xa8] sm:$0xff]
        %v2484 = vld [vmem:[%s2339 + $0xb0] sm:$0xff]
        %v2485 = vld [vmem:[%s2339 + $0xc0] sm:$0xff]
        %v2486 = vld [vmem:[%s2339 + $0xc8] sm:$0xff]
        %v2487 = vld [vmem:[%s2339 + $0xd8] sm:$0xff]
        %v2488 = vld [vmem:[%s2339 + $0xe0] sm:$0xff]
        %v2489 = vld [vmem:[%s2339 + $0xf0] sm:$0xff]
        %v2490 = vld [vmem:[%s2339 + $0xf8] sm:$0xff]
        %v2491 = vld [vmem:[%s2339 + $0x108] sm:$0xff]
        %v2492 = vld [vmem:[%s2339 + $0x110] sm:$0xff]
        %v2493 = vld [vmem:[%s2339 + $0x120] sm:$0xff]
        %v2494 = vld [vmem:[%s2339 + $0x128] sm:$0xff]
        %v2495 = vld [vmem:[%s2339 + $0x138] sm:$0xff]
        %v2496 = vld [vmem:[%s2339 + $0x140] sm:$0xff]
        %v2497 = vld [vmem:[%s2339 + $0x150] sm:$0xff]
        %v2498 = vld [vmem:[%s2339 + $0x158] sm:$0xff]
        %v2499 = vld [vmem:[%s2339 + $0x168] sm:$0xff]
        %v2500 = vld [vmem:[%s2339 + $0x170] sm:$0xff]
        %v2501 = vld [vmem:[%s2339 + $0x1] sm:$0xff]
        %v2502 = vld [vmem:[%s2339 + $0x9] sm:$0xff]
        %v2503 = vld [vmem:[%s2339 + $0x19] sm:$0xff]
        %v2504 = vld [vmem:[%s2339 + $0x21] sm:$0xff]
        %v2505 = vld [vmem:[%s2339 + $0x31] sm:$0xff]
        %v2506 = vld [vmem:[%s2339 + $0x39] sm:$0xff]
        %v2507 = vld [vmem:[%s2339 + $0x49] sm:$0xff]
        %v2508 = vld [vmem:[%s2339 + $0x51] sm:$0xff]
        %v2509 = vld [vmem:[%s2339 + $0x61] sm:$0xff]
        %v2510 = vld [vmem:[%s2339 + $0x69] sm:$0xff]
        %v2511 = vld [vmem:[%s2339 + $0x79] sm:$0xff]
        %v2512 = vld [vmem:[%s2339 + $0x81] sm:$0xff]
        %v2513 = vld [vmem:[%s2339 + $0x91] sm:$0xff]
        %v2514 = vld [vmem:[%s2339 + $0x99] sm:$0xff]
        %v2515 = vld [vmem:[%s2339 + $0xa9] sm:$0xff]
        %v2516 = vld [vmem:[%s2339 + $0xb1] sm:$0xff]
        %v2517 = vld [vmem:[%s2339 + $0xc1] sm:$0xff]
        %v2518 = vld [vmem:[%s2339 + $0xc9] sm:$0xff]
        %v2519 = vld [vmem:[%s2339 + $0xd9] sm:$0xff]
        %v2520 = vld [vmem:[%s2339 + $0xe1] sm:$0xff]
        %v2521 = vld [vmem:[%s2339 + $0xf1] sm:$0xff]
        %v2522 = vld [vmem:[%s2339 + $0xf9] sm:$0xff]
        %v2523 = vld [vmem:[%s2339 + $0x109] sm:$0xff]
        %v2524 = vld [vmem:[%s2339 + $0x111] sm:$0xff]
        %v2525 = vld [vmem:[%s2339 + $0x121] sm:$0xff]
        %v2526 = vld [vmem:[%s2339 + $0x129] sm:$0xff]
        %v2527 = vld [vmem:[%s2339 + $0x139] sm:$0xff]
        %v2528 = vld [vmem:[%s2339 + $0x141] sm:$0xff]
        %v2529 = vld [vmem:[%s2339 + $0x151] sm:$0xff]
        %v2530 = vld [vmem:[%s2339 + $0x159] sm:$0xff]
        %v2531 = vld [vmem:[%s2339 + $0x169] sm:$0xff]
        %v2532 = vld [vmem:[%s2339 + $0x171] sm:$0xff]
        %v2533 = vld [vmem:[%s2339 + $0x2] sm:$0xff]
        %v2534 = vld [vmem:[%s2339 + $0xa] sm:$0xff]
        %v2535 = vld [vmem:[%s2339 + $0x1a] sm:$0xff]
        %v2536 = vld [vmem:[%s2339 + $0x22] sm:$0xff]
        %v2537 = vld [vmem:[%s2339 + $0x32] sm:$0xff]
        %v2538 = vld [vmem:[%s2339 + $0x3a] sm:$0xff]
        %v2539 = vld [vmem:[%s2339 + $0x4a] sm:$0xff]
        %v2540 = vld [vmem:[%s2339 + $0x52] sm:$0xff]
        %v2541 = vld [vmem:[%s2339 + $0x62] sm:$0xff]
        %v2542 = vld [vmem:[%s2339 + $0x6a] sm:$0xff]
        %v2543 = vld [vmem:[%s2339 + $0x7a] sm:$0xff]
        %v2544 = vld [vmem:[%s2339 + $0x82] sm:$0xff]
        %v2545 = vld [vmem:[%s2339 + $0x92] sm:$0xff]
        %v2546 = vld [vmem:[%s2339 + $0x9a] sm:$0xff]
        %v2547 = vld [vmem:[%s2339 + $0xaa] sm:$0xff]
        %v2548 = vld [vmem:[%s2339 + $0xb2] sm:$0xff]
        %v2549 = vld [vmem:[%s2339 + $0xc2] sm:$0xff]
        %v2550 = vld [vmem:[%s2339 + $0xca] sm:$0xff]
        %v2551 = vld [vmem:[%s2339 + $0xda] sm:$0xff]
        %v2552 = vld [vmem:[%s2339 + $0xe2] sm:$0xff]
        %v2553 = vld [vmem:[%s2339 + $0xf2] sm:$0xff]
        %v2554 = vld [vmem:[%s2339 + $0xfa] sm:$0xff]
        %v2555 = vld [vmem:[%s2339 + $0x10a] sm:$0xff]
        %v2556 = vld [vmem:[%s2339 + $0x112] sm:$0xff]
        %v2557 = vld [vmem:[%s2339 + $0x122] sm:$0xff]
        %v2558 = vld [vmem:[%s2339 + $0x12a] sm:$0xff]
        %v2559 = vld [vmem:[%s2339 + $0x13a] sm:$0xff]
        %v2560 = vld [vmem:[%s2339 + $0x142] sm:$0xff]
        %v2561 = vld [vmem:[%s2339 + $0x152] sm:$0xff]
        %v2562 = vld [vmem:[%s2339 + $0x15a] sm:$0xff]
        %v2563 = vld [vmem:[%s2339 + $0x16a] sm:$0xff]
        %v2564 = vld [vmem:[%s2339 + $0x172] sm:$0xff]
        %s2565 = scalar_lea.vmem [#allocation3], 48
        %v2566 = vld [vmem:[%s2565] sm:$0xff]
        %v2567 = vld [vmem:[%s2565 + $0x8] sm:$0xff]
        %v2568 = vld [vmem:[%s2565 + $0x18] sm:$0xff]
        %v2569 = vld [vmem:[%s2565 + $0x20] sm:$0xff]
        %v2570 = vld [vmem:[%s2565 + $0x30] sm:$0xff]
        %v2571 = vld [vmem:[%s2565 + $0x38] sm:$0xff]
        %v2572 = vld [vmem:[%s2565 + $0x48] sm:$0xff]
        %v2573 = vld [vmem:[%s2565 + $0x50] sm:$0xff]
        %v2574 = vld [vmem:[%s2565 + $0x60] sm:$0xff]
        %v2575 = vld [vmem:[%s2565 + $0x68] sm:$0xff]
        %v2576 = vld [vmem:[%s2565 + $0x78] sm:$0xff]
        %v2577 = vld [vmem:[%s2565 + $0x80] sm:$0xff]
        %v2578 = vld [vmem:[%s2565 + $0x90] sm:$0xff]
        %v2579 = vld [vmem:[%s2565 + $0x98] sm:$0xff]
        %v2580 = vld [vmem:[%s2565 + $0xa8] sm:$0xff]
        %v2581 = vld [vmem:[%s2565 + $0xb0] sm:$0xff]
        %v2582 = vld [vmem:[%s2565 + $0xc0] sm:$0xff]
        %v2583 = vld [vmem:[%s2565 + $0xc8] sm:$0xff]
        %v2584 = vld [vmem:[%s2565 + $0xd8] sm:$0xff]
        %v2585 = vld [vmem:[%s2565 + $0xe0] sm:$0xff]
        %v2586 = vld [vmem:[%s2565 + $0xf0] sm:$0xff]
        %v2587 = vld [vmem:[%s2565 + $0xf8] sm:$0xff]
        %v2588 = vld [vmem:[%s2565 + $0x108] sm:$0xff]
        %v2589 = vld [vmem:[%s2565 + $0x110] sm:$0xff]
        %v2590 = vld [vmem:[%s2565 + $0x120] sm:$0xff]
        %v2591 = vld [vmem:[%s2565 + $0x128] sm:$0xff]
        %v2592 = vld [vmem:[%s2565 + $0x138] sm:$0xff]
        %v2593 = vld [vmem:[%s2565 + $0x140] sm:$0xff]
        %v2594 = vld [vmem:[%s2565 + $0x150] sm:$0xff]
        %v2595 = vld [vmem:[%s2565 + $0x158] sm:$0xff]
        %v2596 = vld [vmem:[%s2565 + $0x168] sm:$0xff]
        %v2597 = vld [vmem:[%s2565 + $0x170] sm:$0xff]
        %v2598 = vld [vmem:[%s2565 + $0x1] sm:$0xff]
        %v2599 = vld [vmem:[%s2565 + $0x9] sm:$0xff]
        %v2600 = vld [vmem:[%s2565 + $0x19] sm:$0xff]
        %v2601 = vld [vmem:[%s2565 + $0x21] sm:$0xff]
        %v2602 = vld [vmem:[%s2565 + $0x31] sm:$0xff]
        %v2603 = vld [vmem:[%s2565 + $0x39] sm:$0xff]
        %v2604 = vld [vmem:[%s2565 + $0x49] sm:$0xff]
        %v2605 = vld [vmem:[%s2565 + $0x51] sm:$0xff]
        %v2606 = vld [vmem:[%s2565 + $0x61] sm:$0xff]
        %v2607 = vld [vmem:[%s2565 + $0x69] sm:$0xff]
        %v2608 = vld [vmem:[%s2565 + $0x79] sm:$0xff]
        %v2609 = vld [vmem:[%s2565 + $0x81] sm:$0xff]
        %v2610 = vld [vmem:[%s2565 + $0x91] sm:$0xff]
        %v2611 = vld [vmem:[%s2565 + $0x99] sm:$0xff]
        %v2612 = vld [vmem:[%s2565 + $0xa9] sm:$0xff]
        %v2613 = vld [vmem:[%s2565 + $0xb1] sm:$0xff]
        %v2614 = vld [vmem:[%s2565 + $0xc1] sm:$0xff]
        %v2615 = vld [vmem:[%s2565 + $0xc9] sm:$0xff]
        %v2616 = vld [vmem:[%s2565 + $0xd9] sm:$0xff]
        %v2617 = vld [vmem:[%s2565 + $0xe1] sm:$0xff]
        %v2618 = vld [vmem:[%s2565 + $0xf1] sm:$0xff]
        %v2619 = vld [vmem:[%s2565 + $0xf9] sm:$0xff]
        %v2620 = vld [vmem:[%s2565 + $0x109] sm:$0xff]
        %v2621 = vld [vmem:[%s2565 + $0x111] sm:$0xff]
        %v2622 = vld [vmem:[%s2565 + $0x121] sm:$0xff]
        %v2623 = vld [vmem:[%s2565 + $0x129] sm:$0xff]
        %v2624 = vld [vmem:[%s2565 + $0x139] sm:$0xff]
        %v2625 = vld [vmem:[%s2565 + $0x141] sm:$0xff]
        %v2626 = vld [vmem:[%s2565 + $0x151] sm:$0xff]
        %v2627 = vld [vmem:[%s2565 + $0x159] sm:$0xff]
        %v2628 = vld [vmem:[%s2565 + $0x169] sm:$0xff]
        %v2629 = vld [vmem:[%s2565 + $0x171] sm:$0xff]
        %v2630 = vld [vmem:[%s2565 + $0x2] sm:$0xff]
        %v2631 = vld [vmem:[%s2565 + $0xa] sm:$0xff]
        %v2632 = vld [vmem:[%s2565 + $0x1a] sm:$0xff]
        %v2633 = vld [vmem:[%s2565 + $0x22] sm:$0xff]
        %v2634 = vld [vmem:[%s2565 + $0x32] sm:$0xff]
        %v2635 = vld [vmem:[%s2565 + $0x3a] sm:$0xff]
        %v2636 = vld [vmem:[%s2565 + $0x4a] sm:$0xff]
        %v2637 = vld [vmem:[%s2565 + $0x52] sm:$0xff]
        %v2638 = vld [vmem:[%s2565 + $0x62] sm:$0xff]
        %v2639 = vld [vmem:[%s2565 + $0x6a] sm:$0xff]
        %v2640 = vld [vmem:[%s2565 + $0x7a] sm:$0xff]
        %v2641 = vld [vmem:[%s2565 + $0x82] sm:$0xff]
        %v2642 = vld [vmem:[%s2565 + $0x92] sm:$0xff]
        %v2643 = vld [vmem:[%s2565 + $0x9a] sm:$0xff]
        %v2644 = vld [vmem:[%s2565 + $0xaa] sm:$0xff]
        %v2645 = vld [vmem:[%s2565 + $0xb2] sm:$0xff]
        %v2646 = vld [vmem:[%s2565 + $0xc2] sm:$0xff]
        %v2647 = vld [vmem:[%s2565 + $0xca] sm:$0xff]
        %v2648 = vld [vmem:[%s2565 + $0xda] sm:$0xff]
        %v2649 = vld [vmem:[%s2565 + $0xe2] sm:$0xff]
        %v2650 = vld [vmem:[%s2565 + $0xf2] sm:$0xff]
        %v2651 = vld [vmem:[%s2565 + $0xfa] sm:$0xff]
        %v2652 = vld [vmem:[%s2565 + $0x10a] sm:$0xff]
        %v2653 = vld [vmem:[%s2565 + $0x112] sm:$0xff]
        %v2654 = vld [vmem:[%s2565 + $0x122] sm:$0xff]
        %v2655 = vld [vmem:[%s2565 + $0x12a] sm:$0xff]
        %v2656 = vld [vmem:[%s2565 + $0x13a] sm:$0xff]
        %v2657 = vld [vmem:[%s2565 + $0x142] sm:$0xff]
        %v2658 = vld [vmem:[%s2565 + $0x152] sm:$0xff]
        %v2659 = vld [vmem:[%s2565 + $0x15a] sm:$0xff]
        %v2660 = vld [vmem:[%s2565 + $0x16a] sm:$0xff]
        %v2661 = vld [vmem:[%s2565 + $0x172] sm:$0xff]
        %2694 = vrot.lane.b32.xlu0 %v2405, 8
        %v2695 = vpop.permute.xlu0 %2694
        %2696 = vrot.lane.b32.xlu0 %v2406, 8
        %v2697 = vpop.permute.xlu0 %2696
        %2698 = vrot.lane.b32.xlu0 %v2407, 8
        %v2699 = vpop.permute.xlu0 %2698
        %2700 = vrot.lane.b32.xlu0 %v2408, 8
        %v2701 = vpop.permute.xlu0 %2700
        %2702 = vrot.lane.b32.xlu0 %v2409, 8
        %v2703 = vpop.permute.xlu0 %2702
        %2704 = vrot.lane.b32.xlu0 %v2410, 8
        %v2705 = vpop.permute.xlu0 %2704
        %2706 = vrot.lane.b32.xlu0 %v2411, 8
        %v2707 = vpop.permute.xlu0 %2706
        %2708 = vrot.lane.b32.xlu0 %v2412, 8
        %v2709 = vpop.permute.xlu0 %2708
        %2710 = vrot.lane.b32.xlu0 %v2413, 8
        %v2711 = vpop.permute.xlu0 %2710
        %2712 = vrot.lane.b32.xlu0 %v2414, 8
        %v2713 = vpop.permute.xlu0 %2712
        %2714 = vrot.lane.b32.xlu0 %v2415, 8
        %v2715 = vpop.permute.xlu0 %2714
        %2716 = vrot.lane.b32.xlu0 %v2416, 8
        %v2717 = vpop.permute.xlu0 %2716
        %2718 = vrot.lane.b32.xlu0 %v2417, 8
        %v2719 = vpop.permute.xlu0 %2718
        %2720 = vrot.lane.b32.xlu0 %v2418, 8
        %v2721 = vpop.permute.xlu0 %2720
        %2722 = vrot.lane.b32.xlu0 %v2419, 8
        %v2723 = vpop.permute.xlu0 %2722
        %2724 = vrot.lane.b32.xlu0 %v2420, 8
        %v2725 = vpop.permute.xlu0 %2724
        %2726 = vrot.lane.b32.xlu0 %v2421, 8
        %v2727 = vpop.permute.xlu0 %2726
        %2728 = vrot.lane.b32.xlu0 %v2422, 8
        %v2729 = vpop.permute.xlu0 %2728
        %2730 = vrot.lane.b32.xlu0 %v2423, 8
        %v2731 = vpop.permute.xlu0 %2730
        %2732 = vrot.lane.b32.xlu0 %v2424, 8
        %v2733 = vpop.permute.xlu0 %2732
        %2734 = vrot.lane.b32.xlu0 %v2425, 8
        %v2735 = vpop.permute.xlu0 %2734
        %2736 = vrot.lane.b32.xlu0 %v2426, 8
        %v2737 = vpop.permute.xlu0 %2736
        %2738 = vrot.lane.b32.xlu0 %v2427, 8
        %v2739 = vpop.permute.xlu0 %2738
        %2740 = vrot.lane.b32.xlu0 %v2428, 8
        %v2741 = vpop.permute.xlu0 %2740
        %2742 = vrot.lane.b32.xlu0 %v2429, 8
        %v2743 = vpop.permute.xlu0 %2742
        %2744 = vrot.lane.b32.xlu0 %v2430, 8
        %v2745 = vpop.permute.xlu0 %2744
        %2746 = vrot.lane.b32.xlu0 %v2431, 8
        %v2747 = vpop.permute.xlu0 %2746
        %2748 = vrot.lane.b32.xlu0 %v2432, 8
        %v2749 = vpop.permute.xlu0 %2748
        %2750 = vrot.lane.b32.xlu0 %v2433, 8
        %v2751 = vpop.permute.xlu0 %2750
        %2752 = vrot.lane.b32.xlu0 %v2434, 8
        %v2753 = vpop.permute.xlu0 %2752
        %2754 = vrot.lane.b32.xlu0 %v2435, 8
        %v2755 = vpop.permute.xlu0 %2754
        %2756 = vrot.lane.b32.xlu0 %v2436, 8
        %v2757 = vpop.permute.xlu0 %2756
        %2822 = vrot.lane.b32.xlu0 %v2437, 16
        %v2823 = vpop.permute.xlu0 %2822
        %2824 = vrot.lane.b32.xlu0 %v2438, 16
        %v2825 = vpop.permute.xlu0 %2824
        %2826 = vrot.lane.b32.xlu0 %v2439, 16
        %v2827 = vpop.permute.xlu0 %2826
        %2828 = vrot.lane.b32.xlu0 %v2440, 16
        %v2829 = vpop.permute.xlu0 %2828
        %2830 = vrot.lane.b32.xlu0 %v2441, 16
        %v2831 = vpop.permute.xlu0 %2830
        %2832 = vrot.lane.b32.xlu0 %v2442, 16
        %v2833 = vpop.permute.xlu0 %2832
        %2834 = vrot.lane.b32.xlu0 %v2443, 16
        %v2835 = vpop.permute.xlu0 %2834
        %2836 = vrot.lane.b32.xlu0 %v2444, 16
        %v2837 = vpop.permute.xlu0 %2836
        %2838 = vrot.lane.b32.xlu0 %v2445, 16
        %v2839 = vpop.permute.xlu0 %2838
        %2840 = vrot.lane.b32.xlu0 %v2446, 16
        %v2841 = vpop.permute.xlu0 %2840
        %2842 = vrot.lane.b32.xlu0 %v2447, 16
        %v2843 = vpop.permute.xlu0 %2842
        %2844 = vrot.lane.b32.xlu0 %v2448, 16
        %v2845 = vpop.permute.xlu0 %2844
        %2846 = vrot.lane.b32.xlu0 %v2449, 16
        %v2847 = vpop.permute.xlu0 %2846
        %2848 = vrot.lane.b32.xlu0 %v2450, 16
        %v2849 = vpop.permute.xlu0 %2848
        %2850 = vrot.lane.b32.xlu0 %v2451, 16
        %v2851 = vpop.permute.xlu0 %2850
        %2852 = vrot.lane.b32.xlu0 %v2452, 16
        %v2853 = vpop.permute.xlu0 %2852
        %2854 = vrot.lane.b32.xlu0 %v2453, 16
        %v2855 = vpop.permute.xlu0 %2854
        %2856 = vrot.lane.b32.xlu0 %v2454, 16
        %v2857 = vpop.permute.xlu0 %2856
        %2858 = vrot.lane.b32.xlu0 %v2455, 16
        %v2859 = vpop.permute.xlu0 %2858
        %2860 = vrot.lane.b32.xlu0 %v2456, 16
        %v2861 = vpop.permute.xlu0 %2860
        %2862 = vrot.lane.b32.xlu0 %v2457, 16
        %v2863 = vpop.permute.xlu0 %2862
        %2864 = vrot.lane.b32.xlu0 %v2458, 16
        %v2865 = vpop.permute.xlu0 %2864
        %2866 = vrot.lane.b32.xlu0 %v2459, 16
        %v2867 = vpop.permute.xlu0 %2866
        %2868 = vrot.lane.b32.xlu0 %v2460, 16
        %v2869 = vpop.permute.xlu0 %2868
        %2870 = vrot.lane.b32.xlu0 %v2461, 16
        %v2871 = vpop.permute.xlu0 %2870
        %2872 = vrot.lane.b32.xlu0 %v2462, 16
        %v2873 = vpop.permute.xlu0 %2872
        %2874 = vrot.lane.b32.xlu0 %v2463, 16
        %v2875 = vpop.permute.xlu0 %2874
        %2876 = vrot.lane.b32.xlu0 %v2464, 16
        %v2877 = vpop.permute.xlu0 %2876
        %2878 = vrot.lane.b32.xlu0 %v2465, 16
        %v2879 = vpop.permute.xlu0 %2878
        %2880 = vrot.lane.b32.xlu0 %v2466, 16
        %v2881 = vpop.permute.xlu0 %2880
        %2882 = vrot.lane.b32.xlu0 %v2467, 16
        %v2883 = vpop.permute.xlu0 %2882
        %2884 = vrot.lane.b32.xlu0 %v2468, 16
        %v2885 = vpop.permute.xlu0 %2884
        %2950 = vrot.lane.b32.xlu0 %v2469, 24
        %v2951 = vpop.permute.xlu0 %2950
        %2952 = vrot.lane.b32.xlu0 %v2470, 24
        %v2953 = vpop.permute.xlu0 %2952
        %2954 = vrot.lane.b32.xlu0 %v2471, 24
        %v2955 = vpop.permute.xlu0 %2954
        %2956 = vrot.lane.b32.xlu0 %v2472, 24
        %v2957 = vpop.permute.xlu0 %2956
        %2958 = vrot.lane.b32.xlu0 %v2473, 24
        %v2959 = vpop.permute.xlu0 %2958
        %2960 = vrot.lane.b32.xlu0 %v2474, 24
        %v2961 = vpop.permute.xlu0 %2960
        %2962 = vrot.lane.b32.xlu0 %v2475, 24
        %v2963 = vpop.permute.xlu0 %2962
        %2964 = vrot.lane.b32.xlu0 %v2476, 24
        %v2965 = vpop.permute.xlu0 %2964
        %2966 = vrot.lane.b32.xlu0 %v2477, 24
        %v2967 = vpop.permute.xlu0 %2966
        %2968 = vrot.lane.b32.xlu0 %v2478, 24
        %v2969 = vpop.permute.xlu0 %2968
        %2970 = vrot.lane.b32.xlu0 %v2479, 24
        %v2971 = vpop.permute.xlu0 %2970
        %2972 = vrot.lane.b32.xlu0 %v2480, 24
        %v2973 = vpop.permute.xlu0 %2972
        %2974 = vrot.lane.b32.xlu0 %v2481, 24
        %v2975 = vpop.permute.xlu0 %2974
        %2976 = vrot.lane.b32.xlu0 %v2482, 24
        %v2977 = vpop.permute.xlu0 %2976
        %2978 = vrot.lane.b32.xlu0 %v2483, 24
        %v2979 = vpop.permute.xlu0 %2978
        %2980 = vrot.lane.b32.xlu0 %v2484, 24
        %v2981 = vpop.permute.xlu0 %2980
        %2982 = vrot.lane.b32.xlu0 %v2485, 24
        %v2983 = vpop.permute.xlu0 %2982
        %2984 = vrot.lane.b32.xlu0 %v2486, 24
        %v2985 = vpop.permute.xlu0 %2984
        %2986 = vrot.lane.b32.xlu0 %v2487, 24
        %v2987 = vpop.permute.xlu0 %2986
        %2988 = vrot.lane.b32.xlu0 %v2488, 24
        %v2989 = vpop.permute.xlu0 %2988
        %2990 = vrot.lane.b32.xlu0 %v2489, 24
        %v2991 = vpop.permute.xlu0 %2990
        %2992 = vrot.lane.b32.xlu0 %v2490, 24
        %v2993 = vpop.permute.xlu0 %2992
        %2994 = vrot.lane.b32.xlu0 %v2491, 24
        %v2995 = vpop.permute.xlu0 %2994
        %2996 = vrot.lane.b32.xlu0 %v2492, 24
        %v2997 = vpop.permute.xlu0 %2996
        %2998 = vrot.lane.b32.xlu0 %v2493, 24
        %v2999 = vpop.permute.xlu0 %2998
        %3000 = vrot.lane.b32.xlu0 %v2494, 24
        %v3001 = vpop.permute.xlu0 %3000
        %3002 = vrot.lane.b32.xlu0 %v2495, 24
        %v3003 = vpop.permute.xlu0 %3002
        %3004 = vrot.lane.b32.xlu0 %v2496, 24
        %v3005 = vpop.permute.xlu0 %3004
        %3006 = vrot.lane.b32.xlu0 %v2497, 24
        %v3007 = vpop.permute.xlu0 %3006
        %3008 = vrot.lane.b32.xlu0 %v2498, 24
        %v3009 = vpop.permute.xlu0 %3008
        %3010 = vrot.lane.b32.xlu0 %v2499, 24
        %v3011 = vpop.permute.xlu0 %3010
        %3012 = vrot.lane.b32.xlu0 %v2500, 24
        %v3013 = vpop.permute.xlu0 %3012
        %3078 = vrot.lane.b32.xlu0 %v2501, 32
        %v3079 = vpop.permute.xlu0 %3078
        %3080 = vrot.lane.b32.xlu0 %v2502, 32
        %v3081 = vpop.permute.xlu0 %3080
        %3082 = vrot.lane.b32.xlu0 %v2503, 32
        %v3083 = vpop.permute.xlu0 %3082
        %3084 = vrot.lane.b32.xlu0 %v2504, 32
        %v3085 = vpop.permute.xlu0 %3084
        %3086 = vrot.lane.b32.xlu0 %v2505, 32
        %v3087 = vpop.permute.xlu0 %3086
        %3088 = vrot.lane.b32.xlu0 %v2506, 32
        %v3089 = vpop.permute.xlu0 %3088
        %3090 = vrot.lane.b32.xlu0 %v2507, 32
        %v3091 = vpop.permute.xlu0 %3090
        %3092 = vrot.lane.b32.xlu0 %v2508, 32
        %v3093 = vpop.permute.xlu0 %3092
        %3094 = vrot.lane.b32.xlu0 %v2509, 32
        %v3095 = vpop.permute.xlu0 %3094
        %3096 = vrot.lane.b32.xlu0 %v2510, 32
        %v3097 = vpop.permute.xlu0 %3096
        %3098 = vrot.lane.b32.xlu0 %v2511, 32
        %v3099 = vpop.permute.xlu0 %3098
        %3100 = vrot.lane.b32.xlu0 %v2512, 32
        %v3101 = vpop.permute.xlu0 %3100
        %3102 = vrot.lane.b32.xlu0 %v2513, 32
        %v3103 = vpop.permute.xlu0 %3102
        %3104 = vrot.lane.b32.xlu0 %v2514, 32
        %v3105 = vpop.permute.xlu0 %3104
        %3106 = vrot.lane.b32.xlu0 %v2515, 32
        %v3107 = vpop.permute.xlu0 %3106
        %3108 = vrot.lane.b32.xlu0 %v2516, 32
        %v3109 = vpop.permute.xlu0 %3108
        %3110 = vrot.lane.b32.xlu0 %v2517, 32
        %v3111 = vpop.permute.xlu0 %3110
        %3112 = vrot.lane.b32.xlu0 %v2518, 32
        %v3113 = vpop.permute.xlu0 %3112
        %3114 = vrot.lane.b32.xlu0 %v2519, 32
        %v3115 = vpop.permute.xlu0 %3114
        %3116 = vrot.lane.b32.xlu0 %v2520, 32
        %v3117 = vpop.permute.xlu0 %3116
        %3118 = vrot.lane.b32.xlu0 %v2521, 32
        %v3119 = vpop.permute.xlu0 %3118
        %3120 = vrot.lane.b32.xlu0 %v2522, 32
        %v3121 = vpop.permute.xlu0 %3120
        %3122 = vrot.lane.b32.xlu0 %v2523, 32
        %v3123 = vpop.permute.xlu0 %3122
        %3124 = vrot.lane.b32.xlu0 %v2524, 32
        %v3125 = vpop.permute.xlu0 %3124
        %3126 = vrot.lane.b32.xlu0 %v2525, 32
        %v3127 = vpop.permute.xlu0 %3126
        %3128 = vrot.lane.b32.xlu0 %v2526, 32
        %v3129 = vpop.permute.xlu0 %3128
        %3130 = vrot.lane.b32.xlu0 %v2527, 32
        %v3131 = vpop.permute.xlu0 %3130
        %3132 = vrot.lane.b32.xlu0 %v2528, 32
        %v3133 = vpop.permute.xlu0 %3132
        %3134 = vrot.lane.b32.xlu0 %v2529, 32
        %v3135 = vpop.permute.xlu0 %3134
        %3136 = vrot.lane.b32.xlu0 %v2530, 32
        %v3137 = vpop.permute.xlu0 %3136
        %3138 = vrot.lane.b32.xlu0 %v2531, 32
        %v3139 = vpop.permute.xlu0 %3138
        %3140 = vrot.lane.b32.xlu0 %v2532, 32
        %v3141 = vpop.permute.xlu0 %3140
        %3206 = vrot.lane.b32.xlu0 %v2533, 40
        %v3207 = vpop.permute.xlu0 %3206
        %3208 = vrot.lane.b32.xlu0 %v2534, 40
        %v3209 = vpop.permute.xlu0 %3208
        %3210 = vrot.lane.b32.xlu0 %v2535, 40
        %v3211 = vpop.permute.xlu0 %3210
        %3212 = vrot.lane.b32.xlu0 %v2536, 40
        %v3213 = vpop.permute.xlu0 %3212
        %3214 = vrot.lane.b32.xlu0 %v2537, 40
        %v3215 = vpop.permute.xlu0 %3214
        %3216 = vrot.lane.b32.xlu0 %v2538, 40
        %v3217 = vpop.permute.xlu0 %3216
        %3218 = vrot.lane.b32.xlu0 %v2539, 40
        %v3219 = vpop.permute.xlu0 %3218
        %3220 = vrot.lane.b32.xlu0 %v2540, 40
        %v3221 = vpop.permute.xlu0 %3220
        %3222 = vrot.lane.b32.xlu0 %v2541, 40
        %v3223 = vpop.permute.xlu0 %3222
        %3224 = vrot.lane.b32.xlu0 %v2542, 40
        %v3225 = vpop.permute.xlu0 %3224
        %3226 = vrot.lane.b32.xlu0 %v2543, 40
        %v3227 = vpop.permute.xlu0 %3226
        %3228 = vrot.lane.b32.xlu0 %v2544, 40
        %v3229 = vpop.permute.xlu0 %3228
        %3230 = vrot.lane.b32.xlu0 %v2545, 40
        %v3231 = vpop.permute.xlu0 %3230
        %3232 = vrot.lane.b32.xlu0 %v2546, 40
        %v3233 = vpop.permute.xlu0 %3232
        %3234 = vrot.lane.b32.xlu0 %v2547, 40
        %v3235 = vpop.permute.xlu0 %3234
        %3236 = vrot.lane.b32.xlu0 %v2548, 40
        %v3237 = vpop.permute.xlu0 %3236
        %3238 = vrot.lane.b32.xlu0 %v2549, 40
        %v3239 = vpop.permute.xlu0 %3238
        %3240 = vrot.lane.b32.xlu0 %v2550, 40
        %v3241 = vpop.permute.xlu0 %3240
        %3242 = vrot.lane.b32.xlu0 %v2551, 40
        %v3243 = vpop.permute.xlu0 %3242
        %3244 = vrot.lane.b32.xlu0 %v2552, 40
        %v3245 = vpop.permute.xlu0 %3244
        %3246 = vrot.lane.b32.xlu0 %v2553, 40
        %v3247 = vpop.permute.xlu0 %3246
        %3248 = vrot.lane.b32.xlu0 %v2554, 40
        %v3249 = vpop.permute.xlu0 %3248
        %3250 = vrot.lane.b32.xlu0 %v2555, 40
        %v3251 = vpop.permute.xlu0 %3250
        %3252 = vrot.lane.b32.xlu0 %v2556, 40
        %v3253 = vpop.permute.xlu0 %3252
        %3254 = vrot.lane.b32.xlu0 %v2557, 40
        %v3255 = vpop.permute.xlu0 %3254
        %3256 = vrot.lane.b32.xlu0 %v2558, 40
        %v3257 = vpop.permute.xlu0 %3256
        %3258 = vrot.lane.b32.xlu0 %v2559, 40
        %v3259 = vpop.permute.xlu0 %3258
        %3260 = vrot.lane.b32.xlu0 %v2560, 40
        %v3261 = vpop.permute.xlu0 %3260
        %3262 = vrot.lane.b32.xlu0 %v2561, 40
        %v3263 = vpop.permute.xlu0 %3262
        %3264 = vrot.lane.b32.xlu0 %v2562, 40
        %v3265 = vpop.permute.xlu0 %3264
        %3266 = vrot.lane.b32.xlu0 %v2563, 40
        %v3267 = vpop.permute.xlu0 %3266
        %3268 = vrot.lane.b32.xlu0 %v2564, 40
        %v3269 = vpop.permute.xlu0 %3268
        %3334 = vrot.lane.b32.xlu0 %v2566, 48
        %v3335 = vpop.permute.xlu0 %3334
        %3336 = vrot.lane.b32.xlu0 %v2567, 48
        %v3337 = vpop.permute.xlu0 %3336
        %3338 = vrot.lane.b32.xlu0 %v2568, 48
        %v3339 = vpop.permute.xlu0 %3338
        %3340 = vrot.lane.b32.xlu0 %v2569, 48
        %v3341 = vpop.permute.xlu0 %3340
        %3342 = vrot.lane.b32.xlu0 %v2570, 48
        %v3343 = vpop.permute.xlu0 %3342
        %3344 = vrot.lane.b32.xlu0 %v2571, 48
        %v3345 = vpop.permute.xlu0 %3344
        %3346 = vrot.lane.b32.xlu0 %v2572, 48
        %v3347 = vpop.permute.xlu0 %3346
        %3348 = vrot.lane.b32.xlu0 %v2573, 48
        %v3349 = vpop.permute.xlu0 %3348
        %3350 = vrot.lane.b32.xlu0 %v2574, 48
        %v3351 = vpop.permute.xlu0 %3350
        %3352 = vrot.lane.b32.xlu0 %v2575, 48
        %v3353 = vpop.permute.xlu0 %3352
        %3354 = vrot.lane.b32.xlu0 %v2576, 48
        %v3355 = vpop.permute.xlu0 %3354
        %3356 = vrot.lane.b32.xlu0 %v2577, 48
        %v3357 = vpop.permute.xlu0 %3356
        %3358 = vrot.lane.b32.xlu0 %v2578, 48
        %v3359 = vpop.permute.xlu0 %3358
        %3360 = vrot.lane.b32.xlu0 %v2579, 48
        %v3361 = vpop.permute.xlu0 %3360
        %3362 = vrot.lane.b32.xlu0 %v2580, 48
        %v3363 = vpop.permute.xlu0 %3362
        %3364 = vrot.lane.b32.xlu0 %v2581, 48
        %v3365 = vpop.permute.xlu0 %3364
        %3366 = vrot.lane.b32.xlu0 %v2582, 48
        %v3367 = vpop.permute.xlu0 %3366
        %3368 = vrot.lane.b32.xlu0 %v2583, 48
        %v3369 = vpop.permute.xlu0 %3368
        %3370 = vrot.lane.b32.xlu0 %v2584, 48
        %v3371 = vpop.permute.xlu0 %3370
        %3372 = vrot.lane.b32.xlu0 %v2585, 48
        %v3373 = vpop.permute.xlu0 %3372
        %3374 = vrot.lane.b32.xlu0 %v2586, 48
        %v3375 = vpop.permute.xlu0 %3374
        %3376 = vrot.lane.b32.xlu0 %v2587, 48
        %v3377 = vpop.permute.xlu0 %3376
        %3378 = vrot.lane.b32.xlu0 %v2588, 48
        %v3379 = vpop.permute.xlu0 %3378
        %3380 = vrot.lane.b32.xlu0 %v2589, 48
        %v3381 = vpop.permute.xlu0 %3380
        %3382 = vrot.lane.b32.xlu0 %v2590, 48
        %v3383 = vpop.permute.xlu0 %3382
        %3384 = vrot.lane.b32.xlu0 %v2591, 48
        %v3385 = vpop.permute.xlu0 %3384
        %3386 = vrot.lane.b32.xlu0 %v2592, 48
        %v3387 = vpop.permute.xlu0 %3386
        %3388 = vrot.lane.b32.xlu0 %v2593, 48
        %v3389 = vpop.permute.xlu0 %3388
        %3390 = vrot.lane.b32.xlu0 %v2594, 48
        %v3391 = vpop.permute.xlu0 %3390
        %3392 = vrot.lane.b32.xlu0 %v2595, 48
        %v3393 = vpop.permute.xlu0 %3392
        %3394 = vrot.lane.b32.xlu0 %v2596, 48
        %v3395 = vpop.permute.xlu0 %3394
        %3396 = vrot.lane.b32.xlu0 %v2597, 48
        %v3397 = vpop.permute.xlu0 %3396
        %3462 = vrot.lane.b32.xlu0 %v2598, 56
        %v3463 = vpop.permute.xlu0 %3462
        %3464 = vrot.lane.b32.xlu0 %v2599, 56
        %v3465 = vpop.permute.xlu0 %3464
        %3466 = vrot.lane.b32.xlu0 %v2600, 56
        %v3467 = vpop.permute.xlu0 %3466
        %3468 = vrot.lane.b32.xlu0 %v2601, 56
        %v3469 = vpop.permute.xlu0 %3468
        %3470 = vrot.lane.b32.xlu0 %v2602, 56
        %v3471 = vpop.permute.xlu0 %3470
        %3472 = vrot.lane.b32.xlu0 %v2603, 56
        %v3473 = vpop.permute.xlu0 %3472
        %3474 = vrot.lane.b32.xlu0 %v2604, 56
        %v3475 = vpop.permute.xlu0 %3474
        %3476 = vrot.lane.b32.xlu0 %v2605, 56
        %v3477 = vpop.permute.xlu0 %3476
        %3478 = vrot.lane.b32.xlu0 %v2606, 56
        %v3479 = vpop.permute.xlu0 %3478
        %3480 = vrot.lane.b32.xlu0 %v2607, 56
        %v3481 = vpop.permute.xlu0 %3480
        %3482 = vrot.lane.b32.xlu0 %v2608, 56
        %v3483 = vpop.permute.xlu0 %3482
        %3484 = vrot.lane.b32.xlu0 %v2609, 56
        %v3485 = vpop.permute.xlu0 %3484
        %3486 = vrot.lane.b32.xlu0 %v2610, 56
        %v3487 = vpop.permute.xlu0 %3486
        %3488 = vrot.lane.b32.xlu0 %v2611, 56
        %v3489 = vpop.permute.xlu0 %3488
        %3490 = vrot.lane.b32.xlu0 %v2612, 56
        %v3491 = vpop.permute.xlu0 %3490
        %3492 = vrot.lane.b32.xlu0 %v2613, 56
        %v3493 = vpop.permute.xlu0 %3492
        %3494 = vrot.lane.b32.xlu0 %v2614, 56
        %v3495 = vpop.permute.xlu0 %3494
        %3496 = vrot.lane.b32.xlu0 %v2615, 56
        %v3497 = vpop.permute.xlu0 %3496
        %3498 = vrot.lane.b32.xlu0 %v2616, 56
        %v3499 = vpop.permute.xlu0 %3498
        %3500 = vrot.lane.b32.xlu0 %v2617, 56
        %v3501 = vpop.permute.xlu0 %3500
        %3502 = vrot.lane.b32.xlu0 %v2618, 56
        %v3503 = vpop.permute.xlu0 %3502
        %3504 = vrot.lane.b32.xlu0 %v2619, 56
        %v3505 = vpop.permute.xlu0 %3504
        %3506 = vrot.lane.b32.xlu0 %v2620, 56
        %v3507 = vpop.permute.xlu0 %3506
        %3508 = vrot.lane.b32.xlu0 %v2621, 56
        %v3509 = vpop.permute.xlu0 %3508
        %3510 = vrot.lane.b32.xlu0 %v2622, 56
        %v3511 = vpop.permute.xlu0 %3510
        %3512 = vrot.lane.b32.xlu0 %v2623, 56
        %v3513 = vpop.permute.xlu0 %3512
        %3514 = vrot.lane.b32.xlu0 %v2624, 56
        %v3515 = vpop.permute.xlu0 %3514
        %3516 = vrot.lane.b32.xlu0 %v2625, 56
        %v3517 = vpop.permute.xlu0 %3516
        %3518 = vrot.lane.b32.xlu0 %v2626, 56
        %v3519 = vpop.permute.xlu0 %3518
        %3520 = vrot.lane.b32.xlu0 %v2627, 56
        %v3521 = vpop.permute.xlu0 %3520
        %3522 = vrot.lane.b32.xlu0 %v2628, 56
        %v3523 = vpop.permute.xlu0 %3522
        %3524 = vrot.lane.b32.xlu0 %v2629, 56
        %v3525 = vpop.permute.xlu0 %3524
        %3590 = vrot.lane.b32.xlu0 %v2630, 64
        %v3591 = vpop.permute.xlu0 %3590
        %3592 = vrot.lane.b32.xlu0 %v2631, 64
        %v3593 = vpop.permute.xlu0 %3592
        %3594 = vrot.lane.b32.xlu0 %v2632, 64
        %v3595 = vpop.permute.xlu0 %3594
        %3596 = vrot.lane.b32.xlu0 %v2633, 64
        %v3597 = vpop.permute.xlu0 %3596
        %3598 = vrot.lane.b32.xlu0 %v2634, 64
        %v3599 = vpop.permute.xlu0 %3598
        %3600 = vrot.lane.b32.xlu0 %v2635, 64
        %v3601 = vpop.permute.xlu0 %3600
        %3602 = vrot.lane.b32.xlu0 %v2636, 64
        %v3603 = vpop.permute.xlu0 %3602
        %3604 = vrot.lane.b32.xlu0 %v2637, 64
        %v3605 = vpop.permute.xlu0 %3604
        %3606 = vrot.lane.b32.xlu0 %v2638, 64
        %v3607 = vpop.permute.xlu0 %3606
        %3608 = vrot.lane.b32.xlu0 %v2639, 64
        %v3609 = vpop.permute.xlu0 %3608
        %3610 = vrot.lane.b32.xlu0 %v2640, 64
        %v3611 = vpop.permute.xlu0 %3610
        %3612 = vrot.lane.b32.xlu0 %v2641, 64
        %v3613 = vpop.permute.xlu0 %3612
        %3614 = vrot.lane.b32.xlu0 %v2642, 64
        %v3615 = vpop.permute.xlu0 %3614
        %3616 = vrot.lane.b32.xlu0 %v2643, 64
        %v3617 = vpop.permute.xlu0 %3616
        %3618 = vrot.lane.b32.xlu0 %v2644, 64
        %v3619 = vpop.permute.xlu0 %3618
        %3620 = vrot.lane.b32.xlu0 %v2645, 64
        %v3621 = vpop.permute.xlu0 %3620
        %3622 = vrot.lane.b32.xlu0 %v2646, 64
        %v3623 = vpop.permute.xlu0 %3622
        %3624 = vrot.lane.b32.xlu0 %v2647, 64
        %v3625 = vpop.permute.xlu0 %3624
        %3626 = vrot.lane.b32.xlu0 %v2648, 64
        %v3627 = vpop.permute.xlu0 %3626
        %3628 = vrot.lane.b32.xlu0 %v2649, 64
        %v3629 = vpop.permute.xlu0 %3628
        %3630 = vrot.lane.b32.xlu0 %v2650, 64
        %v3631 = vpop.permute.xlu0 %3630
        %3632 = vrot.lane.b32.xlu0 %v2651, 64
        %v3633 = vpop.permute.xlu0 %3632
        %3634 = vrot.lane.b32.xlu0 %v2652, 64
        %v3635 = vpop.permute.xlu0 %3634
        %3636 = vrot.lane.b32.xlu0 %v2653, 64
        %v3637 = vpop.permute.xlu0 %3636
        %3638 = vrot.lane.b32.xlu0 %v2654, 64
        %v3639 = vpop.permute.xlu0 %3638
        %3640 = vrot.lane.b32.xlu0 %v2655, 64
        %v3641 = vpop.permute.xlu0 %3640
        %3642 = vrot.lane.b32.xlu0 %v2656, 64
        %v3643 = vpop.permute.xlu0 %3642
        %3644 = vrot.lane.b32.xlu0 %v2657, 64
        %v3645 = vpop.permute.xlu0 %3644
        %3646 = vrot.lane.b32.xlu0 %v2658, 64
        %v3647 = vpop.permute.xlu0 %3646
        %3648 = vrot.lane.b32.xlu0 %v2659, 64
        %v3649 = vpop.permute.xlu0 %3648
        %3650 = vrot.lane.b32.xlu0 %v2660, 64
        %v3651 = vpop.permute.xlu0 %3650
        %3652 = vrot.lane.b32.xlu0 %v2661, 64
        %v3653 = vpop.permute.xlu0 %3652
        %v3686 = vsel %vm1733, %v2373, %v2695
        %v3687 = vsel %vm1733, %v2374, %v2697
        %v3688 = vsel %vm1733, %v2375, %v2699
        %v3689 = vsel %vm1733, %v2376, %v2701
        %v3690 = vsel %vm1733, %v2377, %v2703
        %v3691 = vsel %vm1733, %v2378, %v2705
        %v3692 = vsel %vm1733, %v2379, %v2707
        %v3693 = vsel %vm1733, %v2380, %v2709
        %v3694 = vsel %vm1733, %v2381, %v2711
        %v3695 = vsel %vm1733, %v2382, %v2713
        %v3696 = vsel %vm1733, %v2383, %v2715
        %v3697 = vsel %vm1733, %v2384, %v2717
        %v3698 = vsel %vm1733, %v2385, %v2719
        %v3699 = vsel %vm1733, %v2386, %v2721
        %v3700 = vsel %vm1733, %v2387, %v2723
        %v3701 = vsel %vm1733, %v2388, %v2725
        %v3702 = vsel %vm1733, %v2389, %v2727
        %v3703 = vsel %vm1733, %v2390, %v2729
        %v3704 = vsel %vm1733, %v2391, %v2731
        %v3705 = vsel %vm1733, %v2392, %v2733
        %v3706 = vsel %vm1733, %v2393, %v2735
        %v3707 = vsel %vm1733, %v2394, %v2737
        %v3708 = vsel %vm1733, %v2395, %v2739
        %v3709 = vsel %vm1733, %v2396, %v2741
        %v3710 = vsel %vm1733, %v2397, %v2743
        %v3711 = vsel %vm1733, %v2398, %v2745
        %v3712 = vsel %vm1733, %v2399, %v2747
        %v3713 = vsel %vm1733, %v2400, %v2749
        %v3714 = vsel %vm1733, %v2401, %v2751
        %v3715 = vsel %vm1733, %v2402, %v2753
        %v3716 = vsel %vm1733, %v2403, %v2755
        %v3717 = vsel %vm1733, %v2404, %v2757
        %v3718 = vsel %vm1799, %v3686, %v2823
        %v3719 = vsel %vm1799, %v3687, %v2825
        %v3720 = vsel %vm1799, %v3688, %v2827
        %v3721 = vsel %vm1799, %v3689, %v2829
        %v3722 = vsel %vm1799, %v3690, %v2831
        %v3723 = vsel %vm1799, %v3691, %v2833
        %v3724 = vsel %vm1799, %v3692, %v2835
        %v3725 = vsel %vm1799, %v3693, %v2837
        %v3726 = vsel %vm1799, %v3694, %v2839
        %v3727 = vsel %vm1799, %v3695, %v2841
        %v3728 = vsel %vm1799, %v3696, %v2843
        %v3729 = vsel %vm1799, %v3697, %v2845
        %v3730 = vsel %vm1799, %v3698, %v2847
        %v3731 = vsel %vm1799, %v3699, %v2849
        %v3732 = vsel %vm1799, %v3700, %v2851
        %v3733 = vsel %vm1799, %v3701, %v2853
        %v3734 = vsel %vm1799, %v3702, %v2855
        %v3735 = vsel %vm1799, %v3703, %v2857
        %v3736 = vsel %vm1799, %v3704, %v2859
        %v3737 = vsel %vm1799, %v3705, %v2861
        %v3738 = vsel %vm1799, %v3706, %v2863
        %v3739 = vsel %vm1799, %v3707, %v2865
        %v3740 = vsel %vm1799, %v3708, %v2867
        %v3741 = vsel %vm1799, %v3709, %v2869
        %v3742 = vsel %vm1799, %v3710, %v2871
        %v3743 = vsel %vm1799, %v3711, %v2873
        %v3744 = vsel %vm1799, %v3712, %v2875
        %v3745 = vsel %vm1799, %v3713, %v2877
        %v3746 = vsel %vm1799, %v3714, %v2879
        %v3747 = vsel %vm1799, %v3715, %v2881
        %v3748 = vsel %vm1799, %v3716, %v2883
        %v3749 = vsel %vm1799, %v3717, %v2885
        %v3750 = vsel %vm1865, %v3718, %v2951
        %v3751 = vsel %vm1865, %v3719, %v2953
        %v3752 = vsel %vm1865, %v3720, %v2955
        %v3753 = vsel %vm1865, %v3721, %v2957
        %v3754 = vsel %vm1865, %v3722, %v2959
        %v3755 = vsel %vm1865, %v3723, %v2961
        %v3756 = vsel %vm1865, %v3724, %v2963
        %v3757 = vsel %vm1865, %v3725, %v2965
        %v3758 = vsel %vm1865, %v3726, %v2967
        %v3759 = vsel %vm1865, %v3727, %v2969
        %v3760 = vsel %vm1865, %v3728, %v2971
        %v3761 = vsel %vm1865, %v3729, %v2973
        %v3762 = vsel %vm1865, %v3730, %v2975
        %v3763 = vsel %vm1865, %v3731, %v2977
        %v3764 = vsel %vm1865, %v3732, %v2979
        %v3765 = vsel %vm1865, %v3733, %v2981
        %v3766 = vsel %vm1865, %v3734, %v2983
        %v3767 = vsel %vm1865, %v3735, %v2985
        %v3768 = vsel %vm1865, %v3736, %v2987
        %v3769 = vsel %vm1865, %v3737, %v2989
        %v3770 = vsel %vm1865, %v3738, %v2991
        %v3771 = vsel %vm1865, %v3739, %v2993
        %v3772 = vsel %vm1865, %v3740, %v2995
        %v3773 = vsel %vm1865, %v3741, %v2997
        %v3774 = vsel %vm1865, %v3742, %v2999
        %v3775 = vsel %vm1865, %v3743, %v3001
        %v3776 = vsel %vm1865, %v3744, %v3003
        %v3777 = vsel %vm1865, %v3745, %v3005
        %v3778 = vsel %vm1865, %v3746, %v3007
        %v3779 = vsel %vm1865, %v3747, %v3009
        %v3780 = vsel %vm1865, %v3748, %v3011
        %v3781 = vsel %vm1865, %v3749, %v3013
        %v3782 = vsel %vm1931, %v3750, %v3079
        %v3783 = vsel %vm1931, %v3751, %v3081
        %v3784 = vsel %vm1931, %v3752, %v3083
        %v3785 = vsel %vm1931, %v3753, %v3085
        %v3786 = vsel %vm1931, %v3754, %v3087
        %v3787 = vsel %vm1931, %v3755, %v3089
        %v3788 = vsel %vm1931, %v3756, %v3091
        %v3789 = vsel %vm1931, %v3757, %v3093
        %v3790 = vsel %vm1931, %v3758, %v3095
        %v3791 = vsel %vm1931, %v3759, %v3097
        %v3792 = vsel %vm1931, %v3760, %v3099
        %v3793 = vsel %vm1931, %v3761, %v3101
        %v3794 = vsel %vm1931, %v3762, %v3103
        %v3795 = vsel %vm1931, %v3763, %v3105
        %v3796 = vsel %vm1931, %v3764, %v3107
        %v3797 = vsel %vm1931, %v3765, %v3109
        %v3798 = vsel %vm1931, %v3766, %v3111
        %v3799 = vsel %vm1931, %v3767, %v3113
        %v3800 = vsel %vm1931, %v3768, %v3115
        %v3801 = vsel %vm1931, %v3769, %v3117
        %v3802 = vsel %vm1931, %v3770, %v3119
        %v3803 = vsel %vm1931, %v3771, %v3121
        %v3804 = vsel %vm1931, %v3772, %v3123
        %v3805 = vsel %vm1931, %v3773, %v3125
        %v3806 = vsel %vm1931, %v3774, %v3127
        %v3807 = vsel %vm1931, %v3775, %v3129
        %v3808 = vsel %vm1931, %v3776, %v3131
        %v3809 = vsel %vm1931, %v3777, %v3133
        %v3810 = vsel %vm1931, %v3778, %v3135
        %v3811 = vsel %vm1931, %v3779, %v3137
        %v3812 = vsel %vm1931, %v3780, %v3139
        %v3813 = vsel %vm1931, %v3781, %v3141
        %vm3814 = vcmask 326656
        %v3815 = vsel %vm3814, %v3782, %v3207
        %v3816 = vsel %vm3814, %v3783, %v3209
        %v3817 = vsel %vm3814, %v3784, %v3211
        %v3818 = vsel %vm3814, %v3785, %v3213
        %v3819 = vsel %vm3814, %v3786, %v3215
        %v3820 = vsel %vm3814, %v3787, %v3217
        %v3821 = vsel %vm3814, %v3788, %v3219
        %v3822 = vsel %vm3814, %v3789, %v3221
        %v3823 = vsel %vm3814, %v3790, %v3223
        %v3824 = vsel %vm3814, %v3791, %v3225
        %v3825 = vsel %vm3814, %v3792, %v3227
        %v3826 = vsel %vm3814, %v3793, %v3229
        %v3827 = vsel %vm3814, %v3794, %v3231
        %v3828 = vsel %vm3814, %v3795, %v3233
        %v3829 = vsel %vm3814, %v3796, %v3235
        %v3830 = vsel %vm3814, %v3797, %v3237
        %v3831 = vsel %vm3814, %v3798, %v3239
        %v3832 = vsel %vm3814, %v3799, %v3241
        %v3833 = vsel %vm3814, %v3800, %v3243
        %v3834 = vsel %vm3814, %v3801, %v3245
        %v3835 = vsel %vm3814, %v3802, %v3247
        %v3836 = vsel %vm3814, %v3803, %v3249
        %v3837 = vsel %vm3814, %v3804, %v3251
        %v3838 = vsel %vm3814, %v3805, %v3253
        %v3839 = vsel %vm3814, %v3806, %v3255
        %v3840 = vsel %vm3814, %v3807, %v3257
        %v3841 = vsel %vm3814, %v3808, %v3259
        %v3842 = vsel %vm3814, %v3809, %v3261
        %v3843 = vsel %vm3814, %v3810, %v3263
        %v3844 = vsel %vm3814, %v3811, %v3265
        %v3845 = vsel %vm3814, %v3812, %v3267
        %v3846 = vsel %vm3814, %v3813, %v3269
        %vm3847 = vcmask 392192
        %v3848 = vsel %vm3847, %v3815, %v3335
        %v3849 = vsel %vm3847, %v3816, %v3337
        %v3850 = vsel %vm3847, %v3817, %v3339
        %v3851 = vsel %vm3847, %v3818, %v3341
        %v3852 = vsel %vm3847, %v3819, %v3343
        %v3853 = vsel %vm3847, %v3820, %v3345
        %v3854 = vsel %vm3847, %v3821, %v3347
        %v3855 = vsel %vm3847, %v3822, %v3349
        %v3856 = vsel %vm3847, %v3823, %v3351
        %v3857 = vsel %vm3847, %v3824, %v3353
        %v3858 = vsel %vm3847, %v3825, %v3355
        %v3859 = vsel %vm3847, %v3826, %v3357
        %v3860 = vsel %vm3847, %v3827, %v3359
        %v3861 = vsel %vm3847, %v3828, %v3361
        %v3862 = vsel %vm3847, %v3829, %v3363
        %v3863 = vsel %vm3847, %v3830, %v3365
        %v3864 = vsel %vm3847, %v3831, %v3367
        %v3865 = vsel %vm3847, %v3832, %v3369
        %v3866 = vsel %vm3847, %v3833, %v3371
        %v3867 = vsel %vm3847, %v3834, %v3373
        %v3868 = vsel %vm3847, %v3835, %v3375
        %v3869 = vsel %vm3847, %v3836, %v3377
        %v3870 = vsel %vm3847, %v3837, %v3379
        %v3871 = vsel %vm3847, %v3838, %v3381
        %v3872 = vsel %vm3847, %v3839, %v3383
        %v3873 = vsel %vm3847, %v3840, %v3385
        %v3874 = vsel %vm3847, %v3841, %v3387
        %v3875 = vsel %vm3847, %v3842, %v3389
        %v3876 = vsel %vm3847, %v3843, %v3391
        %v3877 = vsel %vm3847, %v3844, %v3393
        %v3878 = vsel %vm3847, %v3845, %v3395
        %v3879 = vsel %vm3847, %v3846, %v3397
        %vm3880 = vcmask 457728
        %v3881 = vsel %vm3880, %v3848, %v3463
        %v3882 = vsel %vm3880, %v3849, %v3465
        %v3883 = vsel %vm3880, %v3850, %v3467
        %v3884 = vsel %vm3880, %v3851, %v3469
        %v3885 = vsel %vm3880, %v3852, %v3471
        %v3886 = vsel %vm3880, %v3853, %v3473
        %v3887 = vsel %vm3880, %v3854, %v3475
        %v3888 = vsel %vm3880, %v3855, %v3477
        %v3889 = vsel %vm3880, %v3856, %v3479
        %v3890 = vsel %vm3880, %v3857, %v3481
        %v3891 = vsel %vm3880, %v3858, %v3483
        %v3892 = vsel %vm3880, %v3859, %v3485
        %v3893 = vsel %vm3880, %v3860, %v3487
        %v3894 = vsel %vm3880, %v3861, %v3489
        %v3895 = vsel %vm3880, %v3862, %v3491
        %v3896 = vsel %vm3880, %v3863, %v3493
        %v3897 = vsel %vm3880, %v3864, %v3495
        %v3898 = vsel %vm3880, %v3865, %v3497
        %v3899 = vsel %vm3880, %v3866, %v3499
        %v3900 = vsel %vm3880, %v3867, %v3501
        %v3901 = vsel %vm3880, %v3868, %v3503
        %v3902 = vsel %vm3880, %v3869, %v3505
        %v3903 = vsel %vm3880, %v3870, %v3507
        %v3904 = vsel %vm3880, %v3871, %v3509
        %v3905 = vsel %vm3880, %v3872, %v3511
        %v3906 = vsel %vm3880, %v3873, %v3513
        %v3907 = vsel %vm3880, %v3874, %v3515
        %v3908 = vsel %vm3880, %v3875, %v3517
        %v3909 = vsel %vm3880, %v3876, %v3519
        %v3910 = vsel %vm3880, %v3877, %v3521
        %v3911 = vsel %vm3880, %v3878, %v3523
        %v3912 = vsel %vm3880, %v3879, %v3525
        %vm3913 = vcmask 523264
        %v3914 = vsel %vm3913, %v3881, %v3591
        %v3915 = vsel %vm3913, %v3882, %v3593
        %v3916 = vsel %vm3913, %v3883, %v3595
        %v3917 = vsel %vm3913, %v3884, %v3597
        %v3918 = vsel %vm3913, %v3885, %v3599
        %v3919 = vsel %vm3913, %v3886, %v3601
        %v3920 = vsel %vm3913, %v3887, %v3603
        %v3921 = vsel %vm3913, %v3888, %v3605
        %v3922 = vsel %vm3913, %v3889, %v3607
        %v3923 = vsel %vm3913, %v3890, %v3609
        %v3924 = vsel %vm3913, %v3891, %v3611
        %v3925 = vsel %vm3913, %v3892, %v3613
        %v3926 = vsel %vm3913, %v3893, %v3615
        %v3927 = vsel %vm3913, %v3894, %v3617
        %v3928 = vsel %vm3913, %v3895, %v3619
        %v3929 = vsel %vm3913, %v3896, %v3621
        %v3930 = vsel %vm3913, %v3897, %v3623
        %v3931 = vsel %vm3913, %v3898, %v3625
        %v3932 = vsel %vm3913, %v3899, %v3627
        %v3933 = vsel %vm3913, %v3900, %v3629
        %v3934 = vsel %vm3913, %v3901, %v3631
        %v3935 = vsel %vm3913, %v3902, %v3633
        %v3936 = vsel %vm3913, %v3903, %v3635
        %v3937 = vsel %vm3913, %v3904, %v3637
        %v3938 = vsel %vm3913, %v3905, %v3639
        %v3939 = vsel %vm3913, %v3906, %v3641
        %v3940 = vsel %vm3913, %v3907, %v3643
        %v3941 = vsel %vm3913, %v3908, %v3645
        %v3942 = vsel %vm3913, %v3909, %v3647
        %v3943 = vsel %vm3913, %v3910, %v3649
        %v3944 = vsel %vm3913, %v3911, %v3651
        %v3945 = vsel %vm3913, %v3912, %v3653
        %v3946 = vld [vmem:[%s3] sm:$0xff]
        %v3947 = vld [vmem:[%s3 + $0x8] sm:$0xff]
        %v3948 = vld [vmem:[%s3 + $0x10] sm:$0xff]
        %v3949 = vld [vmem:[%s3 + $0x18] sm:$0xff]
        %v3950 = vld [vmem:[%s3 + $0x20] sm:$0xff]
        %v3951 = vld [vmem:[%s3 + $0x28] sm:$0xff]
        %v3952 = vld [vmem:[%s3 + $0x30] sm:$0xff]
        %v3953 = vld [vmem:[%s3 + $0x38] sm:$0xff]
        %v3954 = vld [vmem:[%s3 + $0x40] sm:$0xff]
        %v3955 = vld [vmem:[%s4] sm:$0x1]
        %v3957 = vperm.slane %v3955, 0
        %vm3959 = vcmask 588800
        %v3961 = vsel %vm3959, %v3914, 0
        %v3964 = vsel %vm3959, %v3915, 0
        %v3967 = vsel %vm3959, %v3916, 0
        %v3970 = vsel %vm3959, %v3917, 0
        %v3973 = vsel %vm3959, %v3918, 0
        %v3976 = vsel %vm3959, %v3919, 0
        %v3979 = vsel %vm3959, %v3920, 0
        %v3982 = vsel %vm3959, %v3921, 0
        %v3985 = vsel %vm3959, %v3922, 0
        %v3988 = vsel %vm3959, %v3923, 0
        %v3991 = vsel %vm3959, %v3924, 0
        %v3994 = vsel %vm3959, %v3925, 0
        %v3997 = vsel %vm3959, %v3926, 0
        %v4000 = vsel %vm3959, %v3927, 0
        %v4003 = vsel %vm3959, %v3928, 0
        %v4006 = vsel %vm3959, %v3929, 0
        %v4009 = vsel %vm3959, %v3930, 0
        %v4012 = vsel %vm3959, %v3931, 0
        %v4015 = vsel %vm3959, %v3932, 0
        %v4018 = vsel %vm3959, %v3933, 0
        %v4021 = vsel %vm3959, %v3934, 0
        %v4024 = vsel %vm3959, %v3935, 0
        %v4027 = vsel %vm3959, %v3936, 0
        %v4030 = vsel %vm3959, %v3937, 0
        %v4033 = vsel %vm3959, %v3938, 0
        %v4036 = vsel %vm3959, %v3939, 0
        %v4039 = vsel %vm3959, %v3940, 0
        %v4042 = vsel %vm3959, %v3941, 0
        %v4045 = vsel %vm3959, %v3942, 0
        %v4048 = vsel %vm3959, %v3943, 0
        %v4051 = vsel %vm3959, %v3944, 0
        %v4054 = vsel %vm3959, %v3945, 0
        %4056 = vmatpush.msra.mxu0 0.0
        %4057 = vmatpush.msra.mxu0 0.0
        %4058 = vmatpush.msra.mxu0 0.0
        %4059 = vmatpush.msra.mxu0 0.0
        %4060 = vmatpush.msra.mxu0 0.0
        %4061 = vmatpush.msra.mxu0 0.0
        %4062 = vmatpush.msra.mxu0 0.0
        %4063 = vmatpush.msra.mxu0 %v3954
        %4064 = vmatpush.msra.mxu0 %v3953
        %4065 = vmatpush.msra.mxu0 %v3952
        %4066 = vmatpush.msra.mxu0 %v3951
        %4067 = vmatpush.msra.mxu0 %v3950
        %4068 = vmatpush.msra.mxu0 %v3949
        %4069 = vmatpush.msra.mxu0 %v3948
        %4070 = vmatpush.msra.mxu0 %v3947
        %4071 = vmatpush.msra.mxu0 %v3946
        %4072 = vmatmul.f32.gmra.mxu0 %v3961
        %v4073 = vpop.f32.mrf.mxu0
        %v4074 = vadd.f32 %v3957, %v4073
        %4075 = vmatmul.f32.gmra.mxu0 %v3964
        %v4076 = vpop.f32.mrf.mxu0
        %v4077 = vadd.f32 %v3957, %v4076
        %4078 = vmatmul.f32.gmra.mxu0 %v3967
        %v4079 = vpop.f32.mrf.mxu0
        %v4080 = vadd.f32 %v3957, %v4079
        %4081 = vmatmul.f32.gmra.mxu0 %v3970
        %v4082 = vpop.f32.mrf.mxu0
        %v4083 = vadd.f32 %v3957, %v4082
        %4084 = vmatmul.f32.gmra.mxu0 %v3973
        %v4085 = vpop.f32.mrf.mxu0
        %v4086 = vadd.f32 %v3957, %v4085
        %4087 = vmatmul.f32.gmra.mxu0 %v3976
        %v4088 = vpop.f32.mrf.mxu0
        %v4089 = vadd.f32 %v3957, %v4088
        %4090 = vmatmul.f32.gmra.mxu0 %v3979
        %v4091 = vpop.f32.mrf.mxu0
        %v4092 = vadd.f32 %v3957, %v4091
        %4093 = vmatmul.f32.gmra.mxu0 %v3982
        %v4094 = vpop.f32.mrf.mxu0
        %v4095 = vadd.f32 %v3957, %v4094
        %4096 = vmatmul.f32.gmra.mxu0 %v3985
        %v4097 = vpop.f32.mrf.mxu0
        %v4098 = vadd.f32 %v3957, %v4097
        %4099 = vmatmul.f32.gmra.mxu0 %v3988
        %v4100 = vpop.f32.mrf.mxu0
        %v4101 = vadd.f32 %v3957, %v4100
        %4102 = vmatmul.f32.gmra.mxu0 %v3991
        %v4103 = vpop.f32.mrf.mxu0
        %v4104 = vadd.f32 %v3957, %v4103
        %4105 = vmatmul.f32.gmra.mxu0 %v3994
        %v4106 = vpop.f32.mrf.mxu0
        %v4107 = vadd.f32 %v3957, %v4106
        %4108 = vmatmul.f32.gmra.mxu0 %v3997
        %v4109 = vpop.f32.mrf.mxu0
        %v4110 = vadd.f32 %v3957, %v4109
        %4111 = vmatmul.f32.gmra.mxu0 %v4000
        %v4112 = vpop.f32.mrf.mxu0
        %v4113 = vadd.f32 %v3957, %v4112
        %4114 = vmatmul.f32.gmra.mxu0 %v4003
        %v4115 = vpop.f32.mrf.mxu0
        %v4116 = vadd.f32 %v3957, %v4115
        %4117 = vmatmul.f32.gmra.mxu0 %v4006
        %v4118 = vpop.f32.mrf.mxu0
        %v4119 = vadd.f32 %v3957, %v4118
        %4120 = vmatmul.f32.gmra.mxu0 %v4009
        %v4121 = vpop.f32.mrf.mxu0
        %v4122 = vadd.f32 %v3957, %v4121
        %4123 = vmatmul.f32.gmra.mxu0 %v4012
        %v4124 = vpop.f32.mrf.mxu0
        %v4125 = vadd.f32 %v3957, %v4124
        %4126 = vmatmul.f32.gmra.mxu0 %v4015
        %v4127 = vpop.f32.mrf.mxu0
        %v4128 = vadd.f32 %v3957, %v4127
        %4129 = vmatmul.f32.gmra.mxu0 %v4018
        %v4130 = vpop.f32.mrf.mxu0
        %v4131 = vadd.f32 %v3957, %v4130
        %4132 = vmatmul.f32.gmra.mxu0 %v4021
        %v4133 = vpop.f32.mrf.mxu0
        %v4134 = vadd.f32 %v3957, %v4133
        %4135 = vmatmul.f32.gmra.mxu0 %v4024
        %v4136 = vpop.f32.mrf.mxu0
        %v4137 = vadd.f32 %v3957, %v4136
        %4138 = vmatmul.f32.gmra.mxu0 %v4027
        %v4139 = vpop.f32.mrf.mxu0
        %v4140 = vadd.f32 %v3957, %v4139
        %4141 = vmatmul.f32.gmra.mxu0 %v4030
        %v4142 = vpop.f32.mrf.mxu0
        %v4143 = vadd.f32 %v3957, %v4142
        %4144 = vmatmul.f32.gmra.mxu0 %v4033
        %v4145 = vpop.f32.mrf.mxu0
        %v4146 = vadd.f32 %v3957, %v4145
        %4147 = vmatmul.f32.gmra.mxu0 %v4036
        %v4148 = vpop.f32.mrf.mxu0
        %v4149 = vadd.f32 %v3957, %v4148
        %4150 = vmatmul.f32.gmra.mxu0 %v4039
        %v4151 = vpop.f32.mrf.mxu0
        %v4152 = vadd.f32 %v3957, %v4151
        %4153 = vmatmul.f32.gmra.mxu0 %v4042
        %v4154 = vpop.f32.mrf.mxu0
        %v4155 = vadd.f32 %v3957, %v4154
        %4156 = vmatmul.f32.gmra.mxu0 %v4045
        %v4157 = vpop.f32.mrf.mxu0
        %v4158 = vadd.f32 %v3957, %v4157
        %4159 = vmatmul.f32.gmra.mxu0 %v4048
        %v4160 = vpop.f32.mrf.mxu0
        %v4161 = vadd.f32 %v3957, %v4160
        %4162 = vmatmul.f32.gmra.mxu0 %v4051
        %v4163 = vpop.f32.mrf.mxu0
        %v4164 = vadd.f32 %v3957, %v4163
        %4165 = vmatmul.f32.gmra.mxu0 %v4054
        %v4166 = vpop.f32.mrf.mxu0
        %v4167 = vadd.f32 %v3957, %v4166
        %4168 = vdwg.mxu0
        %vm4169 = vcmp.ge.f32.partialorder %v4074, 0.0
        %vm4170 = vcmp.ge.f32.partialorder %v4077, 0.0
        %vm4171 = vcmp.ge.f32.partialorder %v4080, 0.0
        %vm4172 = vcmp.ge.f32.partialorder %v4083, 0.0
        %vm4173 = vcmp.ge.f32.partialorder %v4086, 0.0
        %vm4174 = vcmp.ge.f32.partialorder %v4089, 0.0
        %vm4175 = vcmp.ge.f32.partialorder %v4092, 0.0
        %vm4176 = vcmp.ge.f32.partialorder %v4095, 0.0
        %vm4177 = vcmp.ge.f32.partialorder %v4098, 0.0
        %vm4178 = vcmp.ge.f32.partialorder %v4101, 0.0
        %vm4179 = vcmp.ge.f32.partialorder %v4104, 0.0
        %vm4180 = vcmp.ge.f32.partialorder %v4107, 0.0
        %vm4181 = vcmp.ge.f32.partialorder %v4110, 0.0
        %vm4182 = vcmp.ge.f32.partialorder %v4113, 0.0
        %vm4183 = vcmp.ge.f32.partialorder %v4116, 0.0
        %vm4184 = vcmp.ge.f32.partialorder %v4119, 0.0
        %vm4185 = vcmp.ge.f32.partialorder %v4122, 0.0
        %vm4186 = vcmp.ge.f32.partialorder %v4125, 0.0
        %vm4187 = vcmp.ge.f32.partialorder %v4128, 0.0
        %vm4188 = vcmp.ge.f32.partialorder %v4131, 0.0
        %vm4189 = vcmp.ge.f32.partialorder %v4134, 0.0
        %vm4190 = vcmp.ge.f32.partialorder %v4137, 0.0
        %vm4191 = vcmp.ge.f32.partialorder %v4140, 0.0
        %vm4192 = vcmp.ge.f32.partialorder %v4143, 0.0
        %vm4193 = vcmp.ge.f32.partialorder %v4146, 0.0
        %vm4194 = vcmp.ge.f32.partialorder %v4149, 0.0
        %vm4195 = vcmp.ge.f32.partialorder %v4152, 0.0
        %vm4196 = vcmp.ge.f32.partialorder %v4155, 0.0
        %vm4197 = vcmp.ge.f32.partialorder %v4158, 0.0
        %vm4198 = vcmp.ge.f32.partialorder %v4161, 0.0
        %vm4199 = vcmp.ge.f32.partialorder %v4164, 0.0
        %vm4200 = vcmp.ge.f32.partialorder %v4167, 0.0
        %v4201 = vstv %s2372
        %v4202 = vmul.f32 %v4201, %v4074
        %v4203 = vmul.f32 %v4201, %v4077
        %v4204 = vmul.f32 %v4201, %v4080
        %v4205 = vmul.f32 %v4201, %v4083
        %v4206 = vmul.f32 %v4201, %v4086
        %v4207 = vmul.f32 %v4201, %v4089
        %v4208 = vmul.f32 %v4201, %v4092
        %v4209 = vmul.f32 %v4201, %v4095
        %v4210 = vmul.f32 %v4201, %v4098
        %v4211 = vmul.f32 %v4201, %v4101
        %v4212 = vmul.f32 %v4201, %v4104
        %v4213 = vmul.f32 %v4201, %v4107
        %v4214 = vmul.f32 %v4201, %v4110
        %v4215 = vmul.f32 %v4201, %v4113
        %v4216 = vmul.f32 %v4201, %v4116
        %v4217 = vmul.f32 %v4201, %v4119
        %v4218 = vmul.f32 %v4201, %v4122
        %v4219 = vmul.f32 %v4201, %v4125
        %v4220 = vmul.f32 %v4201, %v4128
        %v4221 = vmul.f32 %v4201, %v4131
        %v4222 = vmul.f32 %v4201, %v4134
        %v4223 = vmul.f32 %v4201, %v4137
        %v4224 = vmul.f32 %v4201, %v4140
        %v4225 = vmul.f32 %v4201, %v4143
        %v4226 = vmul.f32 %v4201, %v4146
        %v4227 = vmul.f32 %v4201, %v4149
        %v4228 = vmul.f32 %v4201, %v4152
        %v4229 = vmul.f32 %v4201, %v4155
        %v4230 = vmul.f32 %v4201, %v4158
        %v4231 = vmul.f32 %v4201, %v4161
        %v4232 = vmul.f32 %v4201, %v4164
        %v4233 = vmul.f32 %v4201, %v4167
        %v4234 = vsel %vm4169, %v4074, %v4202
        %v4235 = vsel %vm4170, %v4077, %v4203
        %v4236 = vsel %vm4171, %v4080, %v4204
        %v4237 = vsel %vm4172, %v4083, %v4205
        %v4238 = vsel %vm4173, %v4086, %v4206
        %v4239 = vsel %vm4174, %v4089, %v4207
        %v4240 = vsel %vm4175, %v4092, %v4208
        %v4241 = vsel %vm4176, %v4095, %v4209
        %v4242 = vsel %vm4177, %v4098, %v4210
        %v4243 = vsel %vm4178, %v4101, %v4211
        %v4244 = vsel %vm4179, %v4104, %v4212
        %v4245 = vsel %vm4180, %v4107, %v4213
        %v4246 = vsel %vm4181, %v4110, %v4214
        %v4247 = vsel %vm4182, %v4113, %v4215
        %v4248 = vsel %vm4183, %v4116, %v4216
        %v4249 = vsel %vm4184, %v4119, %v4217
        %v4250 = vsel %vm4185, %v4122, %v4218
        %v4251 = vsel %vm4186, %v4125, %v4219
        %v4252 = vsel %vm4187, %v4128, %v4220
        %v4253 = vsel %vm4188, %v4131, %v4221
        %v4254 = vsel %vm4189, %v4134, %v4222
        %v4255 = vsel %vm4190, %v4137, %v4223
        %v4256 = vsel %vm4191, %v4140, %v4224
        %v4257 = vsel %vm4192, %v4143, %v4225
        %v4258 = vsel %vm4193, %v4146, %v4226
        %v4259 = vsel %vm4194, %v4149, %v4227
        %v4260 = vsel %vm4195, %v4152, %v4228
        %v4261 = vsel %vm4196, %v4155, %v4229
        %v4262 = vsel %vm4197, %v4158, %v4230
        %v4263 = vsel %vm4198, %v4161, %v4231
        %v4264 = vsel %vm4199, %v4164, %v4232
        %v4265 = vsel %vm4200, %v4167, %v4233
        %4266 = vxpose.xlu0.b32.start [1/16] %v4234, 128
        %4267 = vxpose.xlu0.b32.cont [2/16] %v4235, 128
        %4268 = vxpose.xlu0.b32.cont [3/16] %v4236, 128
        %4269 = vxpose.xlu0.b32.cont [4/16] %v4237, 128
        %4270 = vxpose.xlu0.b32.cont [5/16] %v4238, 128
        %4271 = vxpose.xlu0.b32.cont [6/16] %v4239, 128
        %4272 = vxpose.xlu0.b32.cont [7/16] %v4240, 128
        %4273 = vxpose.xlu0.b32.cont [8/16] %v4241, 128
        %4274 = vxpose.xlu0.b32.cont [9/16] %v4242, 128
        %4275 = vxpose.xlu0.b32.cont [10/16] %v4243, 128
        %4276 = vxpose.xlu0.b32.cont [11/16] %v4244, 128
        %4277 = vxpose.xlu0.b32.cont [12/16] %v4245, 128
        %4278 = vxpose.xlu0.b32.cont [13/16] %v4246, 128
        %4279 = vxpose.xlu0.b32.cont [14/16] %v4247, 128
        %4280 = vxpose.xlu0.b32.cont [15/16] %v4248, 128
        %4281 = vxpose.xlu0.b32.end [16/16] %v4249, 128
        %v4282 = vpop.trf.xlu0
        %v4283 = vpop.trf.xlu0
        %v4284 = vpop.trf.xlu0
        %v4285 = vpop.trf.xlu0
        %v4286 = vpop.trf.xlu0
        %v4287 = vpop.trf.xlu0
        %v4288 = vpop.trf.xlu0
        %v4289 = vpop.trf.xlu0
        %v4290 = vpop.trf.xlu0
        %v4291 = vpop.trf.xlu0
        %v4292 = vpop.trf.xlu0
        %v4293 = vpop.trf.xlu0
        %v4294 = vpop.trf.xlu0
        %v4295 = vpop.trf.xlu0
        %v4296 = vpop.trf.xlu0
        %v4297 = vpop.trf.xlu0
        %4298 = vxpose.xlu0.b32.start [1/16] %v4250, 128
        %4299 = vxpose.xlu0.b32.cont [2/16] %v4251, 128
        %4300 = vxpose.xlu0.b32.cont [3/16] %v4252, 128
        %4301 = vxpose.xlu0.b32.cont [4/16] %v4253, 128
        %4302 = vxpose.xlu0.b32.cont [5/16] %v4254, 128
        %4303 = vxpose.xlu0.b32.cont [6/16] %v4255, 128
        %4304 = vxpose.xlu0.b32.cont [7/16] %v4256, 128
        %4305 = vxpose.xlu0.b32.cont [8/16] %v4257, 128
        %4306 = vxpose.xlu0.b32.cont [9/16] %v4258, 128
        %4307 = vxpose.xlu0.b32.cont [10/16] %v4259, 128
        %4308 = vxpose.xlu0.b32.cont [11/16] %v4260, 128
        %4309 = vxpose.xlu0.b32.cont [12/16] %v4261, 128
        %4310 = vxpose.xlu0.b32.cont [13/16] %v4262, 128
        %4311 = vxpose.xlu0.b32.cont [14/16] %v4263, 128
        %4312 = vxpose.xlu0.b32.cont [15/16] %v4264, 128
        %4313 = vxpose.xlu0.b32.end [16/16] %v4265, 128
        %v4314 = vpop.trf.xlu0
        %v4315 = vpop.trf.xlu0
        %v4316 = vpop.trf.xlu0
        %v4317 = vpop.trf.xlu0
        %v4318 = vpop.trf.xlu0
        %v4319 = vpop.trf.xlu0
        %v4320 = vpop.trf.xlu0
        %v4321 = vpop.trf.xlu0
        %v4322 = vpop.trf.xlu0
        %v4323 = vpop.trf.xlu0
        %v4324 = vpop.trf.xlu0
        %v4325 = vpop.trf.xlu0
        %v4326 = vpop.trf.xlu0
        %v4327 = vpop.trf.xlu0
        %v4328 = vpop.trf.xlu0
        %v4329 = vpop.trf.xlu0
        %4330 = vst [vmem:[%s265] sm:$0xff] %v4282
        %4331 = vst [vmem:[%s265 + $0x8] sm:$0xff] %v4314
        %p4332 = scmp.lt.s32.totalorder %s18, 1
        %s4333 = scalar_select %p4332, %s18, 1
        %s4334 = smul.addr %s4333, 2
        %s4335 = smul.addr %s4334, 8
        %s4336 = scalar_lea.vmem %s6, %s4335
        // Predicated region
        $region49: #{block_forward.1} parent=43 // pred_check
          %p4337 = pneg %p167
        $region50: #{block_forward.1} parent=43 // pred_check_branch
          %4339 = sbr.rel (%p4337) target = $region52
        $region51: #{block_forward.1} parent=43 // pred_region
          _
        $region52: #{block_forward.1} parent=43 // pred_fallthru
          _
      $region44: #{block_forward.1} parent=5 // pred_fallthru
        _
      %p4340 = scmp.le.s32.totalorder 2, %s13
      // Predicated region
      $region53: #{block_forward.1} parent=5 // pred_check
        %p4341 = pneg %p4340
      $region54: #{block_forward.1} parent=5 // pred_check_branch
        %4343 = sbr.rel (%p4341) target = $region56
      $region55: #{block_forward.1} parent=5 // pred_region
        %s4344 = ssub.s32 %s13, 2
        // Predicated region
        $region57: #{block_forward.1} parent=55 // pred_check
          %p4345 = pneg %p173
        $region58: #{block_forward.1} parent=55 // pred_check_branch
          %4347 = sbr.rel (%p4345) target = $region60
        $region59: #{block_forward.1} parent=55 // pred_region
          %p4348 = scmp.lt.s32.totalorder %s19, 1
          %s4349 = scalar_select %p4348, %s19, 1
          %s4350 = smul.addr %s4349, 2
          %s4351 = smul.addr %s4350, 8
          %s4352 = scalar_lea.vmem %s6, %s4351
        $region60: #{block_forward.1} parent=55 // pred_fallthru
          _
      $region56: #{block_forward.1} parent=5 // pred_fallthru
        _
    $region6: #{block_forward.1} parent=1 // loop_footer
      %s17 = sadd.s32 1, %s13
    $region7: #{block_forward.1} parent=1 // loop_footer_branch
      %12 = sbr.rel target = $region3
    $region8: #{block_forward.1} parent=1 // loop_exit
      _
    %4353 = vsyncpa [#allocation5], 1
    %s4354 = scalar_lea.sflag [#allocation5], 1
    %4355 = vsyncpa %s4354, 1

</llo_original>
